<compile_context>
chip_gen: v7x
topology: tpu7x:2x2x1
jax: 0.10.0
libtpu: 0.0.40
codegen_flags: <defaults>
</compile_context>

<pallas_src>
import jax
import jax.numpy as jnp
from jax.experimental import pallas as pl
from jax.experimental.pallas import tpu as pltpu

_LANES = 128
_VMEM_LIMIT = 32 * 1024 * 1024


def _rgb_to_ycbcr_fused_kernel(x_ref, o_ref):
    """x_ref: (3, S, 128) planar RGB tile.  o_ref: (S, 3*128) pixel-interleaved."""
    r = x_ref[0, :, :].astype(jnp.float32)
    g = x_ref[1, :, :].astype(jnp.float32)
    b = x_ref[2, :, :].astype(jnp.float32)

    y = 0.299 * r + 0.587 * g + 0.114 * b
    cb = -0.168736 * r - 0.331264 * g + 0.5 * b + 128.0
    cr = 0.5 * r - 0.418688 * g - 0.081312 * b + 128.0

    s_rows, lanes = r.shape
    inter = jnp.stack([y, cb, cr], axis=-1)            # (S, 128, 3) interleave
    o_ref[...] = inter.reshape(s_rows, 3 * lanes).astype(o_ref.dtype)


def _rgb_to_ycbcr_planar_kernel(x_ref, o_ref):
    """Fallback: planar (3, S, 128) output; wrapper does the NHWC permute."""
    r = x_ref[0, :, :].astype(jnp.float32)
    g = x_ref[1, :, :].astype(jnp.float32)
    b = x_ref[2, :, :].astype(jnp.float32)

    y = 0.299 * r + 0.587 * g + 0.114 * b
    cb = -0.168736 * r - 0.331264 * g + 0.5 * b + 128.0
    cr = 0.5 * r - 0.418688 * g - 0.081312 * b + 128.0

    o_ref[0, :, :] = y.astype(o_ref.dtype)
    o_ref[1, :, :] = cb.astype(o_ref.dtype)
    o_ref[2, :, :] = cr.astype(o_ref.dtype)


def _compiler_params():
    return pltpu.CompilerParams(
        dimension_semantics=("parallel", "parallel"),
        vmem_limit_bytes=_VMEM_LIMIT,
    )


def _call_fused(x4, out_dtype, s_rows):
    B, _, nrows, lanes = x4.shape
    return pl.pallas_call(
        _rgb_to_ycbcr_fused_kernel,
        out_shape=jax.ShapeDtypeStruct((B, nrows, 3 * lanes), out_dtype),
        grid_spec=pltpu.PrefetchScalarGridSpec(
            num_scalar_prefetch=0,
            grid=(B, nrows // s_rows),
            in_specs=[pl.BlockSpec((None, 3, s_rows, lanes),
                                   lambda b, t: (b, 0, t, 0))],
            out_specs=pl.BlockSpec((None, s_rows, 3 * lanes),
                                   lambda b, t: (b, t, 0)),
        ),
        compiler_params=_compiler_params(),
    )(x4)


def _call_planar(x4, out_dtype, s_rows):
    B, _, nrows, lanes = x4.shape
    return pl.pallas_call(
        _rgb_to_ycbcr_planar_kernel,
        out_shape=jax.ShapeDtypeStruct((B, 3, nrows, lanes), out_dtype),
        grid_spec=pltpu.PrefetchScalarGridSpec(
            num_scalar_prefetch=0,
            grid=(B, nrows // s_rows),
            in_specs=[pl.BlockSpec((None, 3, s_rows, lanes),
                                   lambda b, t: (b, 0, t, 0))],
            out_specs=pl.BlockSpec((None, 3, s_rows, lanes),
                                   lambda b, t: (b, 0, t, 0)),
        ),
        compiler_params=_compiler_params(),
    )(x4)


_FUSED_OK = None


def _fused_interleave_supported() -> bool:
    """One-time probe: does this Mosaic build lower (and correctly compute)
    the in-kernel (S,128,3)->(S,3*128) lane interleave?  Cached."""
    global _FUSED_OK
    if _FUSED_OK is None:
        try:
            probe = (jnp.arange(3 * 8 * _LANES, dtype=jnp.float32) % 251.0
                     ).reshape(1, 3, 8, _LANES)
            got = jax.block_until_ready(_call_fused(probe, jnp.float32, 8))
            r, g, b = probe[:, 0], probe[:, 1], probe[:, 2]
            y = 0.299 * r + 0.587 * g + 0.114 * b
            cb = -0.168736 * r - 0.331264 * g + 0.5 * b + 128.0
            cr = 0.5 * r - 0.418688 * g - 0.081312 * b + 128.0
            ref = jnp.stack([y, cb, cr], axis=-1).reshape(1, 8, 3 * _LANES)
            _FUSED_OK = bool(jnp.allclose(got, ref, rtol=1e-5, atol=1e-3))
        except Exception:
            _FUSED_OK = False
    return _FUSED_OK


def _pick_row_tile(nrows_raw: int, batch: int,
                   max_rows: int = 1024, min_programs: int = 4) -> int:
    """Largest multiple-of-8 row tile <= max_rows that still yields at least
    `min_programs` grid programs overall (v7x has 2 TensorCores)."""
    tiles_wanted = max(1, -(-min_programs // max(1, batch)))
    s = min(max_rows, -(-nrows_raw // tiles_wanted))
    return max(8, ((s + 7) // 8) * 8)


def rgb_to_ycbcr_jpeg(image: jax.Array) -> jax.Array:
    """RGB (B,3,H,W) -> YCbCr (B,H,W,3), matching the PyTorch module."""
    B, C, H, W = image.shape
    assert C == 3, "rgb_to_ycbcr_jpeg expects 3 input channels"
    HW = H * W
    out_dtype = jnp.result_type(image.dtype, jnp.float32)

    nrows_raw = -(-HW // _LANES)
    s_rows = _pick_row_tile(nrows_raw, B)
    nrows = -(-nrows_raw // s_rows) * s_rows
    P = nrows * _LANES                      # padded pixel count (== HW if aligned)

    x = image.reshape(B, 3, HW)
    if P != HW:
        x = jnp.pad(x, ((0, 0), (0, 0), (0, P - HW)))
    x4 = x.reshape(B, 3, nrows, _LANES)

    if _fused_interleave_supported():
        out = _call_fused(x4, out_dtype, s_rows)            # (B, nrows, 3*128)
        out = out.reshape(B, P, 3)                          # free reshape
    else:
        # TODO(synk): this Mosaic build cannot lower the in-kernel lane
        # interleave; fall back to planar kernel + XLA transpose.
        out = _call_planar(x4, out_dtype, s_rows)           # (B, 3, nrows, 128)
        out = jnp.transpose(out.reshape(B, 3, P), (0, 2, 1))

    if P != HW:
        out = out[:, :HW, :]
    return out.reshape(B, H, W, 3)


class RgbToYcbcrJpeg:
    """Mirror of the PyTorch rgb_to_ycbcr_jpeg module (fixed parameters,
    baked into the kernel as scalar coefficients)."""

    def __init__(self):
        self.matrix = jnp.array(
            [[0.299, 0.587, 0.114],
             [-0.168736, -0.331264, 0.5],
             [0.5, -0.418688, -0.081312]], dtype=jnp.float32).T
        self.shift = jnp.array([0.0, 128.0, 128.0], dtype=jnp.float32)

    def __call__(self, image: jax.Array) -> jax.Array:
        return rgb_to_ycbcr_jpeg(image)


def _reference_rgb_to_ycbcr_jpeg(image: jax.Array) -> jax.Array:
    # Pure-JAX reference matching the PyTorch forward exactly.
    matrix = jnp.array(
        [[0.299, 0.587, 0.114],
         [-0.168736, -0.331264, 0.5],
         [0.5, -0.418688, -0.081312]], dtype=jnp.float32).T
    shift = jnp.array([0.0, 128.0, 128.0], dtype=jnp.float32)
    img = jnp.transpose(image, (0, 2, 3, 1))
    return jnp.tensordot(img, matrix, axes=1) + shift


if __name__ == "__main__":
    key = jax.random.PRNGKey(0)

    # Main check: small shape consistent with the module (3 input channels).
    B, C, H, W = 2, 3, 16, 16
    x = jax.random.uniform(key, (B, C, H, W), dtype=jnp.float32,
                           minval=0.0, maxval=255.0)
    module = RgbToYcbcrJpeg()
    y = jax.block_until_ready(module(x))
    y_ref = _reference_rgb_to_ycbcr_jpeg(x)
    assert y.shape == (B, H, W, 3)
    assert jnp.allclose(y, y_ref, rtol=1e-5, atol=1e-3), \
        "Pallas rgb_to_ycbcr_jpeg mismatch vs reference (aligned shape)"

    # Robustness check: spatial size not a multiple of 128 (padded path).
    x2 = jax.random.uniform(jax.random.PRNGKey(1), (1, 3, 10, 10),
                            dtype=jnp.float32, minval=0.0, maxval=255.0)
    y2 = jax.block_until_ready(module(x2))
    y2_ref = _reference_rgb_to_ycbcr_jpeg(x2)
    assert y2.shape == (1, 10, 10, 3)
    assert jnp.allclose(y2, y2_ref, rtol=1e-5, atol=1e-3), \
        "Pallas rgb_to_ycbcr_jpeg mismatch vs reference (padded shape)"

    print("KERNEL_OK")
</pallas_src>

<mosaic_0001>
module attributes {stable_mosaic.version = 11 : i64} {
  func.func @_rgb_to_ycbcr_fused_kernel(%arg0: i32, %arg1: i32, %arg2: memref<1x3x8x128xf32, #tpu.memory_space<vmem>>, %arg3: memref<1x8x384xf32, #tpu.memory_space<vmem>>) attributes {dimension_semantics = [#tpu.dimension_semantics<parallel>, #tpu.dimension_semantics<parallel>], iteration_bounds = array<i64: 1, 1>, scalar_prefetch = 0 : i64, scratch_operands = 0 : i64, tpu.core_type = #tpu.core_type<tc>, window_params = [{transform_indices = @transform_0, window_bounds = array<i64: 1, 3, 8, 128>}, {transform_indices = @transform_1, window_bounds = array<i64: 1, 8, 384>}]} {
    %c0 = arith.constant 0 : index
    %c0_0 = arith.constant 0 : index
    %c0_1 = arith.constant 0 : index
    %c0_2 = arith.constant 0 : index
    %0 = vector.load %arg2[%c0, %c0_0, %c0_1, %c0_2] : memref<1x3x8x128xf32, #tpu.memory_space<vmem>>, vector<1x1x8x128xf32>
    %1 = vector.shape_cast %0 : vector<1x1x8x128xf32> to vector<8x128xf32>
    %c0_3 = arith.constant 0 : index
    %c1 = arith.constant 1 : index
    %c0_4 = arith.constant 0 : index
    %c0_5 = arith.constant 0 : index
    %2 = vector.load %arg2[%c0_3, %c1, %c0_4, %c0_5] : memref<1x3x8x128xf32, #tpu.memory_space<vmem>>, vector<1x1x8x128xf32>
    %3 = vector.shape_cast %2 : vector<1x1x8x128xf32> to vector<8x128xf32>
    %c0_6 = arith.constant 0 : index
    %c2 = arith.constant 2 : index
    %c0_7 = arith.constant 0 : index
    %c0_8 = arith.constant 0 : index
    %4 = vector.load %arg2[%c0_6, %c2, %c0_7, %c0_8] : memref<1x3x8x128xf32, #tpu.memory_space<vmem>>, vector<1x1x8x128xf32>
    %5 = vector.shape_cast %4 : vector<1x1x8x128xf32> to vector<8x128xf32>
    %cst = arith.constant 2.990000e-01 : f32
    %6 = vector.broadcast %cst : f32 to vector<8x128xf32>
    %7 = arith.mulf %6, %1 : vector<8x128xf32>
    %cst_9 = arith.constant 5.870000e-01 : f32
    %8 = vector.broadcast %cst_9 : f32 to vector<8x128xf32>
    %9 = arith.mulf %8, %3 : vector<8x128xf32>
    %10 = arith.addf %7, %9 : vector<8x128xf32>
    %cst_10 = arith.constant 1.140000e-01 : f32
    %11 = vector.broadcast %cst_10 : f32 to vector<8x128xf32>
    %12 = arith.mulf %11, %5 : vector<8x128xf32>
    %13 = arith.addf %10, %12 : vector<8x128xf32>
    %cst_11 = arith.constant -1.687360e-01 : f32
    %14 = vector.broadcast %cst_11 : f32 to vector<8x128xf32>
    %15 = arith.mulf %14, %1 : vector<8x128xf32>
    %cst_12 = arith.constant 3.312640e-01 : f32
    %16 = vector.broadcast %cst_12 : f32 to vector<8x128xf32>
    %17 = arith.mulf %16, %3 : vector<8x128xf32>
    %18 = arith.subf %15, %17 : vector<8x128xf32>
    %cst_13 = arith.constant 5.000000e-01 : f32
    %19 = vector.broadcast %cst_13 : f32 to vector<8x128xf32>
    %20 = arith.mulf %19, %5 : vector<8x128xf32>
    %21 = arith.addf %18, %20 : vector<8x128xf32>
    %cst_14 = arith.constant 1.280000e+02 : f32
    %22 = vector.broadcast %cst_14 : f32 to vector<8x128xf32>
    %23 = arith.addf %21, %22 : vector<8x128xf32>
    %cst_15 = arith.constant 5.000000e-01 : f32
    %24 = vector.broadcast %cst_15 : f32 to vector<8x128xf32>
    %25 = arith.mulf %24, %1 : vector<8x128xf32>
    %cst_16 = arith.constant 4.186880e-01 : f32
    %26 = vector.broadcast %cst_16 : f32 to vector<8x128xf32>
    %27 = arith.mulf %26, %3 : vector<8x128xf32>
    %28 = arith.subf %25, %27 : vector<8x128xf32>
    %cst_17 = arith.constant 8.131200e-02 : f32
    %29 = vector.broadcast %cst_17 : f32 to vector<8x128xf32>
    %30 = arith.mulf %29, %5 : vector<8x128xf32>
    %31 = arith.subf %28, %30 : vector<8x128xf32>
    %cst_18 = arith.constant 1.280000e+02 : f32
    %32 = vector.broadcast %cst_18 : f32 to vector<8x128xf32>
    %33 = arith.addf %31, %32 : vector<8x128xf32>
    %34 = vector.shape_cast %13 : vector<8x128xf32> to vector<8x128x1xf32>
    %35 = vector.shape_cast %23 : vector<8x128xf32> to vector<8x128x1xf32>
    %36 = vector.shape_cast %33 : vector<8x128xf32> to vector<8x128x1xf32>
    %37 = tpu.concatenate %34, %35, %36 in 2 : vector<8x128x1xf32>, vector<8x128x1xf32>, vector<8x128x1xf32> -> vector<8x128x3xf32>
    %38 = vector.shape_cast %37 : vector<8x128x3xf32> to vector<8x384xf32>
    %c0_19 = arith.constant 0 : index
    %c0_20 = arith.constant 0 : index
    %c0_21 = arith.constant 0 : index
    %39 = vector.load %arg3[%c0_19, %c0_20, %c0_21] : memref<1x8x384xf32, #tpu.memory_space<vmem>>, vector<1x8x384xf32>
    %40 = vector.shape_cast %39 : vector<1x8x384xf32> to vector<8x384xf32>
    %41 = vector.shape_cast %38 : vector<8x384xf32> to vector<1x8x384xf32>
    tpu.vector_store %arg3[%c0_19, %c0_20, %c0_21], %41 {strides = array<i32>} : memref<1x8x384xf32, #tpu.memory_space<vmem>>, vector<1x8x384xf32>,
    return
  }
  func.func @transform_0(%arg0: i32, %arg1: i32) -> (i32, i32, i32, i32) {
    %c0_i32 = arith.constant 0 : i32
    %c0_i32_0 = arith.constant 0 : i32
    %c0_i32_1 = arith.constant 0 : i32
    return %arg0, %c0_i32, %arg1, %c0_i32_0 : i32, i32, i32, i32
  }
  func.func @transform_1(%arg0: i32, %arg1: i32) -> (i32, i32, i32) {
    %c0_i32 = arith.constant 0 : i32
    %c0_i32_0 = arith.constant 0 : i32
    return %arg0, %arg1, %c0_i32 : i32, i32, i32
  }
}

module attributes {stable_mosaic.version = 11 : i64} {
  func.func @_rgb_to_ycbcr_planar_kernel(%arg0: i32, %arg1: i32, %arg2: memref<1x3x8x128xf32, #tpu.memory_space<vmem>>, %arg3: memref<1x3x8x128xf32, #tpu.memory_space<vmem>>) attributes {dimension_semantics = [#tpu.dimension_semantics<parallel>, #tpu.dimension_semantics<parallel>], iteration_bounds = array<i64: 2, 1>, scalar_prefetch = 0 : i64, scratch_operands = 0 : i64, tpu.core_type = #tpu.core_type<tc>, window_params = [{transform_indices = @transform_0, window_bounds = array<i64: 1, 3, 8, 128>}, {transform_indices = @transform_1, window_bounds = array<i64: 1, 3, 8, 128>}]} {
    %c0 = arith.constant 0 : index
    %c0_0 = arith.constant 0 : index
    %c0_1 = arith.constant 0 : index
    %c0_2 = arith.constant 0 : index
    %0 = vector.load %arg2[%c0, %c0_0, %c0_1, %c0_2] : memref<1x3x8x128xf32, #tpu.memory_space<vmem>>, vector<1x1x8x128xf32>
    %1 = vector.shape_cast %0 : vector<1x1x8x128xf32> to vector<8x128xf32>
    %c0_3 = arith.constant 0 : index
    %c1 = arith.constant 1 : index
    %c0_4 = arith.constant 0 : index
    %c0_5 = arith.constant 0 : index
    %2 = vector.load %arg2[%c0_3, %c1, %c0_4, %c0_5] : memref<1x3x8x128xf32, #tpu.memory_space<vmem>>, vector<1x1x8x128xf32>
    %3 = vector.shape_cast %2 : vector<1x1x8x128xf32> to vector<8x128xf32>
    %c0_6 = arith.constant 0 : index
    %c2 = arith.constant 2 : index
    %c0_7 = arith.constant 0 : index
    %c0_8 = arith.constant 0 : index
    %4 = vector.load %arg2[%c0_6, %c2, %c0_7, %c0_8] : memref<1x3x8x128xf32, #tpu.memory_space<vmem>>, vector<1x1x8x128xf32>
    %5 = vector.shape_cast %4 : vector<1x1x8x128xf32> to vector<8x128xf32>
    %cst = arith.constant 2.990000e-01 : f32
    %6 = vector.broadcast %cst : f32 to vector<8x128xf32>
    %7 = arith.mulf %6, %1 : vector<8x128xf32>
    %cst_9 = arith.constant 5.870000e-01 : f32
    %8 = vector.broadcast %cst_9 : f32 to vector<8x128xf32>
    %9 = arith.mulf %8, %3 : vector<8x128xf32>
    %10 = arith.addf %7, %9 : vector<8x128xf32>
    %cst_10 = arith.constant 1.140000e-01 : f32
    %11 = vector.broadcast %cst_10 : f32 to vector<8x128xf32>
    %12 = arith.mulf %11, %5 : vector<8x128xf32>
    %13 = arith.addf %10, %12 : vector<8x128xf32>
    %cst_11 = arith.constant -1.687360e-01 : f32
    %14 = vector.broadcast %cst_11 : f32 to vector<8x128xf32>
    %15 = arith.mulf %14, %1 : vector<8x128xf32>
    %cst_12 = arith.constant 3.312640e-01 : f32
    %16 = vector.broadcast %cst_12 : f32 to vector<8x128xf32>
    %17 = arith.mulf %16, %3 : vector<8x128xf32>
    %18 = arith.subf %15, %17 : vector<8x128xf32>
    %cst_13 = arith.constant 5.000000e-01 : f32
    %19 = vector.broadcast %cst_13 : f32 to vector<8x128xf32>
    %20 = arith.mulf %19, %5 : vector<8x128xf32>
    %21 = arith.addf %18, %20 : vector<8x128xf32>
    %cst_14 = arith.constant 1.280000e+02 : f32
    %22 = vector.broadcast %cst_14 : f32 to vector<8x128xf32>
    %23 = arith.addf %21, %22 : vector<8x128xf32>
    %cst_15 = arith.constant 5.000000e-01 : f32
    %24 = vector.broadcast %cst_15 : f32 to vector<8x128xf32>
    %25 = arith.mulf %24, %1 : vector<8x128xf32>
    %cst_16 = arith.constant 4.186880e-01 : f32
    %26 = vector.broadcast %cst_16 : f32 to vector<8x128xf32>
    %27 = arith.mulf %26, %3 : vector<8x128xf32>
    %28 = arith.subf %25, %27 : vector<8x128xf32>
    %cst_17 = arith.constant 8.131200e-02 : f32
    %29 = vector.broadcast %cst_17 : f32 to vector<8x128xf32>
    %30 = arith.mulf %29, %5 : vector<8x128xf32>
    %31 = arith.subf %28, %30 : vector<8x128xf32>
    %cst_18 = arith.constant 1.280000e+02 : f32
    %32 = vector.broadcast %cst_18 : f32 to vector<8x128xf32>
    %33 = arith.addf %31, %32 : vector<8x128xf32>
    %c0_19 = arith.constant 0 : index
    %c0_20 = arith.constant 0 : index
    %c0_21 = arith.constant 0 : index
    %c0_22 = arith.constant 0 : index
    %34 = vector.load %arg3[%c0_19, %c0_20, %c0_21, %c0_22] : memref<1x3x8x128xf32, #tpu.memory_space<vmem>>, vector<1x1x8x128xf32>
    %35 = vector.shape_cast %34 : vector<1x1x8x128xf32> to vector<8x128xf32>
    %36 = vector.shape_cast %13 : vector<8x128xf32> to vector<1x1x8x128xf32>
    tpu.vector_store %arg3[%c0_19, %c0_20, %c0_21, %c0_22], %36 {strides = array<i32>} : memref<1x3x8x128xf32, #tpu.memory_space<vmem>>, vector<1x1x8x128xf32>,
    %c0_23 = arith.constant 0 : index
    %c1_24 = arith.constant 1 : index
    %c0_25 = arith.constant 0 : index
    %c0_26 = arith.constant 0 : index
    %37 = vector.load %arg3[%c0_23, %c1_24, %c0_25, %c0_26] : memref<1x3x8x128xf32, #tpu.memory_space<vmem>>, vector<1x1x8x128xf32>
    %38 = vector.shape_cast %37 : vector<1x1x8x128xf32> to vector<8x128xf32>
    %39 = vector.shape_cast %23 : vector<8x128xf32> to vector<1x1x8x128xf32>
    tpu.vector_store %arg3[%c0_23, %c1_24, %c0_25, %c0_26], %39 {strides = array<i32>} : memref<1x3x8x128xf32, #tpu.memory_space<vmem>>, vector<1x1x8x128xf32>,
    %c0_27 = arith.constant 0 : index
    %c2_28 = arith.constant 2 : index
    %c0_29 = arith.constant 0 : index
    %c0_30 = arith.constant 0 : index
    %40 = vector.load %arg3[%c0_27, %c2_28, %c0_29, %c0_30] : memref<1x3x8x128xf32, #tpu.memory_space<vmem>>, vector<1x1x8x128xf32>
    %41 = vector.shape_cast %40 : vector<1x1x8x128xf32> to vector<8x128xf32>
    %42 = vector.shape_cast %33 : vector<8x128xf32> to vector<1x1x8x128xf32>
    tpu.vector_store %arg3[%c0_27, %c2_28, %c0_29, %c0_30], %42 {strides = array<i32>} : memref<1x3x8x128xf32, #tpu.memory_space<vmem>>, vector<1x1x8x128xf32>,
    return
  }
  func.func @transform_0(%arg0: i32, %arg1: i32) -> (i32, i32, i32, i32) {
    %c0_i32 = arith.constant 0 : i32
    %c0_i32_0 = arith.constant 0 : i32
    %c0_i32_1 = arith.constant 0 : i32
    return %arg0, %c0_i32, %arg1, %c0_i32_0 : i32, i32, i32, i32
  }
  func.func @transform_1(%arg0: i32, %arg1: i32) -> (i32, i32, i32, i32) {
    %c0_i32 = arith.constant 0 : i32
    %c0_i32_0 = arith.constant 0 : i32
    %c0_i32_1 = arith.constant 0 : i32
    return %arg0, %c0_i32, %arg1, %c0_i32_0 : i32, i32, i32, i32
  }
}

</mosaic_0001>

<llo_original>
// kernel: tpu_custom_call.1
$region0: #{tpu_custom_call.1}
  #allocation0 [shape = 'u32[]', space=smem, size = 0x4, offset = 0x4, fixed_abs, tag = 'smem constant byte address 0x4 - core index']
  #allocation1 [shape = 'u32[144,128]{1,0:T(1,128)}', space=vmem, size = 0x12000, scoped, tag = 'internal scratch']
  %s0 = inlined_call_operand.hbm [shape: f32[1,3,8,128], index: 0, kind: input, shape index: {}]
  %s1 = inlined_call_operand.hbm [shape: f32[1,8,384], index: 1, kind: output, shape index: {}]
  %s2 = sld [smem:[#allocation0]]
  $region18: #{tpu_custom_call.1} parent=0
    _
  %s4 = ssub.s32 1, %s2
  %s5 = scalar_select 0, %s4, %s2
  $region1: #{tpu_custom_call.1} parent=0
    #allocation2 [shape = 'u8[12288]{0}', space=vmem, size = 0x3000, scoped, tag = 'input window, operand 0, single buffered']
    #allocation3 [shape = 's32[1]{0}', space=sflag, size = 0x4, scoped, tag = 'scoped memory for tpu_custom_call.1']
    #allocation4 [shape = 's32[1]{0}', space=sflag, size = 0x4, scoped, tag = 'scoped memory for tpu_custom_call.1']
    #allocation5 [shape = 'u8[12288]{0}', space=vmem, size = 0x3000, scoped, tag = 'output window, operand 0, single buffered']
    %6 = vsyncpa [#allocation3], 0
    %7 = vsyncpa [#allocation4], 0
    // Predicated region
    $region2: #{tpu_custom_call.1} parent=1 // pred_check
      _
    $region3: #{tpu_custom_call.1} parent=1 // pred_check_branch
      %9 = sbr.rel (0) target = $region5
    $region4: #{tpu_custom_call.1} parent=1 // pred_region
      %s11 = ssub.s32 384, 384
      %12 = vsyncadd [#allocation3], %s11
      %s13 = sshll.u32 [#allocation2], 4
      %s14 = int_to_ptr.vmem [resolvable:$true] %s13
      %19 = dma.hbm_to_vmem [thread:$0]  %s0, 384, %s14, [#allocation3], 128, 128, 8
    $region5: #{tpu_custom_call.1} parent=1 // pred_fallthru
      _
    // Predicated region
    $region6: #{tpu_custom_call.1} parent=1 // pred_check
      _
    $region7: #{tpu_custom_call.1} parent=1 // pred_check_branch
      %21 = sbr.rel (0) target = $region9
    $region8: #{tpu_custom_call.1} parent=1 // pred_region
      %22 = dma.done [#allocation3], 384
    $region9: #{tpu_custom_call.1} parent=1 // pred_fallthru
      _
    %v23 = vld [vmem:[#allocation2] sm:$0xff]
    %s24 = scalar_lea.vmem [#allocation2], 8
    %v25 = vld [vmem:[%s24] sm:$0xff]
    %s26 = scalar_lea.vmem [#allocation2], 16
    %v27 = vld [vmem:[%s26] sm:$0xff]
    %v28 = vmul.f32 %v23, 0.299
    %v29 = vmul.f32 %v25, 0.587
    %v30 = vadd.f32 %v28, %v29
    %v31 = vmul.f32 %v27, 0.114
    %v32 = vadd.f32 %v30, %v31
    %v33 = vmul.f32 %v23, -0.168736
    %v34 = vmul.f32 %v25, 0.331264
    %v35 = vsub.f32 %v33, %v34
    %v36 = vmul.f32 %v27, 0.5
    %v37 = vadd.f32 %v35, %v36
    %v38 = vadd.f32 %v37, 128.0
    %v39 = vmul.f32 %v23, 0.5
    %v40 = vmul.f32 %v25, 0.418688
    %v41 = vsub.f32 %v39, %v40
    %v42 = vmul.f32 %v27, 0.081312
    %v43 = vsub.f32 %v41, %v42
    %v44 = vadd.f32 %v43, 128.0
    %v45 = vlaneseq
    %v46 = vshrl.u32 %v45, 7
    %v47 = vsub.s32 0, %v46
    %v48 = vrot.slane %v32, %v47
    %50 = vbcast.lane.b32.xlu0 %v48, 256
    %v51 = vpop.permute.xlu0 %50
    %s53 = sor.u32 256, 8
    %54 = vbcast.lane.b32.xlu0 %v48, %s53
    %v55 = vpop.permute.xlu0 %54
    %s57 = sor.u32 256, 16
    %58 = vbcast.lane.b32.xlu0 %v48, %s57
    %v59 = vpop.permute.xlu0 %58
    %s61 = sor.u32 256, 24
    %62 = vbcast.lane.b32.xlu0 %v48, %s61
    %v63 = vpop.permute.xlu0 %62
    %s65 = sor.u32 256, 32
    %66 = vbcast.lane.b32.xlu0 %v48, %s65
    %v67 = vpop.permute.xlu0 %66
    %s69 = sor.u32 256, 40
    %70 = vbcast.lane.b32.xlu0 %v48, %s69
    %v71 = vpop.permute.xlu0 %70
    %s73 = sor.u32 256, 48
    %74 = vbcast.lane.b32.xlu0 %v48, %s73
    %v75 = vpop.permute.xlu0 %74
    %s77 = sor.u32 256, 56
    %78 = vbcast.lane.b32.xlu0 %v48, %s77
    %v79 = vpop.permute.xlu0 %78
    %s81 = sor.u32 256, 64
    %82 = vbcast.lane.b32.xlu0 %v48, %s81
    %v83 = vpop.permute.xlu0 %82
    %s85 = sor.u32 256, 72
    %86 = vbcast.lane.b32.xlu0 %v48, %s85
    %v87 = vpop.permute.xlu0 %86
    %s89 = sor.u32 256, 80
    %90 = vbcast.lane.b32.xlu0 %v48, %s89
    %v91 = vpop.permute.xlu0 %90
    %s93 = sor.u32 256, 88
    %94 = vbcast.lane.b32.xlu0 %v48, %s93
    %v95 = vpop.permute.xlu0 %94
    %s97 = sor.u32 256, 96
    %98 = vbcast.lane.b32.xlu0 %v48, %s97
    %v99 = vpop.permute.xlu0 %98
    %s101 = sor.u32 256, 104
    %102 = vbcast.lane.b32.xlu0 %v48, %s101
    %v103 = vpop.permute.xlu0 %102
    %s105 = sor.u32 256, 112
    %106 = vbcast.lane.b32.xlu0 %v48, %s105
    %v107 = vpop.permute.xlu0 %106
    %s109 = sor.u32 256, 120
    %110 = vbcast.lane.b32.xlu0 %v48, %s109
    %v111 = vpop.permute.xlu0 %110
    %v112 = vlaneseq
    %v113 = vshrl.u32 %v112, 7
    %v114 = vsub.s32 1, %v113
    %v115 = vrot.slane %v32, %v114
    %117 = vbcast.lane.b32.xlu0 %v115, 256
    %v118 = vpop.permute.xlu0 %117
    %s120 = sor.u32 256, 8
    %121 = vbcast.lane.b32.xlu0 %v115, %s120
    %v122 = vpop.permute.xlu0 %121
    %s124 = sor.u32 256, 16
    %125 = vbcast.lane.b32.xlu0 %v115, %s124
    %v126 = vpop.permute.xlu0 %125
    %s128 = sor.u32 256, 24
    %129 = vbcast.lane.b32.xlu0 %v115, %s128
    %v130 = vpop.permute.xlu0 %129
    %s132 = sor.u32 256, 32
    %133 = vbcast.lane.b32.xlu0 %v115, %s132
    %v134 = vpop.permute.xlu0 %133
    %s136 = sor.u32 256, 40
    %137 = vbcast.lane.b32.xlu0 %v115, %s136
    %v138 = vpop.permute.xlu0 %137
    %s140 = sor.u32 256, 48
    %141 = vbcast.lane.b32.xlu0 %v115, %s140
    %v142 = vpop.permute.xlu0 %141
    %s144 = sor.u32 256, 56
    %145 = vbcast.lane.b32.xlu0 %v115, %s144
    %v146 = vpop.permute.xlu0 %145
    %s148 = sor.u32 256, 64
    %149 = vbcast.lane.b32.xlu0 %v115, %s148
    %v150 = vpop.permute.xlu0 %149
    %s152 = sor.u32 256, 72
    %153 = vbcast.lane.b32.xlu0 %v115, %s152
    %v154 = vpop.permute.xlu0 %153
    %s156 = sor.u32 256, 80
    %157 = vbcast.lane.b32.xlu0 %v115, %s156
    %v158 = vpop.permute.xlu0 %157
    %s160 = sor.u32 256, 88
    %161 = vbcast.lane.b32.xlu0 %v115, %s160
    %v162 = vpop.permute.xlu0 %161
    %s164 = sor.u32 256, 96
    %165 = vbcast.lane.b32.xlu0 %v115, %s164
    %v166 = vpop.permute.xlu0 %165
    %s168 = sor.u32 256, 104
    %169 = vbcast.lane.b32.xlu0 %v115, %s168
    %v170 = vpop.permute.xlu0 %169
    %s172 = sor.u32 256, 112
    %173 = vbcast.lane.b32.xlu0 %v115, %s172
    %v174 = vpop.permute.xlu0 %173
    %s176 = sor.u32 256, 120
    %177 = vbcast.lane.b32.xlu0 %v115, %s176
    %v178 = vpop.permute.xlu0 %177
    %v179 = vlaneseq
    %v180 = vshrl.u32 %v179, 7
    %v181 = vsub.s32 2, %v180
    %v182 = vrot.slane %v32, %v181
    %184 = vbcast.lane.b32.xlu0 %v182, 256
    %v185 = vpop.permute.xlu0 %184
    %s187 = sor.u32 256, 8
    %188 = vbcast.lane.b32.xlu0 %v182, %s187
    %v189 = vpop.permute.xlu0 %188
    %s191 = sor.u32 256, 16
    %192 = vbcast.lane.b32.xlu0 %v182, %s191
    %v193 = vpop.permute.xlu0 %192
    %s195 = sor.u32 256, 24
    %196 = vbcast.lane.b32.xlu0 %v182, %s195
    %v197 = vpop.permute.xlu0 %196
    %s199 = sor.u32 256, 32
    %200 = vbcast.lane.b32.xlu0 %v182, %s199
    %v201 = vpop.permute.xlu0 %200
    %s203 = sor.u32 256, 40
    %204 = vbcast.lane.b32.xlu0 %v182, %s203
    %v205 = vpop.permute.xlu0 %204
    %s207 = sor.u32 256, 48
    %208 = vbcast.lane.b32.xlu0 %v182, %s207
    %v209 = vpop.permute.xlu0 %208
    %s211 = sor.u32 256, 56
    %212 = vbcast.lane.b32.xlu0 %v182, %s211
    %v213 = vpop.permute.xlu0 %212
    %s215 = sor.u32 256, 64
    %216 = vbcast.lane.b32.xlu0 %v182, %s215
    %v217 = vpop.permute.xlu0 %216
    %s219 = sor.u32 256, 72
    %220 = vbcast.lane.b32.xlu0 %v182, %s219
    %v221 = vpop.permute.xlu0 %220
    %s223 = sor.u32 256, 80
    %224 = vbcast.lane.b32.xlu0 %v182, %s223
    %v225 = vpop.permute.xlu0 %224
    %s227 = sor.u32 256, 88
    %228 = vbcast.lane.b32.xlu0 %v182, %s227
    %v229 = vpop.permute.xlu0 %228
    %s231 = sor.u32 256, 96
    %232 = vbcast.lane.b32.xlu0 %v182, %s231
    %v233 = vpop.permute.xlu0 %232
    %s235 = sor.u32 256, 104
    %236 = vbcast.lane.b32.xlu0 %v182, %s235
    %v237 = vpop.permute.xlu0 %236
    %s239 = sor.u32 256, 112
    %240 = vbcast.lane.b32.xlu0 %v182, %s239
    %v241 = vpop.permute.xlu0 %240
    %s243 = sor.u32 256, 120
    %244 = vbcast.lane.b32.xlu0 %v182, %s243
    %v245 = vpop.permute.xlu0 %244
    %v246 = vlaneseq
    %v247 = vshrl.u32 %v246, 7
    %v248 = vsub.s32 3, %v247
    %v249 = vrot.slane %v32, %v248
    %251 = vbcast.lane.b32.xlu0 %v249, 256
    %v252 = vpop.permute.xlu0 %251
    %s254 = sor.u32 256, 8
    %255 = vbcast.lane.b32.xlu0 %v249, %s254
    %v256 = vpop.permute.xlu0 %255
    %s258 = sor.u32 256, 16
    %259 = vbcast.lane.b32.xlu0 %v249, %s258
    %v260 = vpop.permute.xlu0 %259
    %s262 = sor.u32 256, 24
    %263 = vbcast.lane.b32.xlu0 %v249, %s262
    %v264 = vpop.permute.xlu0 %263
    %s266 = sor.u32 256, 32
    %267 = vbcast.lane.b32.xlu0 %v249, %s266
    %v268 = vpop.permute.xlu0 %267
    %s270 = sor.u32 256, 40
    %271 = vbcast.lane.b32.xlu0 %v249, %s270
    %v272 = vpop.permute.xlu0 %271
    %s274 = sor.u32 256, 48
    %275 = vbcast.lane.b32.xlu0 %v249, %s274
    %v276 = vpop.permute.xlu0 %275
    %s278 = sor.u32 256, 56
    %279 = vbcast.lane.b32.xlu0 %v249, %s278
    %v280 = vpop.permute.xlu0 %279
    %s282 = sor.u32 256, 64
    %283 = vbcast.lane.b32.xlu0 %v249, %s282
    %v284 = vpop.permute.xlu0 %283
    %s286 = sor.u32 256, 72
    %287 = vbcast.lane.b32.xlu0 %v249, %s286
    %v288 = vpop.permute.xlu0 %287
    %s290 = sor.u32 256, 80
    %291 = vbcast.lane.b32.xlu0 %v249, %s290
    %v292 = vpop.permute.xlu0 %291
    %s294 = sor.u32 256, 88
    %295 = vbcast.lane.b32.xlu0 %v249, %s294
    %v296 = vpop.permute.xlu0 %295
    %s298 = sor.u32 256, 96
    %299 = vbcast.lane.b32.xlu0 %v249, %s298
    %v300 = vpop.permute.xlu0 %299
    %s302 = sor.u32 256, 104
    %303 = vbcast.lane.b32.xlu0 %v249, %s302
    %v304 = vpop.permute.xlu0 %303
    %s306 = sor.u32 256, 112
    %307 = vbcast.lane.b32.xlu0 %v249, %s306
    %v308 = vpop.permute.xlu0 %307
    %s310 = sor.u32 256, 120
    %311 = vbcast.lane.b32.xlu0 %v249, %s310
    %v312 = vpop.permute.xlu0 %311
    %v313 = vlaneseq
    %v314 = vshrl.u32 %v313, 7
    %v315 = vsub.s32 4, %v314
    %v316 = vrot.slane %v32, %v315
    %318 = vbcast.lane.b32.xlu0 %v316, 256
    %v319 = vpop.permute.xlu0 %318
    %s321 = sor.u32 256, 8
    %322 = vbcast.lane.b32.xlu0 %v316, %s321
    %v323 = vpop.permute.xlu0 %322
    %s325 = sor.u32 256, 16
    %326 = vbcast.lane.b32.xlu0 %v316, %s325
    %v327 = vpop.permute.xlu0 %326
    %s329 = sor.u32 256, 24
    %330 = vbcast.lane.b32.xlu0 %v316, %s329
    %v331 = vpop.permute.xlu0 %330
    %s333 = sor.u32 256, 32
    %334 = vbcast.lane.b32.xlu0 %v316, %s333
    %v335 = vpop.permute.xlu0 %334
    %s337 = sor.u32 256, 40
    %338 = vbcast.lane.b32.xlu0 %v316, %s337
    %v339 = vpop.permute.xlu0 %338
    %s341 = sor.u32 256, 48
    %342 = vbcast.lane.b32.xlu0 %v316, %s341
    %v343 = vpop.permute.xlu0 %342
    %s345 = sor.u32 256, 56
    %346 = vbcast.lane.b32.xlu0 %v316, %s345
    %v347 = vpop.permute.xlu0 %346
    %s349 = sor.u32 256, 64
    %350 = vbcast.lane.b32.xlu0 %v316, %s349
    %v351 = vpop.permute.xlu0 %350
    %s353 = sor.u32 256, 72
    %354 = vbcast.lane.b32.xlu0 %v316, %s353
    %v355 = vpop.permute.xlu0 %354
    %s357 = sor.u32 256, 80
    %358 = vbcast.lane.b32.xlu0 %v316, %s357
    %v359 = vpop.permute.xlu0 %358
    %s361 = sor.u32 256, 88
    %362 = vbcast.lane.b32.xlu0 %v316, %s361
    %v363 = vpop.permute.xlu0 %362
    %s365 = sor.u32 256, 96
    %366 = vbcast.lane.b32.xlu0 %v316, %s365
    %v367 = vpop.permute.xlu0 %366
    %s369 = sor.u32 256, 104
    %370 = vbcast.lane.b32.xlu0 %v316, %s369
    %v371 = vpop.permute.xlu0 %370
    %s373 = sor.u32 256, 112
    %374 = vbcast.lane.b32.xlu0 %v316, %s373
    %v375 = vpop.permute.xlu0 %374
    %s377 = sor.u32 256, 120
    %378 = vbcast.lane.b32.xlu0 %v316, %s377
    %v379 = vpop.permute.xlu0 %378
    %v380 = vlaneseq
    %v381 = vshrl.u32 %v380, 7
    %v382 = vsub.s32 5, %v381
    %v383 = vrot.slane %v32, %v382
    %385 = vbcast.lane.b32.xlu0 %v383, 256
    %v386 = vpop.permute.xlu0 %385
    %s388 = sor.u32 256, 8
    %389 = vbcast.lane.b32.xlu0 %v383, %s388
    %v390 = vpop.permute.xlu0 %389
    %s392 = sor.u32 256, 16
    %393 = vbcast.lane.b32.xlu0 %v383, %s392
    %v394 = vpop.permute.xlu0 %393
    %s396 = sor.u32 256, 24
    %397 = vbcast.lane.b32.xlu0 %v383, %s396
    %v398 = vpop.permute.xlu0 %397
    %s400 = sor.u32 256, 32
    %401 = vbcast.lane.b32.xlu0 %v383, %s400
    %v402 = vpop.permute.xlu0 %401
    %s404 = sor.u32 256, 40
    %405 = vbcast.lane.b32.xlu0 %v383, %s404
    %v406 = vpop.permute.xlu0 %405
    %s408 = sor.u32 256, 48
    %409 = vbcast.lane.b32.xlu0 %v383, %s408
    %v410 = vpop.permute.xlu0 %409
    %s412 = sor.u32 256, 56
    %413 = vbcast.lane.b32.xlu0 %v383, %s412
    %v414 = vpop.permute.xlu0 %413
    %s416 = sor.u32 256, 64
    %417 = vbcast.lane.b32.xlu0 %v383, %s416
    %v418 = vpop.permute.xlu0 %417
    %s420 = sor.u32 256, 72
    %421 = vbcast.lane.b32.xlu0 %v383, %s420
    %v422 = vpop.permute.xlu0 %421
    %s424 = sor.u32 256, 80
    %425 = vbcast.lane.b32.xlu0 %v383, %s424
    %v426 = vpop.permute.xlu0 %425
    %s428 = sor.u32 256, 88
    %429 = vbcast.lane.b32.xlu0 %v383, %s428
    %v430 = vpop.permute.xlu0 %429
    %s432 = sor.u32 256, 96
    %433 = vbcast.lane.b32.xlu0 %v383, %s432
    %v434 = vpop.permute.xlu0 %433
    %s436 = sor.u32 256, 104
    %437 = vbcast.lane.b32.xlu0 %v383, %s436
    %v438 = vpop.permute.xlu0 %437
    %s440 = sor.u32 256, 112
    %441 = vbcast.lane.b32.xlu0 %v383, %s440
    %v442 = vpop.permute.xlu0 %441
    %s444 = sor.u32 256, 120
    %445 = vbcast.lane.b32.xlu0 %v383, %s444
    %v446 = vpop.permute.xlu0 %445
    %v447 = vlaneseq
    %v448 = vshrl.u32 %v447, 7
    %v449 = vsub.s32 6, %v448
    %v450 = vrot.slane %v32, %v449
    %452 = vbcast.lane.b32.xlu0 %v450, 256
    %v453 = vpop.permute.xlu0 %452
    %s455 = sor.u32 256, 8
    %456 = vbcast.lane.b32.xlu0 %v450, %s455
    %v457 = vpop.permute.xlu0 %456
    %s459 = sor.u32 256, 16
    %460 = vbcast.lane.b32.xlu0 %v450, %s459
    %v461 = vpop.permute.xlu0 %460
    %s463 = sor.u32 256, 24
    %464 = vbcast.lane.b32.xlu0 %v450, %s463
    %v465 = vpop.permute.xlu0 %464
    %s467 = sor.u32 256, 32
    %468 = vbcast.lane.b32.xlu0 %v450, %s467
    %v469 = vpop.permute.xlu0 %468
    %s471 = sor.u32 256, 40
    %472 = vbcast.lane.b32.xlu0 %v450, %s471
    %v473 = vpop.permute.xlu0 %472
    %s475 = sor.u32 256, 48
    %476 = vbcast.lane.b32.xlu0 %v450, %s475
    %v477 = vpop.permute.xlu0 %476
    %s479 = sor.u32 256, 56
    %480 = vbcast.lane.b32.xlu0 %v450, %s479
    %v481 = vpop.permute.xlu0 %480
    %s483 = sor.u32 256, 64
    %484 = vbcast.lane.b32.xlu0 %v450, %s483
    %v485 = vpop.permute.xlu0 %484
    %s487 = sor.u32 256, 72
    %488 = vbcast.lane.b32.xlu0 %v450, %s487
    %v489 = vpop.permute.xlu0 %488
    %s491 = sor.u32 256, 80
    %492 = vbcast.lane.b32.xlu0 %v450, %s491
    %v493 = vpop.permute.xlu0 %492
    %s495 = sor.u32 256, 88
    %496 = vbcast.lane.b32.xlu0 %v450, %s495
    %v497 = vpop.permute.xlu0 %496
    %s499 = sor.u32 256, 96
    %500 = vbcast.lane.b32.xlu0 %v450, %s499
    %v501 = vpop.permute.xlu0 %500
    %s503 = sor.u32 256, 104
    %504 = vbcast.lane.b32.xlu0 %v450, %s503
    %v505 = vpop.permute.xlu0 %504
    %s507 = sor.u32 256, 112
    %508 = vbcast.lane.b32.xlu0 %v450, %s507
    %v509 = vpop.permute.xlu0 %508
    %s511 = sor.u32 256, 120
    %512 = vbcast.lane.b32.xlu0 %v450, %s511
    %v513 = vpop.permute.xlu0 %512
    %v514 = vlaneseq
    %v515 = vshrl.u32 %v514, 7
    %v516 = vsub.s32 7, %v515
    %v517 = vrot.slane %v32, %v516
    %519 = vbcast.lane.b32.xlu0 %v517, 256
    %v520 = vpop.permute.xlu0 %519
    %s522 = sor.u32 256, 8
    %523 = vbcast.lane.b32.xlu0 %v517, %s522
    %v524 = vpop.permute.xlu0 %523
    %s526 = sor.u32 256, 16
    %527 = vbcast.lane.b32.xlu0 %v517, %s526
    %v528 = vpop.permute.xlu0 %527
    %s530 = sor.u32 256, 24
    %531 = vbcast.lane.b32.xlu0 %v517, %s530
    %v532 = vpop.permute.xlu0 %531
    %s534 = sor.u32 256, 32
    %535 = vbcast.lane.b32.xlu0 %v517, %s534
    %v536 = vpop.permute.xlu0 %535
    %s538 = sor.u32 256, 40
    %539 = vbcast.lane.b32.xlu0 %v517, %s538
    %v540 = vpop.permute.xlu0 %539
    %s542 = sor.u32 256, 48
    %543 = vbcast.lane.b32.xlu0 %v517, %s542
    %v544 = vpop.permute.xlu0 %543
    %s546 = sor.u32 256, 56
    %547 = vbcast.lane.b32.xlu0 %v517, %s546
    %v548 = vpop.permute.xlu0 %547
    %s550 = sor.u32 256, 64
    %551 = vbcast.lane.b32.xlu0 %v517, %s550
    %v552 = vpop.permute.xlu0 %551
    %s554 = sor.u32 256, 72
    %555 = vbcast.lane.b32.xlu0 %v517, %s554
    %v556 = vpop.permute.xlu0 %555
    %s558 = sor.u32 256, 80
    %559 = vbcast.lane.b32.xlu0 %v517, %s558
    %v560 = vpop.permute.xlu0 %559
    %s562 = sor.u32 256, 88
    %563 = vbcast.lane.b32.xlu0 %v517, %s562
    %v564 = vpop.permute.xlu0 %563
    %s566 = sor.u32 256, 96
    %567 = vbcast.lane.b32.xlu0 %v517, %s566
    %v568 = vpop.permute.xlu0 %567
    %s570 = sor.u32 256, 104
    %571 = vbcast.lane.b32.xlu0 %v517, %s570
    %v572 = vpop.permute.xlu0 %571
    %s574 = sor.u32 256, 112
    %575 = vbcast.lane.b32.xlu0 %v517, %s574
    %v576 = vpop.permute.xlu0 %575
    %s578 = sor.u32 256, 120
    %579 = vbcast.lane.b32.xlu0 %v517, %s578
    %v580 = vpop.permute.xlu0 %579
    %v581 = vlaneseq
    %v582 = vshrl.u32 %v581, 7
    %v583 = vsub.s32 0, %v582
    %v584 = vrot.slane %v38, %v583
    %586 = vbcast.lane.b32.xlu0 %v584, 256
    %v587 = vpop.permute.xlu0 %586
    %s589 = sor.u32 256, 8
    %590 = vbcast.lane.b32.xlu0 %v584, %s589
    %v591 = vpop.permute.xlu0 %590
    %s593 = sor.u32 256, 16
    %594 = vbcast.lane.b32.xlu0 %v584, %s593
    %v595 = vpop.permute.xlu0 %594
    %s597 = sor.u32 256, 24
    %598 = vbcast.lane.b32.xlu0 %v584, %s597
    %v599 = vpop.permute.xlu0 %598
    %s601 = sor.u32 256, 32
    %602 = vbcast.lane.b32.xlu0 %v584, %s601
    %v603 = vpop.permute.xlu0 %602
    %s605 = sor.u32 256, 40
    %606 = vbcast.lane.b32.xlu0 %v584, %s605
    %v607 = vpop.permute.xlu0 %606
    %s609 = sor.u32 256, 48
    %610 = vbcast.lane.b32.xlu0 %v584, %s609
    %v611 = vpop.permute.xlu0 %610
    %s613 = sor.u32 256, 56
    %614 = vbcast.lane.b32.xlu0 %v584, %s613
    %v615 = vpop.permute.xlu0 %614
    %s617 = sor.u32 256, 64
    %618 = vbcast.lane.b32.xlu0 %v584, %s617
    %v619 = vpop.permute.xlu0 %618
    %s621 = sor.u32 256, 72
    %622 = vbcast.lane.b32.xlu0 %v584, %s621
    %v623 = vpop.permute.xlu0 %622
    %s625 = sor.u32 256, 80
    %626 = vbcast.lane.b32.xlu0 %v584, %s625
    %v627 = vpop.permute.xlu0 %626
    %s629 = sor.u32 256, 88
    %630 = vbcast.lane.b32.xlu0 %v584, %s629
    %v631 = vpop.permute.xlu0 %630
    %s633 = sor.u32 256, 96
    %634 = vbcast.lane.b32.xlu0 %v584, %s633
    %v635 = vpop.permute.xlu0 %634
    %s637 = sor.u32 256, 104
    %638 = vbcast.lane.b32.xlu0 %v584, %s637
    %v639 = vpop.permute.xlu0 %638
    %s641 = sor.u32 256, 112
    %642 = vbcast.lane.b32.xlu0 %v584, %s641
    %v643 = vpop.permute.xlu0 %642
    %s645 = sor.u32 256, 120
    %646 = vbcast.lane.b32.xlu0 %v584, %s645
    %v647 = vpop.permute.xlu0 %646
    %v648 = vlaneseq
    %v649 = vshrl.u32 %v648, 7
    %v650 = vsub.s32 1, %v649
    %v651 = vrot.slane %v38, %v650
    %653 = vbcast.lane.b32.xlu0 %v651, 256
    %v654 = vpop.permute.xlu0 %653
    %s656 = sor.u32 256, 8
    %657 = vbcast.lane.b32.xlu0 %v651, %s656
    %v658 = vpop.permute.xlu0 %657
    %s660 = sor.u32 256, 16
    %661 = vbcast.lane.b32.xlu0 %v651, %s660
    %v662 = vpop.permute.xlu0 %661
    %s664 = sor.u32 256, 24
    %665 = vbcast.lane.b32.xlu0 %v651, %s664
    %v666 = vpop.permute.xlu0 %665
    %s668 = sor.u32 256, 32
    %669 = vbcast.lane.b32.xlu0 %v651, %s668
    %v670 = vpop.permute.xlu0 %669
    %s672 = sor.u32 256, 40
    %673 = vbcast.lane.b32.xlu0 %v651, %s672
    %v674 = vpop.permute.xlu0 %673
    %s676 = sor.u32 256, 48
    %677 = vbcast.lane.b32.xlu0 %v651, %s676
    %v678 = vpop.permute.xlu0 %677
    %s680 = sor.u32 256, 56
    %681 = vbcast.lane.b32.xlu0 %v651, %s680
    %v682 = vpop.permute.xlu0 %681
    %s684 = sor.u32 256, 64
    %685 = vbcast.lane.b32.xlu0 %v651, %s684
    %v686 = vpop.permute.xlu0 %685
    %s688 = sor.u32 256, 72
    %689 = vbcast.lane.b32.xlu0 %v651, %s688
    %v690 = vpop.permute.xlu0 %689
    %s692 = sor.u32 256, 80
    %693 = vbcast.lane.b32.xlu0 %v651, %s692
    %v694 = vpop.permute.xlu0 %693
    %s696 = sor.u32 256, 88
    %697 = vbcast.lane.b32.xlu0 %v651, %s696
    %v698 = vpop.permute.xlu0 %697
    %s700 = sor.u32 256, 96
    %701 = vbcast.lane.b32.xlu0 %v651, %s700
    %v702 = vpop.permute.xlu0 %701
    %s704 = sor.u32 256, 104
    %705 = vbcast.lane.b32.xlu0 %v651, %s704
    %v706 = vpop.permute.xlu0 %705
    %s708 = sor.u32 256, 112
    %709 = vbcast.lane.b32.xlu0 %v651, %s708
    %v710 = vpop.permute.xlu0 %709
    %s712 = sor.u32 256, 120
    %713 = vbcast.lane.b32.xlu0 %v651, %s712
    %v714 = vpop.permute.xlu0 %713
    %v715 = vlaneseq
    %v716 = vshrl.u32 %v715, 7
    %v717 = vsub.s32 2, %v716
    %v718 = vrot.slane %v38, %v717
    %720 = vbcast.lane.b32.xlu0 %v718, 256
    %v721 = vpop.permute.xlu0 %720
    %s723 = sor.u32 256, 8
    %724 = vbcast.lane.b32.xlu0 %v718, %s723
    %v725 = vpop.permute.xlu0 %724
    %s727 = sor.u32 256, 16
    %728 = vbcast.lane.b32.xlu0 %v718, %s727
    %v729 = vpop.permute.xlu0 %728
    %s731 = sor.u32 256, 24
    %732 = vbcast.lane.b32.xlu0 %v718, %s731
    %v733 = vpop.permute.xlu0 %732
    %s735 = sor.u32 256, 32
    %736 = vbcast.lane.b32.xlu0 %v718, %s735
    %v737 = vpop.permute.xlu0 %736
    %s739 = sor.u32 256, 40
    %740 = vbcast.lane.b32.xlu0 %v718, %s739
    %v741 = vpop.permute.xlu0 %740
    %s743 = sor.u32 256, 48
    %744 = vbcast.lane.b32.xlu0 %v718, %s743
    %v745 = vpop.permute.xlu0 %744
    %s747 = sor.u32 256, 56
    %748 = vbcast.lane.b32.xlu0 %v718, %s747
    %v749 = vpop.permute.xlu0 %748
    %s751 = sor.u32 256, 64
    %752 = vbcast.lane.b32.xlu0 %v718, %s751
    %v753 = vpop.permute.xlu0 %752
    %s755 = sor.u32 256, 72
    %756 = vbcast.lane.b32.xlu0 %v718, %s755
    %v757 = vpop.permute.xlu0 %756
    %s759 = sor.u32 256, 80
    %760 = vbcast.lane.b32.xlu0 %v718, %s759
    %v761 = vpop.permute.xlu0 %760
    %s763 = sor.u32 256, 88
    %764 = vbcast.lane.b32.xlu0 %v718, %s763
    %v765 = vpop.permute.xlu0 %764
    %s767 = sor.u32 256, 96
    %768 = vbcast.lane.b32.xlu0 %v718, %s767
    %v769 = vpop.permute.xlu0 %768
    %s771 = sor.u32 256, 104
    %772 = vbcast.lane.b32.xlu0 %v718, %s771
    %v773 = vpop.permute.xlu0 %772
    %s775 = sor.u32 256, 112
    %776 = vbcast.lane.b32.xlu0 %v718, %s775
    %v777 = vpop.permute.xlu0 %776
    %s779 = sor.u32 256, 120
    %780 = vbcast.lane.b32.xlu0 %v718, %s779
    %v781 = vpop.permute.xlu0 %780
    %v782 = vlaneseq
    %v783 = vshrl.u32 %v782, 7
    %v784 = vsub.s32 3, %v783
    %v785 = vrot.slane %v38, %v784
    %787 = vbcast.lane.b32.xlu0 %v785, 256
    %v788 = vpop.permute.xlu0 %787
    %s790 = sor.u32 256, 8
    %791 = vbcast.lane.b32.xlu0 %v785, %s790
    %v792 = vpop.permute.xlu0 %791
    %s794 = sor.u32 256, 16
    %795 = vbcast.lane.b32.xlu0 %v785, %s794
    %v796 = vpop.permute.xlu0 %795
    %s798 = sor.u32 256, 24
    %799 = vbcast.lane.b32.xlu0 %v785, %s798
    %v800 = vpop.permute.xlu0 %799
    %s802 = sor.u32 256, 32
    %803 = vbcast.lane.b32.xlu0 %v785, %s802
    %v804 = vpop.permute.xlu0 %803
    %s806 = sor.u32 256, 40
    %807 = vbcast.lane.b32.xlu0 %v785, %s806
    %v808 = vpop.permute.xlu0 %807
    %s810 = sor.u32 256, 48
    %811 = vbcast.lane.b32.xlu0 %v785, %s810
    %v812 = vpop.permute.xlu0 %811
    %s814 = sor.u32 256, 56
    %815 = vbcast.lane.b32.xlu0 %v785, %s814
    %v816 = vpop.permute.xlu0 %815
    %s818 = sor.u32 256, 64
    %819 = vbcast.lane.b32.xlu0 %v785, %s818
    %v820 = vpop.permute.xlu0 %819
    %s822 = sor.u32 256, 72
    %823 = vbcast.lane.b32.xlu0 %v785, %s822
    %v824 = vpop.permute.xlu0 %823
    %s826 = sor.u32 256, 80
    %827 = vbcast.lane.b32.xlu0 %v785, %s826
    %v828 = vpop.permute.xlu0 %827
    %s830 = sor.u32 256, 88
    %831 = vbcast.lane.b32.xlu0 %v785, %s830
    %v832 = vpop.permute.xlu0 %831
    %s834 = sor.u32 256, 96
    %835 = vbcast.lane.b32.xlu0 %v785, %s834
    %v836 = vpop.permute.xlu0 %835
    %s838 = sor.u32 256, 104
    %839 = vbcast.lane.b32.xlu0 %v785, %s838
    %v840 = vpop.permute.xlu0 %839
    %s842 = sor.u32 256, 112
    %843 = vbcast.lane.b32.xlu0 %v785, %s842
    %v844 = vpop.permute.xlu0 %843
    %s846 = sor.u32 256, 120
    %847 = vbcast.lane.b32.xlu0 %v785, %s846
    %v848 = vpop.permute.xlu0 %847
    %v849 = vlaneseq
    %v850 = vshrl.u32 %v849, 7
    %v851 = vsub.s32 4, %v850
    %v852 = vrot.slane %v38, %v851
    %854 = vbcast.lane.b32.xlu0 %v852, 256
    %v855 = vpop.permute.xlu0 %854
    %s857 = sor.u32 256, 8
    %858 = vbcast.lane.b32.xlu0 %v852, %s857
    %v859 = vpop.permute.xlu0 %858
    %s861 = sor.u32 256, 16
    %862 = vbcast.lane.b32.xlu0 %v852, %s861
    %v863 = vpop.permute.xlu0 %862
    %s865 = sor.u32 256, 24
    %866 = vbcast.lane.b32.xlu0 %v852, %s865
    %v867 = vpop.permute.xlu0 %866
    %s869 = sor.u32 256, 32
    %870 = vbcast.lane.b32.xlu0 %v852, %s869
    %v871 = vpop.permute.xlu0 %870
    %s873 = sor.u32 256, 40
    %874 = vbcast.lane.b32.xlu0 %v852, %s873
    %v875 = vpop.permute.xlu0 %874
    %s877 = sor.u32 256, 48
    %878 = vbcast.lane.b32.xlu0 %v852, %s877
    %v879 = vpop.permute.xlu0 %878
    %s881 = sor.u32 256, 56
    %882 = vbcast.lane.b32.xlu0 %v852, %s881
    %v883 = vpop.permute.xlu0 %882
    %s885 = sor.u32 256, 64
    %886 = vbcast.lane.b32.xlu0 %v852, %s885
    %v887 = vpop.permute.xlu0 %886
    %s889 = sor.u32 256, 72
    %890 = vbcast.lane.b32.xlu0 %v852, %s889
    %v891 = vpop.permute.xlu0 %890
    %s893 = sor.u32 256, 80
    %894 = vbcast.lane.b32.xlu0 %v852, %s893
    %v895 = vpop.permute.xlu0 %894
    %s897 = sor.u32 256, 88
    %898 = vbcast.lane.b32.xlu0 %v852, %s897
    %v899 = vpop.permute.xlu0 %898
    %s901 = sor.u32 256, 96
    %902 = vbcast.lane.b32.xlu0 %v852, %s901
    %v903 = vpop.permute.xlu0 %902
    %s905 = sor.u32 256, 104
    %906 = vbcast.lane.b32.xlu0 %v852, %s905
    %v907 = vpop.permute.xlu0 %906
    %s909 = sor.u32 256, 112
    %910 = vbcast.lane.b32.xlu0 %v852, %s909
    %v911 = vpop.permute.xlu0 %910
    %s913 = sor.u32 256, 120
    %914 = vbcast.lane.b32.xlu0 %v852, %s913
    %v915 = vpop.permute.xlu0 %914
    %v916 = vlaneseq
    %v917 = vshrl.u32 %v916, 7
    %v918 = vsub.s32 5, %v917
    %v919 = vrot.slane %v38, %v918
    %921 = vbcast.lane.b32.xlu0 %v919, 256
    %v922 = vpop.permute.xlu0 %921
    %s924 = sor.u32 256, 8
    %925 = vbcast.lane.b32.xlu0 %v919, %s924
    %v926 = vpop.permute.xlu0 %925
    %s928 = sor.u32 256, 16
    %929 = vbcast.lane.b32.xlu0 %v919, %s928
    %v930 = vpop.permute.xlu0 %929
    %s932 = sor.u32 256, 24
    %933 = vbcast.lane.b32.xlu0 %v919, %s932
    %v934 = vpop.permute.xlu0 %933
    %s936 = sor.u32 256, 32
    %937 = vbcast.lane.b32.xlu0 %v919, %s936
    %v938 = vpop.permute.xlu0 %937
    %s940 = sor.u32 256, 40
    %941 = vbcast.lane.b32.xlu0 %v919, %s940
    %v942 = vpop.permute.xlu0 %941
    %s944 = sor.u32 256, 48
    %945 = vbcast.lane.b32.xlu0 %v919, %s944
    %v946 = vpop.permute.xlu0 %945
    %s948 = sor.u32 256, 56
    %949 = vbcast.lane.b32.xlu0 %v919, %s948
    %v950 = vpop.permute.xlu0 %949
    %s952 = sor.u32 256, 64
    %953 = vbcast.lane.b32.xlu0 %v919, %s952
    %v954 = vpop.permute.xlu0 %953
    %s956 = sor.u32 256, 72
    %957 = vbcast.lane.b32.xlu0 %v919, %s956
    %v958 = vpop.permute.xlu0 %957
    %s960 = sor.u32 256, 80
    %961 = vbcast.lane.b32.xlu0 %v919, %s960
    %v962 = vpop.permute.xlu0 %961
    %s964 = sor.u32 256, 88
    %965 = vbcast.lane.b32.xlu0 %v919, %s964
    %v966 = vpop.permute.xlu0 %965
    %s968 = sor.u32 256, 96
    %969 = vbcast.lane.b32.xlu0 %v919, %s968
    %v970 = vpop.permute.xlu0 %969
    %s972 = sor.u32 256, 104
    %973 = vbcast.lane.b32.xlu0 %v919, %s972
    %v974 = vpop.permute.xlu0 %973
    %s976 = sor.u32 256, 112
    %977 = vbcast.lane.b32.xlu0 %v919, %s976
    %v978 = vpop.permute.xlu0 %977
    %s980 = sor.u32 256, 120
    %981 = vbcast.lane.b32.xlu0 %v919, %s980
    %v982 = vpop.permute.xlu0 %981
    %v983 = vlaneseq
    %v984 = vshrl.u32 %v983, 7
    %v985 = vsub.s32 6, %v984
    %v986 = vrot.slane %v38, %v985
    %988 = vbcast.lane.b32.xlu0 %v986, 256
    %v989 = vpop.permute.xlu0 %988
    %s991 = sor.u32 256, 8
    %992 = vbcast.lane.b32.xlu0 %v986, %s991
    %v993 = vpop.permute.xlu0 %992
    %s995 = sor.u32 256, 16
    %996 = vbcast.lane.b32.xlu0 %v986, %s995
    %v997 = vpop.permute.xlu0 %996
    %s999 = sor.u32 256, 24
    %1000 = vbcast.lane.b32.xlu0 %v986, %s999
    %v1001 = vpop.permute.xlu0 %1000
    %s1003 = sor.u32 256, 32
    %1004 = vbcast.lane.b32.xlu0 %v986, %s1003
    %v1005 = vpop.permute.xlu0 %1004
    %s1007 = sor.u32 256, 40
    %1008 = vbcast.lane.b32.xlu0 %v986, %s1007
    %v1009 = vpop.permute.xlu0 %1008
    %s1011 = sor.u32 256, 48
    %1012 = vbcast.lane.b32.xlu0 %v986, %s1011
    %v1013 = vpop.permute.xlu0 %1012
    %s1015 = sor.u32 256, 56
    %1016 = vbcast.lane.b32.xlu0 %v986, %s1015
    %v1017 = vpop.permute.xlu0 %1016
    %s1019 = sor.u32 256, 64
    %1020 = vbcast.lane.b32.xlu0 %v986, %s1019
    %v1021 = vpop.permute.xlu0 %1020
    %s1023 = sor.u32 256, 72
    %1024 = vbcast.lane.b32.xlu0 %v986, %s1023
    %v1025 = vpop.permute.xlu0 %1024
    %s1027 = sor.u32 256, 80
    %1028 = vbcast.lane.b32.xlu0 %v986, %s1027
    %v1029 = vpop.permute.xlu0 %1028
    %s1031 = sor.u32 256, 88
    %1032 = vbcast.lane.b32.xlu0 %v986, %s1031
    %v1033 = vpop.permute.xlu0 %1032
    %s1035 = sor.u32 256, 96
    %1036 = vbcast.lane.b32.xlu0 %v986, %s1035
    %v1037 = vpop.permute.xlu0 %1036
    %s1039 = sor.u32 256, 104
    %1040 = vbcast.lane.b32.xlu0 %v986, %s1039
    %v1041 = vpop.permute.xlu0 %1040
    %s1043 = sor.u32 256, 112
    %1044 = vbcast.lane.b32.xlu0 %v986, %s1043
    %v1045 = vpop.permute.xlu0 %1044
    %s1047 = sor.u32 256, 120
    %1048 = vbcast.lane.b32.xlu0 %v986, %s1047
    %v1049 = vpop.permute.xlu0 %1048
    %v1050 = vlaneseq
    %v1051 = vshrl.u32 %v1050, 7
    %v1052 = vsub.s32 7, %v1051
    %v1053 = vrot.slane %v38, %v1052
    %1055 = vbcast.lane.b32.xlu0 %v1053, 256
    %v1056 = vpop.permute.xlu0 %1055
    %s1058 = sor.u32 256, 8
    %1059 = vbcast.lane.b32.xlu0 %v1053, %s1058
    %v1060 = vpop.permute.xlu0 %1059
    %s1062 = sor.u32 256, 16
    %1063 = vbcast.lane.b32.xlu0 %v1053, %s1062
    %v1064 = vpop.permute.xlu0 %1063
    %s1066 = sor.u32 256, 24
    %1067 = vbcast.lane.b32.xlu0 %v1053, %s1066
    %v1068 = vpop.permute.xlu0 %1067
    %s1070 = sor.u32 256, 32
    %1071 = vbcast.lane.b32.xlu0 %v1053, %s1070
    %v1072 = vpop.permute.xlu0 %1071
    %s1074 = sor.u32 256, 40
    %1075 = vbcast.lane.b32.xlu0 %v1053, %s1074
    %v1076 = vpop.permute.xlu0 %1075
    %s1078 = sor.u32 256, 48
    %1079 = vbcast.lane.b32.xlu0 %v1053, %s1078
    %v1080 = vpop.permute.xlu0 %1079
    %s1082 = sor.u32 256, 56
    %1083 = vbcast.lane.b32.xlu0 %v1053, %s1082
    %v1084 = vpop.permute.xlu0 %1083
    %s1086 = sor.u32 256, 64
    %1087 = vbcast.lane.b32.xlu0 %v1053, %s1086
    %v1088 = vpop.permute.xlu0 %1087
    %s1090 = sor.u32 256, 72
    %1091 = vbcast.lane.b32.xlu0 %v1053, %s1090
    %v1092 = vpop.permute.xlu0 %1091
    %s1094 = sor.u32 256, 80
    %1095 = vbcast.lane.b32.xlu0 %v1053, %s1094
    %v1096 = vpop.permute.xlu0 %1095
    %s1098 = sor.u32 256, 88
    %1099 = vbcast.lane.b32.xlu0 %v1053, %s1098
    %v1100 = vpop.permute.xlu0 %1099
    %s1102 = sor.u32 256, 96
    %1103 = vbcast.lane.b32.xlu0 %v1053, %s1102
    %v1104 = vpop.permute.xlu0 %1103
    %s1106 = sor.u32 256, 104
    %1107 = vbcast.lane.b32.xlu0 %v1053, %s1106
    %v1108 = vpop.permute.xlu0 %1107
    %s1110 = sor.u32 256, 112
    %1111 = vbcast.lane.b32.xlu0 %v1053, %s1110
    %v1112 = vpop.permute.xlu0 %1111
    %s1114 = sor.u32 256, 120
    %1115 = vbcast.lane.b32.xlu0 %v1053, %s1114
    %v1116 = vpop.permute.xlu0 %1115
    %v1117 = vlaneseq
    %v1118 = vshrl.u32 %v1117, 7
    %v1119 = vsub.s32 0, %v1118
    %v1120 = vrot.slane %v44, %v1119
    %1122 = vbcast.lane.b32.xlu0 %v1120, 256
    %v1123 = vpop.permute.xlu0 %1122
    %s1125 = sor.u32 256, 8
    %1126 = vbcast.lane.b32.xlu0 %v1120, %s1125
    %v1127 = vpop.permute.xlu0 %1126
    %s1129 = sor.u32 256, 16
    %1130 = vbcast.lane.b32.xlu0 %v1120, %s1129
    %v1131 = vpop.permute.xlu0 %1130
    %s1133 = sor.u32 256, 24
    %1134 = vbcast.lane.b32.xlu0 %v1120, %s1133
    %v1135 = vpop.permute.xlu0 %1134
    %s1137 = sor.u32 256, 32
    %1138 = vbcast.lane.b32.xlu0 %v1120, %s1137
    %v1139 = vpop.permute.xlu0 %1138
    %s1141 = sor.u32 256, 40
    %1142 = vbcast.lane.b32.xlu0 %v1120, %s1141
    %v1143 = vpop.permute.xlu0 %1142
    %s1145 = sor.u32 256, 48
    %1146 = vbcast.lane.b32.xlu0 %v1120, %s1145
    %v1147 = vpop.permute.xlu0 %1146
    %s1149 = sor.u32 256, 56
    %1150 = vbcast.lane.b32.xlu0 %v1120, %s1149
    %v1151 = vpop.permute.xlu0 %1150
    %s1153 = sor.u32 256, 64
    %1154 = vbcast.lane.b32.xlu0 %v1120, %s1153
    %v1155 = vpop.permute.xlu0 %1154
    %s1157 = sor.u32 256, 72
    %1158 = vbcast.lane.b32.xlu0 %v1120, %s1157
    %v1159 = vpop.permute.xlu0 %1158
    %s1161 = sor.u32 256, 80
    %1162 = vbcast.lane.b32.xlu0 %v1120, %s1161
    %v1163 = vpop.permute.xlu0 %1162
    %s1165 = sor.u32 256, 88
    %1166 = vbcast.lane.b32.xlu0 %v1120, %s1165
    %v1167 = vpop.permute.xlu0 %1166
    %s1169 = sor.u32 256, 96
    %1170 = vbcast.lane.b32.xlu0 %v1120, %s1169
    %v1171 = vpop.permute.xlu0 %1170
    %s1173 = sor.u32 256, 104
    %1174 = vbcast.lane.b32.xlu0 %v1120, %s1173
    %v1175 = vpop.permute.xlu0 %1174
    %s1177 = sor.u32 256, 112
    %1178 = vbcast.lane.b32.xlu0 %v1120, %s1177
    %v1179 = vpop.permute.xlu0 %1178
    %s1181 = sor.u32 256, 120
    %1182 = vbcast.lane.b32.xlu0 %v1120, %s1181
    %v1183 = vpop.permute.xlu0 %1182
    %v1184 = vlaneseq
    %v1185 = vshrl.u32 %v1184, 7
    %v1186 = vsub.s32 1, %v1185
    %v1187 = vrot.slane %v44, %v1186
    %1189 = vbcast.lane.b32.xlu0 %v1187, 256
    %v1190 = vpop.permute.xlu0 %1189
    %s1192 = sor.u32 256, 8
    %1193 = vbcast.lane.b32.xlu0 %v1187, %s1192
    %v1194 = vpop.permute.xlu0 %1193
    %s1196 = sor.u32 256, 16
    %1197 = vbcast.lane.b32.xlu0 %v1187, %s1196
    %v1198 = vpop.permute.xlu0 %1197
    %s1200 = sor.u32 256, 24
    %1201 = vbcast.lane.b32.xlu0 %v1187, %s1200
    %v1202 = vpop.permute.xlu0 %1201
    %s1204 = sor.u32 256, 32
    %1205 = vbcast.lane.b32.xlu0 %v1187, %s1204
    %v1206 = vpop.permute.xlu0 %1205
    %s1208 = sor.u32 256, 40
    %1209 = vbcast.lane.b32.xlu0 %v1187, %s1208
    %v1210 = vpop.permute.xlu0 %1209
    %s1212 = sor.u32 256, 48
    %1213 = vbcast.lane.b32.xlu0 %v1187, %s1212
    %v1214 = vpop.permute.xlu0 %1213
    %s1216 = sor.u32 256, 56
    %1217 = vbcast.lane.b32.xlu0 %v1187, %s1216
    %v1218 = vpop.permute.xlu0 %1217
    %s1220 = sor.u32 256, 64
    %1221 = vbcast.lane.b32.xlu0 %v1187, %s1220
    %v1222 = vpop.permute.xlu0 %1221
    %s1224 = sor.u32 256, 72
    %1225 = vbcast.lane.b32.xlu0 %v1187, %s1224
    %v1226 = vpop.permute.xlu0 %1225
    %s1228 = sor.u32 256, 80
    %1229 = vbcast.lane.b32.xlu0 %v1187, %s1228
    %v1230 = vpop.permute.xlu0 %1229
    %s1232 = sor.u32 256, 88
    %1233 = vbcast.lane.b32.xlu0 %v1187, %s1232
    %v1234 = vpop.permute.xlu0 %1233
    %s1236 = sor.u32 256, 96
    %1237 = vbcast.lane.b32.xlu0 %v1187, %s1236
    %v1238 = vpop.permute.xlu0 %1237
    %s1240 = sor.u32 256, 104
    %1241 = vbcast.lane.b32.xlu0 %v1187, %s1240
    %v1242 = vpop.permute.xlu0 %1241
    %s1244 = sor.u32 256, 112
    %1245 = vbcast.lane.b32.xlu0 %v1187, %s1244
    %v1246 = vpop.permute.xlu0 %1245
    %s1248 = sor.u32 256, 120
    %1249 = vbcast.lane.b32.xlu0 %v1187, %s1248
    %v1250 = vpop.permute.xlu0 %1249
    %v1251 = vlaneseq
    %v1252 = vshrl.u32 %v1251, 7
    %v1253 = vsub.s32 2, %v1252
    %v1254 = vrot.slane %v44, %v1253
    %1256 = vbcast.lane.b32.xlu0 %v1254, 256
    %v1257 = vpop.permute.xlu0 %1256
    %s1259 = sor.u32 256, 8
    %1260 = vbcast.lane.b32.xlu0 %v1254, %s1259
    %v1261 = vpop.permute.xlu0 %1260
    %s1263 = sor.u32 256, 16
    %1264 = vbcast.lane.b32.xlu0 %v1254, %s1263
    %v1265 = vpop.permute.xlu0 %1264
    %s1267 = sor.u32 256, 24
    %1268 = vbcast.lane.b32.xlu0 %v1254, %s1267
    %v1269 = vpop.permute.xlu0 %1268
    %s1271 = sor.u32 256, 32
    %1272 = vbcast.lane.b32.xlu0 %v1254, %s1271
    %v1273 = vpop.permute.xlu0 %1272
    %s1275 = sor.u32 256, 40
    %1276 = vbcast.lane.b32.xlu0 %v1254, %s1275
    %v1277 = vpop.permute.xlu0 %1276
    %s1279 = sor.u32 256, 48
    %1280 = vbcast.lane.b32.xlu0 %v1254, %s1279
    %v1281 = vpop.permute.xlu0 %1280
    %s1283 = sor.u32 256, 56
    %1284 = vbcast.lane.b32.xlu0 %v1254, %s1283
    %v1285 = vpop.permute.xlu0 %1284
    %s1287 = sor.u32 256, 64
    %1288 = vbcast.lane.b32.xlu0 %v1254, %s1287
    %v1289 = vpop.permute.xlu0 %1288
    %s1291 = sor.u32 256, 72
    %1292 = vbcast.lane.b32.xlu0 %v1254, %s1291
    %v1293 = vpop.permute.xlu0 %1292
    %s1295 = sor.u32 256, 80
    %1296 = vbcast.lane.b32.xlu0 %v1254, %s1295
    %v1297 = vpop.permute.xlu0 %1296
    %s1299 = sor.u32 256, 88
    %1300 = vbcast.lane.b32.xlu0 %v1254, %s1299
    %v1301 = vpop.permute.xlu0 %1300
    %s1303 = sor.u32 256, 96
    %1304 = vbcast.lane.b32.xlu0 %v1254, %s1303
    %v1305 = vpop.permute.xlu0 %1304
    %s1307 = sor.u32 256, 104
    %1308 = vbcast.lane.b32.xlu0 %v1254, %s1307
    %v1309 = vpop.permute.xlu0 %1308
    %s1311 = sor.u32 256, 112
    %1312 = vbcast.lane.b32.xlu0 %v1254, %s1311
    %v1313 = vpop.permute.xlu0 %1312
    %s1315 = sor.u32 256, 120
    %1316 = vbcast.lane.b32.xlu0 %v1254, %s1315
    %v1317 = vpop.permute.xlu0 %1316
    %v1318 = vlaneseq
    %v1319 = vshrl.u32 %v1318, 7
    %v1320 = vsub.s32 3, %v1319
    %v1321 = vrot.slane %v44, %v1320
    %1323 = vbcast.lane.b32.xlu0 %v1321, 256
    %v1324 = vpop.permute.xlu0 %1323
    %s1326 = sor.u32 256, 8
    %1327 = vbcast.lane.b32.xlu0 %v1321, %s1326
    %v1328 = vpop.permute.xlu0 %1327
    %s1330 = sor.u32 256, 16
    %1331 = vbcast.lane.b32.xlu0 %v1321, %s1330
    %v1332 = vpop.permute.xlu0 %1331
    %s1334 = sor.u32 256, 24
    %1335 = vbcast.lane.b32.xlu0 %v1321, %s1334
    %v1336 = vpop.permute.xlu0 %1335
    %s1338 = sor.u32 256, 32
    %1339 = vbcast.lane.b32.xlu0 %v1321, %s1338
    %v1340 = vpop.permute.xlu0 %1339
    %s1342 = sor.u32 256, 40
    %1343 = vbcast.lane.b32.xlu0 %v1321, %s1342
    %v1344 = vpop.permute.xlu0 %1343
    %s1346 = sor.u32 256, 48
    %1347 = vbcast.lane.b32.xlu0 %v1321, %s1346
    %v1348 = vpop.permute.xlu0 %1347
    %s1350 = sor.u32 256, 56
    %1351 = vbcast.lane.b32.xlu0 %v1321, %s1350
    %v1352 = vpop.permute.xlu0 %1351
    %s1354 = sor.u32 256, 64
    %1355 = vbcast.lane.b32.xlu0 %v1321, %s1354
    %v1356 = vpop.permute.xlu0 %1355
    %s1358 = sor.u32 256, 72
    %1359 = vbcast.lane.b32.xlu0 %v1321, %s1358
    %v1360 = vpop.permute.xlu0 %1359
    %s1362 = sor.u32 256, 80
    %1363 = vbcast.lane.b32.xlu0 %v1321, %s1362
    %v1364 = vpop.permute.xlu0 %1363
    %s1366 = sor.u32 256, 88
    %1367 = vbcast.lane.b32.xlu0 %v1321, %s1366
    %v1368 = vpop.permute.xlu0 %1367
    %s1370 = sor.u32 256, 96
    %1371 = vbcast.lane.b32.xlu0 %v1321, %s1370
    %v1372 = vpop.permute.xlu0 %1371
    %s1374 = sor.u32 256, 104
    %1375 = vbcast.lane.b32.xlu0 %v1321, %s1374
    %v1376 = vpop.permute.xlu0 %1375
    %s1378 = sor.u32 256, 112
    %1379 = vbcast.lane.b32.xlu0 %v1321, %s1378
    %v1380 = vpop.permute.xlu0 %1379
    %s1382 = sor.u32 256, 120
    %1383 = vbcast.lane.b32.xlu0 %v1321, %s1382
    %v1384 = vpop.permute.xlu0 %1383
    %v1385 = vlaneseq
    %v1386 = vshrl.u32 %v1385, 7
    %v1387 = vsub.s32 4, %v1386
    %v1388 = vrot.slane %v44, %v1387
    %1390 = vbcast.lane.b32.xlu0 %v1388, 256
    %v1391 = vpop.permute.xlu0 %1390
    %s1393 = sor.u32 256, 8
    %1394 = vbcast.lane.b32.xlu0 %v1388, %s1393
    %v1395 = vpop.permute.xlu0 %1394
    %s1397 = sor.u32 256, 16
    %1398 = vbcast.lane.b32.xlu0 %v1388, %s1397
    %v1399 = vpop.permute.xlu0 %1398
    %s1401 = sor.u32 256, 24
    %1402 = vbcast.lane.b32.xlu0 %v1388, %s1401
    %v1403 = vpop.permute.xlu0 %1402
    %s1405 = sor.u32 256, 32
    %1406 = vbcast.lane.b32.xlu0 %v1388, %s1405
    %v1407 = vpop.permute.xlu0 %1406
    %s1409 = sor.u32 256, 40
    %1410 = vbcast.lane.b32.xlu0 %v1388, %s1409
    %v1411 = vpop.permute.xlu0 %1410
    %s1413 = sor.u32 256, 48
    %1414 = vbcast.lane.b32.xlu0 %v1388, %s1413
    %v1415 = vpop.permute.xlu0 %1414
    %s1417 = sor.u32 256, 56
    %1418 = vbcast.lane.b32.xlu0 %v1388, %s1417
    %v1419 = vpop.permute.xlu0 %1418
    %s1421 = sor.u32 256, 64
    %1422 = vbcast.lane.b32.xlu0 %v1388, %s1421
    %v1423 = vpop.permute.xlu0 %1422
    %s1425 = sor.u32 256, 72
    %1426 = vbcast.lane.b32.xlu0 %v1388, %s1425
    %v1427 = vpop.permute.xlu0 %1426
    %s1429 = sor.u32 256, 80
    %1430 = vbcast.lane.b32.xlu0 %v1388, %s1429
    %v1431 = vpop.permute.xlu0 %1430
    %s1433 = sor.u32 256, 88
    %1434 = vbcast.lane.b32.xlu0 %v1388, %s1433
    %v1435 = vpop.permute.xlu0 %1434
    %s1437 = sor.u32 256, 96
    %1438 = vbcast.lane.b32.xlu0 %v1388, %s1437
    %v1439 = vpop.permute.xlu0 %1438
    %s1441 = sor.u32 256, 104
    %1442 = vbcast.lane.b32.xlu0 %v1388, %s1441
    %v1443 = vpop.permute.xlu0 %1442
    %s1445 = sor.u32 256, 112
    %1446 = vbcast.lane.b32.xlu0 %v1388, %s1445
    %v1447 = vpop.permute.xlu0 %1446
    %s1449 = sor.u32 256, 120
    %1450 = vbcast.lane.b32.xlu0 %v1388, %s1449
    %v1451 = vpop.permute.xlu0 %1450
    %v1452 = vlaneseq
    %v1453 = vshrl.u32 %v1452, 7
    %v1454 = vsub.s32 5, %v1453
    %v1455 = vrot.slane %v44, %v1454
    %1457 = vbcast.lane.b32.xlu0 %v1455, 256
    %v1458 = vpop.permute.xlu0 %1457
    %s1460 = sor.u32 256, 8
    %1461 = vbcast.lane.b32.xlu0 %v1455, %s1460
    %v1462 = vpop.permute.xlu0 %1461
    %s1464 = sor.u32 256, 16
    %1465 = vbcast.lane.b32.xlu0 %v1455, %s1464
    %v1466 = vpop.permute.xlu0 %1465
    %s1468 = sor.u32 256, 24
    %1469 = vbcast.lane.b32.xlu0 %v1455, %s1468
    %v1470 = vpop.permute.xlu0 %1469
    %s1472 = sor.u32 256, 32
    %1473 = vbcast.lane.b32.xlu0 %v1455, %s1472
    %v1474 = vpop.permute.xlu0 %1473
    %s1476 = sor.u32 256, 40
    %1477 = vbcast.lane.b32.xlu0 %v1455, %s1476
    %v1478 = vpop.permute.xlu0 %1477
    %s1480 = sor.u32 256, 48
    %1481 = vbcast.lane.b32.xlu0 %v1455, %s1480
    %v1482 = vpop.permute.xlu0 %1481
    %s1484 = sor.u32 256, 56
    %1485 = vbcast.lane.b32.xlu0 %v1455, %s1484
    %v1486 = vpop.permute.xlu0 %1485
    %s1488 = sor.u32 256, 64
    %1489 = vbcast.lane.b32.xlu0 %v1455, %s1488
    %v1490 = vpop.permute.xlu0 %1489
    %s1492 = sor.u32 256, 72
    %1493 = vbcast.lane.b32.xlu0 %v1455, %s1492
    %v1494 = vpop.permute.xlu0 %1493
    %s1496 = sor.u32 256, 80
    %1497 = vbcast.lane.b32.xlu0 %v1455, %s1496
    %v1498 = vpop.permute.xlu0 %1497
    %s1500 = sor.u32 256, 88
    %1501 = vbcast.lane.b32.xlu0 %v1455, %s1500
    %v1502 = vpop.permute.xlu0 %1501
    %s1504 = sor.u32 256, 96
    %1505 = vbcast.lane.b32.xlu0 %v1455, %s1504
    %v1506 = vpop.permute.xlu0 %1505
    %s1508 = sor.u32 256, 104
    %1509 = vbcast.lane.b32.xlu0 %v1455, %s1508
    %v1510 = vpop.permute.xlu0 %1509
    %s1512 = sor.u32 256, 112
    %1513 = vbcast.lane.b32.xlu0 %v1455, %s1512
    %v1514 = vpop.permute.xlu0 %1513
    %s1516 = sor.u32 256, 120
    %1517 = vbcast.lane.b32.xlu0 %v1455, %s1516
    %v1518 = vpop.permute.xlu0 %1517
    %v1519 = vlaneseq
    %v1520 = vshrl.u32 %v1519, 7
    %v1521 = vsub.s32 6, %v1520
    %v1522 = vrot.slane %v44, %v1521
    %1524 = vbcast.lane.b32.xlu0 %v1522, 256
    %v1525 = vpop.permute.xlu0 %1524
    %s1527 = sor.u32 256, 8
    %1528 = vbcast.lane.b32.xlu0 %v1522, %s1527
    %v1529 = vpop.permute.xlu0 %1528
    %s1531 = sor.u32 256, 16
    %1532 = vbcast.lane.b32.xlu0 %v1522, %s1531
    %v1533 = vpop.permute.xlu0 %1532
    %s1535 = sor.u32 256, 24
    %1536 = vbcast.lane.b32.xlu0 %v1522, %s1535
    %v1537 = vpop.permute.xlu0 %1536
    %s1539 = sor.u32 256, 32
    %1540 = vbcast.lane.b32.xlu0 %v1522, %s1539
    %v1541 = vpop.permute.xlu0 %1540
    %s1543 = sor.u32 256, 40
    %1544 = vbcast.lane.b32.xlu0 %v1522, %s1543
    %v1545 = vpop.permute.xlu0 %1544
    %s1547 = sor.u32 256, 48
    %1548 = vbcast.lane.b32.xlu0 %v1522, %s1547
    %v1549 = vpop.permute.xlu0 %1548
    %s1551 = sor.u32 256, 56
    %1552 = vbcast.lane.b32.xlu0 %v1522, %s1551
    %v1553 = vpop.permute.xlu0 %1552
    %s1555 = sor.u32 256, 64
    %1556 = vbcast.lane.b32.xlu0 %v1522, %s1555
    %v1557 = vpop.permute.xlu0 %1556
    %s1559 = sor.u32 256, 72
    %1560 = vbcast.lane.b32.xlu0 %v1522, %s1559
    %v1561 = vpop.permute.xlu0 %1560
    %s1563 = sor.u32 256, 80
    %1564 = vbcast.lane.b32.xlu0 %v1522, %s1563
    %v1565 = vpop.permute.xlu0 %1564
    %s1567 = sor.u32 256, 88
    %1568 = vbcast.lane.b32.xlu0 %v1522, %s1567
    %v1569 = vpop.permute.xlu0 %1568
    %s1571 = sor.u32 256, 96
    %1572 = vbcast.lane.b32.xlu0 %v1522, %s1571
    %v1573 = vpop.permute.xlu0 %1572
    %s1575 = sor.u32 256, 104
    %1576 = vbcast.lane.b32.xlu0 %v1522, %s1575
    %v1577 = vpop.permute.xlu0 %1576
    %s1579 = sor.u32 256, 112
    %1580 = vbcast.lane.b32.xlu0 %v1522, %s1579
    %v1581 = vpop.permute.xlu0 %1580
    %s1583 = sor.u32 256, 120
    %1584 = vbcast.lane.b32.xlu0 %v1522, %s1583
    %v1585 = vpop.permute.xlu0 %1584
    %v1586 = vlaneseq
    %v1587 = vshrl.u32 %v1586, 7
    %v1588 = vsub.s32 7, %v1587
    %v1589 = vrot.slane %v44, %v1588
    %1591 = vbcast.lane.b32.xlu0 %v1589, 256
    %v1592 = vpop.permute.xlu0 %1591
    %s1594 = sor.u32 256, 8
    %1595 = vbcast.lane.b32.xlu0 %v1589, %s1594
    %v1596 = vpop.permute.xlu0 %1595
    %s1598 = sor.u32 256, 16
    %1599 = vbcast.lane.b32.xlu0 %v1589, %s1598
    %v1600 = vpop.permute.xlu0 %1599
    %s1602 = sor.u32 256, 24
    %1603 = vbcast.lane.b32.xlu0 %v1589, %s1602
    %v1604 = vpop.permute.xlu0 %1603
    %s1606 = sor.u32 256, 32
    %1607 = vbcast.lane.b32.xlu0 %v1589, %s1606
    %v1608 = vpop.permute.xlu0 %1607
    %s1610 = sor.u32 256, 40
    %1611 = vbcast.lane.b32.xlu0 %v1589, %s1610
    %v1612 = vpop.permute.xlu0 %1611
    %s1614 = sor.u32 256, 48
    %1615 = vbcast.lane.b32.xlu0 %v1589, %s1614
    %v1616 = vpop.permute.xlu0 %1615
    %s1618 = sor.u32 256, 56
    %1619 = vbcast.lane.b32.xlu0 %v1589, %s1618
    %v1620 = vpop.permute.xlu0 %1619
    %s1622 = sor.u32 256, 64
    %1623 = vbcast.lane.b32.xlu0 %v1589, %s1622
    %v1624 = vpop.permute.xlu0 %1623
    %s1626 = sor.u32 256, 72
    %1627 = vbcast.lane.b32.xlu0 %v1589, %s1626
    %v1628 = vpop.permute.xlu0 %1627
    %s1630 = sor.u32 256, 80
    %1631 = vbcast.lane.b32.xlu0 %v1589, %s1630
    %v1632 = vpop.permute.xlu0 %1631
    %s1634 = sor.u32 256, 88
    %1635 = vbcast.lane.b32.xlu0 %v1589, %s1634
    %v1636 = vpop.permute.xlu0 %1635
    %s1638 = sor.u32 256, 96
    %1639 = vbcast.lane.b32.xlu0 %v1589, %s1638
    %v1640 = vpop.permute.xlu0 %1639
    %s1642 = sor.u32 256, 104
    %1643 = vbcast.lane.b32.xlu0 %v1589, %s1642
    %v1644 = vpop.permute.xlu0 %1643
    %s1646 = sor.u32 256, 112
    %1647 = vbcast.lane.b32.xlu0 %v1589, %s1646
    %v1648 = vpop.permute.xlu0 %1647
    %s1650 = sor.u32 256, 120
    %1651 = vbcast.lane.b32.xlu0 %v1589, %s1650
    %v1652 = vpop.permute.xlu0 %1651
    %vm1653 = vcmask 7168
    %v1654 = vsel %vm1653, %v51, %v587
    %v1655 = vsel %vm1653, %v55, %v591
    %v1656 = vsel %vm1653, %v59, %v595
    %v1657 = vsel %vm1653, %v63, %v599
    %v1658 = vsel %vm1653, %v67, %v603
    %v1659 = vsel %vm1653, %v71, %v607
    %v1660 = vsel %vm1653, %v75, %v611
    %v1661 = vsel %vm1653, %v79, %v615
    %v1662 = vsel %vm1653, %v83, %v619
    %v1663 = vsel %vm1653, %v87, %v623
    %v1664 = vsel %vm1653, %v91, %v627
    %v1665 = vsel %vm1653, %v95, %v631
    %v1666 = vsel %vm1653, %v99, %v635
    %v1667 = vsel %vm1653, %v103, %v639
    %v1668 = vsel %vm1653, %v107, %v643
    %v1669 = vsel %vm1653, %v111, %v647
    %v1670 = vsel %vm1653, %v118, %v654
    %v1671 = vsel %vm1653, %v122, %v658
    %v1672 = vsel %vm1653, %v126, %v662
    %v1673 = vsel %vm1653, %v130, %v666
    %v1674 = vsel %vm1653, %v134, %v670
    %v1675 = vsel %vm1653, %v138, %v674
    %v1676 = vsel %vm1653, %v142, %v678
    %v1677 = vsel %vm1653, %v146, %v682
    %v1678 = vsel %vm1653, %v150, %v686
    %v1679 = vsel %vm1653, %v154, %v690
    %v1680 = vsel %vm1653, %v158, %v694
    %v1681 = vsel %vm1653, %v162, %v698
    %v1682 = vsel %vm1653, %v166, %v702
    %v1683 = vsel %vm1653, %v170, %v706
    %v1684 = vsel %vm1653, %v174, %v710
    %v1685 = vsel %vm1653, %v178, %v714
    %v1686 = vsel %vm1653, %v185, %v721
    %v1687 = vsel %vm1653, %v189, %v725
    %v1688 = vsel %vm1653, %v193, %v729
    %v1689 = vsel %vm1653, %v197, %v733
    %v1690 = vsel %vm1653, %v201, %v737
    %v1691 = vsel %vm1653, %v205, %v741
    %v1692 = vsel %vm1653, %v209, %v745
    %v1693 = vsel %vm1653, %v213, %v749
    %v1694 = vsel %vm1653, %v217, %v753
    %v1695 = vsel %vm1653, %v221, %v757
    %v1696 = vsel %vm1653, %v225, %v761
    %v1697 = vsel %vm1653, %v229, %v765
    %v1698 = vsel %vm1653, %v233, %v769
    %v1699 = vsel %vm1653, %v237, %v773
    %v1700 = vsel %vm1653, %v241, %v777
    %v1701 = vsel %vm1653, %v245, %v781
    %v1702 = vsel %vm1653, %v252, %v788
    %v1703 = vsel %vm1653, %v256, %v792
    %v1704 = vsel %vm1653, %v260, %v796
    %v1705 = vsel %vm1653, %v264, %v800
    %v1706 = vsel %vm1653, %v268, %v804
    %v1707 = vsel %vm1653, %v272, %v808
    %v1708 = vsel %vm1653, %v276, %v812
    %v1709 = vsel %vm1653, %v280, %v816
    %v1710 = vsel %vm1653, %v284, %v820
    %v1711 = vsel %vm1653, %v288, %v824
    %v1712 = vsel %vm1653, %v292, %v828
    %v1713 = vsel %vm1653, %v296, %v832
    %v1714 = vsel %vm1653, %v300, %v836
    %v1715 = vsel %vm1653, %v304, %v840
    %v1716 = vsel %vm1653, %v308, %v844
    %v1717 = vsel %vm1653, %v312, %v848
    %v1718 = vsel %vm1653, %v319, %v855
    %v1719 = vsel %vm1653, %v323, %v859
    %v1720 = vsel %vm1653, %v327, %v863
    %v1721 = vsel %vm1653, %v331, %v867
    %v1722 = vsel %vm1653, %v335, %v871
    %v1723 = vsel %vm1653, %v339, %v875
    %v1724 = vsel %vm1653, %v343, %v879
    %v1725 = vsel %vm1653, %v347, %v883
    %v1726 = vsel %vm1653, %v351, %v887
    %v1727 = vsel %vm1653, %v355, %v891
    %v1728 = vsel %vm1653, %v359, %v895
    %v1729 = vsel %vm1653, %v363, %v899
    %v1730 = vsel %vm1653, %v367, %v903
    %v1731 = vsel %vm1653, %v371, %v907
    %v1732 = vsel %vm1653, %v375, %v911
    %v1733 = vsel %vm1653, %v379, %v915
    %v1734 = vsel %vm1653, %v386, %v922
    %v1735 = vsel %vm1653, %v390, %v926
    %v1736 = vsel %vm1653, %v394, %v930
    %v1737 = vsel %vm1653, %v398, %v934
    %v1738 = vsel %vm1653, %v402, %v938
    %v1739 = vsel %vm1653, %v406, %v942
    %v1740 = vsel %vm1653, %v410, %v946
    %v1741 = vsel %vm1653, %v414, %v950
    %v1742 = vsel %vm1653, %v418, %v954
    %v1743 = vsel %vm1653, %v422, %v958
    %v1744 = vsel %vm1653, %v426, %v962
    %v1745 = vsel %vm1653, %v430, %v966
    %v1746 = vsel %vm1653, %v434, %v970
    %v1747 = vsel %vm1653, %v438, %v974
    %v1748 = vsel %vm1653, %v442, %v978
    %v1749 = vsel %vm1653, %v446, %v982
    %v1750 = vsel %vm1653, %v453, %v989
    %v1751 = vsel %vm1653, %v457, %v993
    %v1752 = vsel %vm1653, %v461, %v997
    %v1753 = vsel %vm1653, %v465, %v1001
    %v1754 = vsel %vm1653, %v469, %v1005
    %v1755 = vsel %vm1653, %v473, %v1009
    %v1756 = vsel %vm1653, %v477, %v1013
    %v1757 = vsel %vm1653, %v481, %v1017
    %v1758 = vsel %vm1653, %v485, %v1021
    %v1759 = vsel %vm1653, %v489, %v1025
    %v1760 = vsel %vm1653, %v493, %v1029
    %v1761 = vsel %vm1653, %v497, %v1033
    %v1762 = vsel %vm1653, %v501, %v1037
    %v1763 = vsel %vm1653, %v505, %v1041
    %v1764 = vsel %vm1653, %v509, %v1045
    %v1765 = vsel %vm1653, %v513, %v1049
    %v1766 = vsel %vm1653, %v520, %v1056
    %v1767 = vsel %vm1653, %v524, %v1060
    %v1768 = vsel %vm1653, %v528, %v1064
    %v1769 = vsel %vm1653, %v532, %v1068
    %v1770 = vsel %vm1653, %v536, %v1072
    %v1771 = vsel %vm1653, %v540, %v1076
    %v1772 = vsel %vm1653, %v544, %v1080
    %v1773 = vsel %vm1653, %v548, %v1084
    %v1774 = vsel %vm1653, %v552, %v1088
    %v1775 = vsel %vm1653, %v556, %v1092
    %v1776 = vsel %vm1653, %v560, %v1096
    %v1777 = vsel %vm1653, %v564, %v1100
    %v1778 = vsel %vm1653, %v568, %v1104
    %v1779 = vsel %vm1653, %v572, %v1108
    %v1780 = vsel %vm1653, %v576, %v1112
    %v1781 = vsel %vm1653, %v580, %v1116
    %vm1782 = vcmask 15360
    %v1783 = vsel %vm1782, %v1654, %v1123
    %v1784 = vsel %vm1782, %v1655, %v1127
    %v1785 = vsel %vm1782, %v1656, %v1131
    %v1786 = vsel %vm1782, %v1657, %v1135
    %v1787 = vsel %vm1782, %v1658, %v1139
    %v1788 = vsel %vm1782, %v1659, %v1143
    %v1789 = vsel %vm1782, %v1660, %v1147
    %v1790 = vsel %vm1782, %v1661, %v1151
    %v1791 = vsel %vm1782, %v1662, %v1155
    %v1792 = vsel %vm1782, %v1663, %v1159
    %v1793 = vsel %vm1782, %v1664, %v1163
    %v1794 = vsel %vm1782, %v1665, %v1167
    %v1795 = vsel %vm1782, %v1666, %v1171
    %v1796 = vsel %vm1782, %v1667, %v1175
    %v1797 = vsel %vm1782, %v1668, %v1179
    %v1798 = vsel %vm1782, %v1669, %v1183
    %v1799 = vsel %vm1782, %v1670, %v1190
    %v1800 = vsel %vm1782, %v1671, %v1194
    %v1801 = vsel %vm1782, %v1672, %v1198
    %v1802 = vsel %vm1782, %v1673, %v1202
    %v1803 = vsel %vm1782, %v1674, %v1206
    %v1804 = vsel %vm1782, %v1675, %v1210
    %v1805 = vsel %vm1782, %v1676, %v1214
    %v1806 = vsel %vm1782, %v1677, %v1218
    %v1807 = vsel %vm1782, %v1678, %v1222
    %v1808 = vsel %vm1782, %v1679, %v1226
    %v1809 = vsel %vm1782, %v1680, %v1230
    %v1810 = vsel %vm1782, %v1681, %v1234
    %v1811 = vsel %vm1782, %v1682, %v1238
    %v1812 = vsel %vm1782, %v1683, %v1242
    %v1813 = vsel %vm1782, %v1684, %v1246
    %v1814 = vsel %vm1782, %v1685, %v1250
    %v1815 = vsel %vm1782, %v1686, %v1257
    %v1816 = vsel %vm1782, %v1687, %v1261
    %v1817 = vsel %vm1782, %v1688, %v1265
    %v1818 = vsel %vm1782, %v1689, %v1269
    %v1819 = vsel %vm1782, %v1690, %v1273
    %v1820 = vsel %vm1782, %v1691, %v1277
    %v1821 = vsel %vm1782, %v1692, %v1281
    %v1822 = vsel %vm1782, %v1693, %v1285
    %v1823 = vsel %vm1782, %v1694, %v1289
    %v1824 = vsel %vm1782, %v1695, %v1293
    %v1825 = vsel %vm1782, %v1696, %v1297
    %v1826 = vsel %vm1782, %v1697, %v1301
    %v1827 = vsel %vm1782, %v1698, %v1305
    %v1828 = vsel %vm1782, %v1699, %v1309
    %v1829 = vsel %vm1782, %v1700, %v1313
    %v1830 = vsel %vm1782, %v1701, %v1317
    %v1831 = vsel %vm1782, %v1702, %v1324
    %v1832 = vsel %vm1782, %v1703, %v1328
    %v1833 = vsel %vm1782, %v1704, %v1332
    %v1834 = vsel %vm1782, %v1705, %v1336
    %v1835 = vsel %vm1782, %v1706, %v1340
    %v1836 = vsel %vm1782, %v1707, %v1344
    %v1837 = vsel %vm1782, %v1708, %v1348
    %v1838 = vsel %vm1782, %v1709, %v1352
    %v1839 = vsel %vm1782, %v1710, %v1356
    %v1840 = vsel %vm1782, %v1711, %v1360
    %v1841 = vsel %vm1782, %v1712, %v1364
    %v1842 = vsel %vm1782, %v1713, %v1368
    %v1843 = vsel %vm1782, %v1714, %v1372
    %v1844 = vsel %vm1782, %v1715, %v1376
    %v1845 = vsel %vm1782, %v1716, %v1380
    %v1846 = vsel %vm1782, %v1717, %v1384
    %v1847 = vsel %vm1782, %v1718, %v1391
    %v1848 = vsel %vm1782, %v1719, %v1395
    %v1849 = vsel %vm1782, %v1720, %v1399
    %v1850 = vsel %vm1782, %v1721, %v1403
    %v1851 = vsel %vm1782, %v1722, %v1407
    %v1852 = vsel %vm1782, %v1723, %v1411
    %v1853 = vsel %vm1782, %v1724, %v1415
    %v1854 = vsel %vm1782, %v1725, %v1419
    %v1855 = vsel %vm1782, %v1726, %v1423
    %v1856 = vsel %vm1782, %v1727, %v1427
    %v1857 = vsel %vm1782, %v1728, %v1431
    %v1858 = vsel %vm1782, %v1729, %v1435
    %v1859 = vsel %vm1782, %v1730, %v1439
    %v1860 = vsel %vm1782, %v1731, %v1443
    %v1861 = vsel %vm1782, %v1732, %v1447
    %v1862 = vsel %vm1782, %v1733, %v1451
    %v1863 = vsel %vm1782, %v1734, %v1458
    %v1864 = vsel %vm1782, %v1735, %v1462
    %v1865 = vsel %vm1782, %v1736, %v1466
    %v1866 = vsel %vm1782, %v1737, %v1470
    %v1867 = vsel %vm1782, %v1738, %v1474
    %v1868 = vsel %vm1782, %v1739, %v1478
    %v1869 = vsel %vm1782, %v1740, %v1482
    %v1870 = vsel %vm1782, %v1741, %v1486
    %v1871 = vsel %vm1782, %v1742, %v1490
    %v1872 = vsel %vm1782, %v1743, %v1494
    %v1873 = vsel %vm1782, %v1744, %v1498
    %v1874 = vsel %vm1782, %v1745, %v1502
    %v1875 = vsel %vm1782, %v1746, %v1506
    %v1876 = vsel %vm1782, %v1747, %v1510
    %v1877 = vsel %vm1782, %v1748, %v1514
    %v1878 = vsel %vm1782, %v1749, %v1518
    %v1879 = vsel %vm1782, %v1750, %v1525
    %v1880 = vsel %vm1782, %v1751, %v1529
    %v1881 = vsel %vm1782, %v1752, %v1533
    %v1882 = vsel %vm1782, %v1753, %v1537
    %v1883 = vsel %vm1782, %v1754, %v1541
    %v1884 = vsel %vm1782, %v1755, %v1545
    %v1885 = vsel %vm1782, %v1756, %v1549
    %v1886 = vsel %vm1782, %v1757, %v1553
    %v1887 = vsel %vm1782, %v1758, %v1557
    %v1888 = vsel %vm1782, %v1759, %v1561
    %v1889 = vsel %vm1782, %v1760, %v1565
    %v1890 = vsel %vm1782, %v1761, %v1569
    %v1891 = vsel %vm1782, %v1762, %v1573
    %v1892 = vsel %vm1782, %v1763, %v1577
    %v1893 = vsel %vm1782, %v1764, %v1581
    %v1894 = vsel %vm1782, %v1765, %v1585
    %v1895 = vsel %vm1782, %v1766, %v1592
    %v1896 = vsel %vm1782, %v1767, %v1596
    %v1897 = vsel %vm1782, %v1768, %v1600
    %v1898 = vsel %vm1782, %v1769, %v1604
    %v1899 = vsel %vm1782, %v1770, %v1608
    %v1900 = vsel %vm1782, %v1771, %v1612
    %v1901 = vsel %vm1782, %v1772, %v1616
    %v1902 = vsel %vm1782, %v1773, %v1620
    %v1903 = vsel %vm1782, %v1774, %v1624
    %v1904 = vsel %vm1782, %v1775, %v1628
    %v1905 = vsel %vm1782, %v1776, %v1632
    %v1906 = vsel %vm1782, %v1777, %v1636
    %v1907 = vsel %vm1782, %v1778, %v1640
    %v1908 = vsel %vm1782, %v1779, %v1644
    %v1909 = vsel %vm1782, %v1780, %v1648
    %v1910 = vsel %vm1782, %v1781, %v1652
    %v1911 = vcombine.low %v1783, %v1815
    %v1912 = vcombine.high %v1783, %v1815
    %v1914 = vunpack.c.l.s4 1983009808
    %v1915 = vunpack.c.0.s8 %v1914
    %v1916 = vlaneseq
    %v1917 = vshrl.u32 %v1916, 7
    %v1918 = vsub.s32 %v1915, %v1917
    %v1919 = vrot.slane %v1911, %v1918
    %v1921 = vunpack.c.l.s4 1983009808
    %v1922 = vunpack.c.0.s8 %v1921
    %v1923 = vlaneseq
    %v1924 = vshrl.u32 %v1923, 7
    %v1925 = vsub.s32 %v1922, %v1924
    %v1926 = vrot.slane %v1912, %v1925
    %v1927 = vcombine.low %v1799, %v1831
    %v1928 = vcombine.high %v1799, %v1831
    %v1930 = vunpack.c.l.s4 1983009808
    %v1931 = vunpack.c.0.s8 %v1930
    %v1932 = vlaneseq
    %v1933 = vshrl.u32 %v1932, 7
    %v1934 = vsub.s32 %v1931, %v1933
    %v1935 = vrot.slane %v1927, %v1934
    %v1937 = vunpack.c.l.s4 1983009808
    %v1938 = vunpack.c.0.s8 %v1937
    %v1939 = vlaneseq
    %v1940 = vshrl.u32 %v1939, 7
    %v1941 = vsub.s32 %v1938, %v1940
    %v1942 = vrot.slane %v1928, %v1941
    %v1943 = vcombine.low %v1847, %v1879
    %v1944 = vcombine.high %v1847, %v1879
    %v1946 = vunpack.c.l.s4 1983009808
    %v1947 = vunpack.c.0.s8 %v1946
    %v1948 = vlaneseq
    %v1949 = vshrl.u32 %v1948, 7
    %v1950 = vsub.s32 %v1947, %v1949
    %v1951 = vrot.slane %v1943, %v1950
    %v1953 = vunpack.c.l.s4 1983009808
    %v1954 = vunpack.c.0.s8 %v1953
    %v1955 = vlaneseq
    %v1956 = vshrl.u32 %v1955, 7
    %v1957 = vsub.s32 %v1954, %v1956
    %v1958 = vrot.slane %v1944, %v1957
    %v1959 = vcombine.low %v1863, %v1895
    %v1960 = vcombine.high %v1863, %v1895
    %v1962 = vunpack.c.l.s4 1983009808
    %v1963 = vunpack.c.0.s8 %v1962
    %v1964 = vlaneseq
    %v1965 = vshrl.u32 %v1964, 7
    %v1966 = vsub.s32 %v1963, %v1965
    %v1967 = vrot.slane %v1959, %v1966
    %v1969 = vunpack.c.l.s4 1983009808
    %v1970 = vunpack.c.0.s8 %v1969
    %v1971 = vlaneseq
    %v1972 = vshrl.u32 %v1971, 7
    %v1973 = vsub.s32 %v1970, %v1972
    %v1974 = vrot.slane %v1960, %v1973
    %v1975 = vcombine.low %v1919, %v1935
    %v1976 = vcombine.high %v1919, %v1935
    %v1978 = vunpack.c.l.s4 1934713408
    %v1979 = vunpack.c.0.s8 %v1978
    %v1980 = vlaneseq
    %v1981 = vshrl.u32 %v1980, 7
    %v1982 = vsub.s32 %v1979, %v1981
    %v1983 = vrot.slane %v1975, %v1982
    %v1985 = vunpack.c.l.s4 1934713408
    %v1986 = vunpack.c.0.s8 %v1985
    %v1987 = vlaneseq
    %v1988 = vshrl.u32 %v1987, 7
    %v1989 = vsub.s32 %v1986, %v1988
    %v1990 = vrot.slane %v1976, %v1989
    %v1991 = vcombine.low %v1926, %v1942
    %v1992 = vcombine.high %v1926, %v1942
    %v1994 = vunpack.c.l.s4 1934713408
    %v1995 = vunpack.c.0.s8 %v1994
    %v1996 = vlaneseq
    %v1997 = vshrl.u32 %v1996, 7
    %v1998 = vsub.s32 %v1995, %v1997
    %v1999 = vrot.slane %v1991, %v1998
    %v2001 = vunpack.c.l.s4 1934713408
    %v2002 = vunpack.c.0.s8 %v2001
    %v2003 = vlaneseq
    %v2004 = vshrl.u32 %v2003, 7
    %v2005 = vsub.s32 %v2002, %v2004
    %v2006 = vrot.slane %v1992, %v2005
    %v2007 = vcombine.low %v1951, %v1967
    %v2008 = vcombine.high %v1951, %v1967
    %v2010 = vunpack.c.l.s4 1934713408
    %v2011 = vunpack.c.0.s8 %v2010
    %v2012 = vlaneseq
    %v2013 = vshrl.u32 %v2012, 7
    %v2014 = vsub.s32 %v2011, %v2013
    %v2015 = vrot.slane %v2007, %v2014
    %v2017 = vunpack.c.l.s4 1934713408
    %v2018 = vunpack.c.0.s8 %v2017
    %v2019 = vlaneseq
    %v2020 = vshrl.u32 %v2019, 7
    %v2021 = vsub.s32 %v2018, %v2020
    %v2022 = vrot.slane %v2008, %v2021
    %v2023 = vcombine.low %v1958, %v1974
    %v2024 = vcombine.high %v1958, %v1974
    %v2026 = vunpack.c.l.s4 1934713408
    %v2027 = vunpack.c.0.s8 %v2026
    %v2028 = vlaneseq
    %v2029 = vshrl.u32 %v2028, 7
    %v2030 = vsub.s32 %v2027, %v2029
    %v2031 = vrot.slane %v2023, %v2030
    %v2033 = vunpack.c.l.s4 1934713408
    %v2034 = vunpack.c.0.s8 %v2033
    %v2035 = vlaneseq
    %v2036 = vshrl.u32 %v2035, 7
    %v2037 = vsub.s32 %v2034, %v2036
    %v2038 = vrot.slane %v2024, %v2037
    %v2039 = vcombine.low %v1983, %v2015
    %v2040 = vcombine.high %v1983, %v2015
    %v2041 = vcombine.low %v1990, %v2022
    %v2042 = vcombine.high %v1990, %v2022
    %v2043 = vcombine.low %v1999, %v2031
    %v2044 = vcombine.high %v1999, %v2031
    %v2045 = vcombine.low %v2006, %v2038
    %v2046 = vcombine.high %v2006, %v2038
    %v2047 = vcombine.low %v1784, %v1816
    %v2048 = vcombine.high %v1784, %v1816
    %v2050 = vunpack.c.l.s4 1983009808
    %v2051 = vunpack.c.0.s8 %v2050
    %v2052 = vlaneseq
    %v2053 = vshrl.u32 %v2052, 7
    %v2054 = vsub.s32 %v2051, %v2053
    %v2055 = vrot.slane %v2047, %v2054
    %v2057 = vunpack.c.l.s4 1983009808
    %v2058 = vunpack.c.0.s8 %v2057
    %v2059 = vlaneseq
    %v2060 = vshrl.u32 %v2059, 7
    %v2061 = vsub.s32 %v2058, %v2060
    %v2062 = vrot.slane %v2048, %v2061
    %v2063 = vcombine.low %v1800, %v1832
    %v2064 = vcombine.high %v1800, %v1832
    %v2066 = vunpack.c.l.s4 1983009808
    %v2067 = vunpack.c.0.s8 %v2066
    %v2068 = vlaneseq
    %v2069 = vshrl.u32 %v2068, 7
    %v2070 = vsub.s32 %v2067, %v2069
    %v2071 = vrot.slane %v2063, %v2070
    %v2073 = vunpack.c.l.s4 1983009808
    %v2074 = vunpack.c.0.s8 %v2073
    %v2075 = vlaneseq
    %v2076 = vshrl.u32 %v2075, 7
    %v2077 = vsub.s32 %v2074, %v2076
    %v2078 = vrot.slane %v2064, %v2077
    %v2079 = vcombine.low %v1848, %v1880
    %v2080 = vcombine.high %v1848, %v1880
    %v2082 = vunpack.c.l.s4 1983009808
    %v2083 = vunpack.c.0.s8 %v2082
    %v2084 = vlaneseq
    %v2085 = vshrl.u32 %v2084, 7
    %v2086 = vsub.s32 %v2083, %v2085
    %v2087 = vrot.slane %v2079, %v2086
    %v2089 = vunpack.c.l.s4 1983009808
    %v2090 = vunpack.c.0.s8 %v2089
    %v2091 = vlaneseq
    %v2092 = vshrl.u32 %v2091, 7
    %v2093 = vsub.s32 %v2090, %v2092
    %v2094 = vrot.slane %v2080, %v2093
    %v2095 = vcombine.low %v1864, %v1896
    %v2096 = vcombine.high %v1864, %v1896
    %v2098 = vunpack.c.l.s4 1983009808
    %v2099 = vunpack.c.0.s8 %v2098
    %v2100 = vlaneseq
    %v2101 = vshrl.u32 %v2100, 7
    %v2102 = vsub.s32 %v2099, %v2101
    %v2103 = vrot.slane %v2095, %v2102
    %v2105 = vunpack.c.l.s4 1983009808
    %v2106 = vunpack.c.0.s8 %v2105
    %v2107 = vlaneseq
    %v2108 = vshrl.u32 %v2107, 7
    %v2109 = vsub.s32 %v2106, %v2108
    %v2110 = vrot.slane %v2096, %v2109
    %v2111 = vcombine.low %v2055, %v2071
    %v2112 = vcombine.high %v2055, %v2071
    %v2114 = vunpack.c.l.s4 1934713408
    %v2115 = vunpack.c.0.s8 %v2114
    %v2116 = vlaneseq
    %v2117 = vshrl.u32 %v2116, 7
    %v2118 = vsub.s32 %v2115, %v2117
    %v2119 = vrot.slane %v2111, %v2118
    %v2121 = vunpack.c.l.s4 1934713408
    %v2122 = vunpack.c.0.s8 %v2121
    %v2123 = vlaneseq
    %v2124 = vshrl.u32 %v2123, 7
    %v2125 = vsub.s32 %v2122, %v2124
    %v2126 = vrot.slane %v2112, %v2125
    %v2127 = vcombine.low %v2062, %v2078
    %v2128 = vcombine.high %v2062, %v2078
    %v2130 = vunpack.c.l.s4 1934713408
    %v2131 = vunpack.c.0.s8 %v2130
    %v2132 = vlaneseq
    %v2133 = vshrl.u32 %v2132, 7
    %v2134 = vsub.s32 %v2131, %v2133
    %v2135 = vrot.slane %v2127, %v2134
    %v2137 = vunpack.c.l.s4 1934713408
    %v2138 = vunpack.c.0.s8 %v2137
    %v2139 = vlaneseq
    %v2140 = vshrl.u32 %v2139, 7
    %v2141 = vsub.s32 %v2138, %v2140
    %v2142 = vrot.slane %v2128, %v2141
    %v2143 = vcombine.low %v2087, %v2103
    %v2144 = vcombine.high %v2087, %v2103
    %v2146 = vunpack.c.l.s4 1934713408
    %v2147 = vunpack.c.0.s8 %v2146
    %v2148 = vlaneseq
    %v2149 = vshrl.u32 %v2148, 7
    %v2150 = vsub.s32 %v2147, %v2149
    %v2151 = vrot.slane %v2143, %v2150
    %v2153 = vunpack.c.l.s4 1934713408
    %v2154 = vunpack.c.0.s8 %v2153
    %v2155 = vlaneseq
    %v2156 = vshrl.u32 %v2155, 7
    %v2157 = vsub.s32 %v2154, %v2156
    %v2158 = vrot.slane %v2144, %v2157
    %v2159 = vcombine.low %v2094, %v2110
    %v2160 = vcombine.high %v2094, %v2110
    %v2162 = vunpack.c.l.s4 1934713408
    %v2163 = vunpack.c.0.s8 %v2162
    %v2164 = vlaneseq
    %v2165 = vshrl.u32 %v2164, 7
    %v2166 = vsub.s32 %v2163, %v2165
    %v2167 = vrot.slane %v2159, %v2166
    %v2169 = vunpack.c.l.s4 1934713408
    %v2170 = vunpack.c.0.s8 %v2169
    %v2171 = vlaneseq
    %v2172 = vshrl.u32 %v2171, 7
    %v2173 = vsub.s32 %v2170, %v2172
    %v2174 = vrot.slane %v2160, %v2173
    %v2175 = vcombine.low %v2119, %v2151
    %v2176 = vcombine.high %v2119, %v2151
    %v2177 = vcombine.low %v2126, %v2158
    %v2178 = vcombine.high %v2126, %v2158
    %v2179 = vcombine.low %v2135, %v2167
    %v2180 = vcombine.high %v2135, %v2167
    %v2181 = vcombine.low %v2142, %v2174
    %v2182 = vcombine.high %v2142, %v2174
    %v2183 = vcombine.low %v1785, %v1817
    %v2184 = vcombine.high %v1785, %v1817
    %v2186 = vunpack.c.l.s4 1983009808
    %v2187 = vunpack.c.0.s8 %v2186
    %v2188 = vlaneseq
    %v2189 = vshrl.u32 %v2188, 7
    %v2190 = vsub.s32 %v2187, %v2189
    %v2191 = vrot.slane %v2183, %v2190
    %v2193 = vunpack.c.l.s4 1983009808
    %v2194 = vunpack.c.0.s8 %v2193
    %v2195 = vlaneseq
    %v2196 = vshrl.u32 %v2195, 7
    %v2197 = vsub.s32 %v2194, %v2196
    %v2198 = vrot.slane %v2184, %v2197
    %v2199 = vcombine.low %v1801, %v1833
    %v2200 = vcombine.high %v1801, %v1833
    %v2202 = vunpack.c.l.s4 1983009808
    %v2203 = vunpack.c.0.s8 %v2202
    %v2204 = vlaneseq
    %v2205 = vshrl.u32 %v2204, 7
    %v2206 = vsub.s32 %v2203, %v2205
    %v2207 = vrot.slane %v2199, %v2206
    %v2209 = vunpack.c.l.s4 1983009808
    %v2210 = vunpack.c.0.s8 %v2209
    %v2211 = vlaneseq
    %v2212 = vshrl.u32 %v2211, 7
    %v2213 = vsub.s32 %v2210, %v2212
    %v2214 = vrot.slane %v2200, %v2213
    %v2215 = vcombine.low %v1849, %v1881
    %v2216 = vcombine.high %v1849, %v1881
    %v2218 = vunpack.c.l.s4 1983009808
    %v2219 = vunpack.c.0.s8 %v2218
    %v2220 = vlaneseq
    %v2221 = vshrl.u32 %v2220, 7
    %v2222 = vsub.s32 %v2219, %v2221
    %v2223 = vrot.slane %v2215, %v2222
    %v2225 = vunpack.c.l.s4 1983009808
    %v2226 = vunpack.c.0.s8 %v2225
    %v2227 = vlaneseq
    %v2228 = vshrl.u32 %v2227, 7
    %v2229 = vsub.s32 %v2226, %v2228
    %v2230 = vrot.slane %v2216, %v2229
    %v2231 = vcombine.low %v1865, %v1897
    %v2232 = vcombine.high %v1865, %v1897
    %v2234 = vunpack.c.l.s4 1983009808
    %v2235 = vunpack.c.0.s8 %v2234
    %v2236 = vlaneseq
    %v2237 = vshrl.u32 %v2236, 7
    %v2238 = vsub.s32 %v2235, %v2237
    %v2239 = vrot.slane %v2231, %v2238
    %v2241 = vunpack.c.l.s4 1983009808
    %v2242 = vunpack.c.0.s8 %v2241
    %v2243 = vlaneseq
    %v2244 = vshrl.u32 %v2243, 7
    %v2245 = vsub.s32 %v2242, %v2244
    %v2246 = vrot.slane %v2232, %v2245
    %v2247 = vcombine.low %v2191, %v2207
    %v2248 = vcombine.high %v2191, %v2207
    %v2250 = vunpack.c.l.s4 1934713408
    %v2251 = vunpack.c.0.s8 %v2250
    %v2252 = vlaneseq
    %v2253 = vshrl.u32 %v2252, 7
    %v2254 = vsub.s32 %v2251, %v2253
    %v2255 = vrot.slane %v2247, %v2254
    %v2257 = vunpack.c.l.s4 1934713408
    %v2258 = vunpack.c.0.s8 %v2257
    %v2259 = vlaneseq
    %v2260 = vshrl.u32 %v2259, 7
    %v2261 = vsub.s32 %v2258, %v2260
    %v2262 = vrot.slane %v2248, %v2261
    %v2263 = vcombine.low %v2198, %v2214
    %v2264 = vcombine.high %v2198, %v2214
    %v2266 = vunpack.c.l.s4 1934713408
    %v2267 = vunpack.c.0.s8 %v2266
    %v2268 = vlaneseq
    %v2269 = vshrl.u32 %v2268, 7
    %v2270 = vsub.s32 %v2267, %v2269
    %v2271 = vrot.slane %v2263, %v2270
    %v2273 = vunpack.c.l.s4 1934713408
    %v2274 = vunpack.c.0.s8 %v2273
    %v2275 = vlaneseq
    %v2276 = vshrl.u32 %v2275, 7
    %v2277 = vsub.s32 %v2274, %v2276
    %v2278 = vrot.slane %v2264, %v2277
    %v2279 = vcombine.low %v2223, %v2239
    %v2280 = vcombine.high %v2223, %v2239
    %v2282 = vunpack.c.l.s4 1934713408
    %v2283 = vunpack.c.0.s8 %v2282
    %v2284 = vlaneseq
    %v2285 = vshrl.u32 %v2284, 7
    %v2286 = vsub.s32 %v2283, %v2285
    %v2287 = vrot.slane %v2279, %v2286
    %v2289 = vunpack.c.l.s4 1934713408
    %v2290 = vunpack.c.0.s8 %v2289
    %v2291 = vlaneseq
    %v2292 = vshrl.u32 %v2291, 7
    %v2293 = vsub.s32 %v2290, %v2292
    %v2294 = vrot.slane %v2280, %v2293
    %v2295 = vcombine.low %v2230, %v2246
    %v2296 = vcombine.high %v2230, %v2246
    %v2298 = vunpack.c.l.s4 1934713408
    %v2299 = vunpack.c.0.s8 %v2298
    %v2300 = vlaneseq
    %v2301 = vshrl.u32 %v2300, 7
    %v2302 = vsub.s32 %v2299, %v2301
    %v2303 = vrot.slane %v2295, %v2302
    %v2305 = vunpack.c.l.s4 1934713408
    %v2306 = vunpack.c.0.s8 %v2305
    %v2307 = vlaneseq
    %v2308 = vshrl.u32 %v2307, 7
    %v2309 = vsub.s32 %v2306, %v2308
    %v2310 = vrot.slane %v2296, %v2309
    %v2311 = vcombine.low %v2255, %v2287
    %v2312 = vcombine.high %v2255, %v2287
    %v2313 = vcombine.low %v2262, %v2294
    %v2314 = vcombine.high %v2262, %v2294
    %v2315 = vcombine.low %v2271, %v2303
    %v2316 = vcombine.high %v2271, %v2303
    %v2317 = vcombine.low %v2278, %v2310
    %v2318 = vcombine.high %v2278, %v2310
    %v2319 = vcombine.low %v1786, %v1818
    %v2320 = vcombine.high %v1786, %v1818
    %v2322 = vunpack.c.l.s4 1983009808
    %v2323 = vunpack.c.0.s8 %v2322
    %v2324 = vlaneseq
    %v2325 = vshrl.u32 %v2324, 7
    %v2326 = vsub.s32 %v2323, %v2325
    %v2327 = vrot.slane %v2319, %v2326
    %v2329 = vunpack.c.l.s4 1983009808
    %v2330 = vunpack.c.0.s8 %v2329
    %v2331 = vlaneseq
    %v2332 = vshrl.u32 %v2331, 7
    %v2333 = vsub.s32 %v2330, %v2332
    %v2334 = vrot.slane %v2320, %v2333
    %v2335 = vcombine.low %v1802, %v1834
    %v2336 = vcombine.high %v1802, %v1834
    %v2338 = vunpack.c.l.s4 1983009808
    %v2339 = vunpack.c.0.s8 %v2338
    %v2340 = vlaneseq
    %v2341 = vshrl.u32 %v2340, 7
    %v2342 = vsub.s32 %v2339, %v2341
    %v2343 = vrot.slane %v2335, %v2342
    %v2345 = vunpack.c.l.s4 1983009808
    %v2346 = vunpack.c.0.s8 %v2345
    %v2347 = vlaneseq
    %v2348 = vshrl.u32 %v2347, 7
    %v2349 = vsub.s32 %v2346, %v2348
    %v2350 = vrot.slane %v2336, %v2349
    %v2351 = vcombine.low %v1850, %v1882
    %v2352 = vcombine.high %v1850, %v1882
    %v2354 = vunpack.c.l.s4 1983009808
    %v2355 = vunpack.c.0.s8 %v2354
    %v2356 = vlaneseq
    %v2357 = vshrl.u32 %v2356, 7
    %v2358 = vsub.s32 %v2355, %v2357
    %v2359 = vrot.slane %v2351, %v2358
    %v2361 = vunpack.c.l.s4 1983009808
    %v2362 = vunpack.c.0.s8 %v2361
    %v2363 = vlaneseq
    %v2364 = vshrl.u32 %v2363, 7
    %v2365 = vsub.s32 %v2362, %v2364
    %v2366 = vrot.slane %v2352, %v2365
    %v2367 = vcombine.low %v1866, %v1898
    %v2368 = vcombine.high %v1866, %v1898
    %v2370 = vunpack.c.l.s4 1983009808
    %v2371 = vunpack.c.0.s8 %v2370
    %v2372 = vlaneseq
    %v2373 = vshrl.u32 %v2372, 7
    %v2374 = vsub.s32 %v2371, %v2373
    %v2375 = vrot.slane %v2367, %v2374
    %v2377 = vunpack.c.l.s4 1983009808
    %v2378 = vunpack.c.0.s8 %v2377
    %v2379 = vlaneseq
    %v2380 = vshrl.u32 %v2379, 7
    %v2381 = vsub.s32 %v2378, %v2380
    %v2382 = vrot.slane %v2368, %v2381
    %v2383 = vcombine.low %v2327, %v2343
    %v2384 = vcombine.high %v2327, %v2343
    %v2386 = vunpack.c.l.s4 1934713408
    %v2387 = vunpack.c.0.s8 %v2386
    %v2388 = vlaneseq
    %v2389 = vshrl.u32 %v2388, 7
    %v2390 = vsub.s32 %v2387, %v2389
    %v2391 = vrot.slane %v2383, %v2390
    %v2393 = vunpack.c.l.s4 1934713408
    %v2394 = vunpack.c.0.s8 %v2393
    %v2395 = vlaneseq
    %v2396 = vshrl.u32 %v2395, 7
    %v2397 = vsub.s32 %v2394, %v2396
    %v2398 = vrot.slane %v2384, %v2397
    %v2399 = vcombine.low %v2334, %v2350
    %v2400 = vcombine.high %v2334, %v2350
    %v2402 = vunpack.c.l.s4 1934713408
    %v2403 = vunpack.c.0.s8 %v2402
    %v2404 = vlaneseq
    %v2405 = vshrl.u32 %v2404, 7
    %v2406 = vsub.s32 %v2403, %v2405
    %v2407 = vrot.slane %v2399, %v2406
    %v2409 = vunpack.c.l.s4 1934713408
    %v2410 = vunpack.c.0.s8 %v2409
    %v2411 = vlaneseq
    %v2412 = vshrl.u32 %v2411, 7
    %v2413 = vsub.s32 %v2410, %v2412
    %v2414 = vrot.slane %v2400, %v2413
    %v2415 = vcombine.low %v2359, %v2375
    %v2416 = vcombine.high %v2359, %v2375
    %v2418 = vunpack.c.l.s4 1934713408
    %v2419 = vunpack.c.0.s8 %v2418
    %v2420 = vlaneseq
    %v2421 = vshrl.u32 %v2420, 7
    %v2422 = vsub.s32 %v2419, %v2421
    %v2423 = vrot.slane %v2415, %v2422
    %v2425 = vunpack.c.l.s4 1934713408
    %v2426 = vunpack.c.0.s8 %v2425
    %v2427 = vlaneseq
    %v2428 = vshrl.u32 %v2427, 7
    %v2429 = vsub.s32 %v2426, %v2428
    %v2430 = vrot.slane %v2416, %v2429
    %v2431 = vcombine.low %v2366, %v2382
    %v2432 = vcombine.high %v2366, %v2382
    %v2434 = vunpack.c.l.s4 1934713408
    %v2435 = vunpack.c.0.s8 %v2434
    %v2436 = vlaneseq
    %v2437 = vshrl.u32 %v2436, 7
    %v2438 = vsub.s32 %v2435, %v2437
    %v2439 = vrot.slane %v2431, %v2438
    %v2441 = vunpack.c.l.s4 1934713408
    %v2442 = vunpack.c.0.s8 %v2441
    %v2443 = vlaneseq
    %v2444 = vshrl.u32 %v2443, 7
    %v2445 = vsub.s32 %v2442, %v2444
    %v2446 = vrot.slane %v2432, %v2445
    %v2447 = vcombine.low %v2391, %v2423
    %v2448 = vcombine.high %v2391, %v2423
    %v2449 = vcombine.low %v2398, %v2430
    %v2450 = vcombine.high %v2398, %v2430
    %v2451 = vcombine.low %v2407, %v2439
    %v2452 = vcombine.high %v2407, %v2439
    %v2453 = vcombine.low %v2414, %v2446
    %v2454 = vcombine.high %v2414, %v2446
    %v2455 = vcombine.low %v1787, %v1819
    %v2456 = vcombine.high %v1787, %v1819
    %v2458 = vunpack.c.l.s4 1983009808
    %v2459 = vunpack.c.0.s8 %v2458
    %v2460 = vlaneseq
    %v2461 = vshrl.u32 %v2460, 7
    %v2462 = vsub.s32 %v2459, %v2461
    %v2463 = vrot.slane %v2455, %v2462
    %v2465 = vunpack.c.l.s4 1983009808
    %v2466 = vunpack.c.0.s8 %v2465
    %v2467 = vlaneseq
    %v2468 = vshrl.u32 %v2467, 7
    %v2469 = vsub.s32 %v2466, %v2468
    %v2470 = vrot.slane %v2456, %v2469
    %v2471 = vcombine.low %v1803, %v1835
    %v2472 = vcombine.high %v1803, %v1835
    %v2474 = vunpack.c.l.s4 1983009808
    %v2475 = vunpack.c.0.s8 %v2474
    %v2476 = vlaneseq
    %v2477 = vshrl.u32 %v2476, 7
    %v2478 = vsub.s32 %v2475, %v2477
    %v2479 = vrot.slane %v2471, %v2478
    %v2481 = vunpack.c.l.s4 1983009808
    %v2482 = vunpack.c.0.s8 %v2481
    %v2483 = vlaneseq
    %v2484 = vshrl.u32 %v2483, 7
    %v2485 = vsub.s32 %v2482, %v2484
    %v2486 = vrot.slane %v2472, %v2485
    %v2487 = vcombine.low %v1851, %v1883
    %v2488 = vcombine.high %v1851, %v1883
    %v2490 = vunpack.c.l.s4 1983009808
    %v2491 = vunpack.c.0.s8 %v2490
    %v2492 = vlaneseq
    %v2493 = vshrl.u32 %v2492, 7
    %v2494 = vsub.s32 %v2491, %v2493
    %v2495 = vrot.slane %v2487, %v2494
    %v2497 = vunpack.c.l.s4 1983009808
    %v2498 = vunpack.c.0.s8 %v2497
    %v2499 = vlaneseq
    %v2500 = vshrl.u32 %v2499, 7
    %v2501 = vsub.s32 %v2498, %v2500
    %v2502 = vrot.slane %v2488, %v2501
    %v2503 = vcombine.low %v1867, %v1899
    %v2504 = vcombine.high %v1867, %v1899
    %v2506 = vunpack.c.l.s4 1983009808
    %v2507 = vunpack.c.0.s8 %v2506
    %v2508 = vlaneseq
    %v2509 = vshrl.u32 %v2508, 7
    %v2510 = vsub.s32 %v2507, %v2509
    %v2511 = vrot.slane %v2503, %v2510
    %v2513 = vunpack.c.l.s4 1983009808
    %v2514 = vunpack.c.0.s8 %v2513
    %v2515 = vlaneseq
    %v2516 = vshrl.u32 %v2515, 7
    %v2517 = vsub.s32 %v2514, %v2516
    %v2518 = vrot.slane %v2504, %v2517
    %v2519 = vcombine.low %v2463, %v2479
    %v2520 = vcombine.high %v2463, %v2479
    %v2522 = vunpack.c.l.s4 1934713408
    %v2523 = vunpack.c.0.s8 %v2522
    %v2524 = vlaneseq
    %v2525 = vshrl.u32 %v2524, 7
    %v2526 = vsub.s32 %v2523, %v2525
    %v2527 = vrot.slane %v2519, %v2526
    %v2529 = vunpack.c.l.s4 1934713408
    %v2530 = vunpack.c.0.s8 %v2529
    %v2531 = vlaneseq
    %v2532 = vshrl.u32 %v2531, 7
    %v2533 = vsub.s32 %v2530, %v2532
    %v2534 = vrot.slane %v2520, %v2533
    %v2535 = vcombine.low %v2470, %v2486
    %v2536 = vcombine.high %v2470, %v2486
    %v2538 = vunpack.c.l.s4 1934713408
    %v2539 = vunpack.c.0.s8 %v2538
    %v2540 = vlaneseq
    %v2541 = vshrl.u32 %v2540, 7
    %v2542 = vsub.s32 %v2539, %v2541
    %v2543 = vrot.slane %v2535, %v2542
    %v2545 = vunpack.c.l.s4 1934713408
    %v2546 = vunpack.c.0.s8 %v2545
    %v2547 = vlaneseq
    %v2548 = vshrl.u32 %v2547, 7
    %v2549 = vsub.s32 %v2546, %v2548
    %v2550 = vrot.slane %v2536, %v2549
    %v2551 = vcombine.low %v2495, %v2511
    %v2552 = vcombine.high %v2495, %v2511
    %v2554 = vunpack.c.l.s4 1934713408
    %v2555 = vunpack.c.0.s8 %v2554
    %v2556 = vlaneseq
    %v2557 = vshrl.u32 %v2556, 7
    %v2558 = vsub.s32 %v2555, %v2557
    %v2559 = vrot.slane %v2551, %v2558
    %v2561 = vunpack.c.l.s4 1934713408
    %v2562 = vunpack.c.0.s8 %v2561
    %v2563 = vlaneseq
    %v2564 = vshrl.u32 %v2563, 7
    %v2565 = vsub.s32 %v2562, %v2564
    %v2566 = vrot.slane %v2552, %v2565
    %v2567 = vcombine.low %v2502, %v2518
    %v2568 = vcombine.high %v2502, %v2518
    %v2570 = vunpack.c.l.s4 1934713408
    %v2571 = vunpack.c.0.s8 %v2570
    %v2572 = vlaneseq
    %v2573 = vshrl.u32 %v2572, 7
    %v2574 = vsub.s32 %v2571, %v2573
    %v2575 = vrot.slane %v2567, %v2574
    %v2577 = vunpack.c.l.s4 1934713408
    %v2578 = vunpack.c.0.s8 %v2577
    %v2579 = vlaneseq
    %v2580 = vshrl.u32 %v2579, 7
    %v2581 = vsub.s32 %v2578, %v2580
    %v2582 = vrot.slane %v2568, %v2581
    %v2583 = vcombine.low %v2527, %v2559
    %v2584 = vcombine.high %v2527, %v2559
    %v2585 = vcombine.low %v2534, %v2566
    %v2586 = vcombine.high %v2534, %v2566
    %v2587 = vcombine.low %v2543, %v2575
    %v2588 = vcombine.high %v2543, %v2575
    %v2589 = vcombine.low %v2550, %v2582
    %v2590 = vcombine.high %v2550, %v2582
    %v2591 = vcombine.low %v1788, %v1820
    %v2592 = vcombine.high %v1788, %v1820
    %v2594 = vunpack.c.l.s4 1983009808
    %v2595 = vunpack.c.0.s8 %v2594
    %v2596 = vlaneseq
    %v2597 = vshrl.u32 %v2596, 7
    %v2598 = vsub.s32 %v2595, %v2597
    %v2599 = vrot.slane %v2591, %v2598
    %v2601 = vunpack.c.l.s4 1983009808
    %v2602 = vunpack.c.0.s8 %v2601
    %v2603 = vlaneseq
    %v2604 = vshrl.u32 %v2603, 7
    %v2605 = vsub.s32 %v2602, %v2604
    %v2606 = vrot.slane %v2592, %v2605
    %v2607 = vcombine.low %v1804, %v1836
    %v2608 = vcombine.high %v1804, %v1836
    %v2610 = vunpack.c.l.s4 1983009808
    %v2611 = vunpack.c.0.s8 %v2610
    %v2612 = vlaneseq
    %v2613 = vshrl.u32 %v2612, 7
    %v2614 = vsub.s32 %v2611, %v2613
    %v2615 = vrot.slane %v2607, %v2614
    %v2617 = vunpack.c.l.s4 1983009808
    %v2618 = vunpack.c.0.s8 %v2617
    %v2619 = vlaneseq
    %v2620 = vshrl.u32 %v2619, 7
    %v2621 = vsub.s32 %v2618, %v2620
    %v2622 = vrot.slane %v2608, %v2621
    %v2623 = vcombine.low %v1852, %v1884
    %v2624 = vcombine.high %v1852, %v1884
    %v2626 = vunpack.c.l.s4 1983009808
    %v2627 = vunpack.c.0.s8 %v2626
    %v2628 = vlaneseq
    %v2629 = vshrl.u32 %v2628, 7
    %v2630 = vsub.s32 %v2627, %v2629
    %v2631 = vrot.slane %v2623, %v2630
    %v2633 = vunpack.c.l.s4 1983009808
    %v2634 = vunpack.c.0.s8 %v2633
    %v2635 = vlaneseq
    %v2636 = vshrl.u32 %v2635, 7
    %v2637 = vsub.s32 %v2634, %v2636
    %v2638 = vrot.slane %v2624, %v2637
    %v2639 = vcombine.low %v1868, %v1900
    %v2640 = vcombine.high %v1868, %v1900
    %v2642 = vunpack.c.l.s4 1983009808
    %v2643 = vunpack.c.0.s8 %v2642
    %v2644 = vlaneseq
    %v2645 = vshrl.u32 %v2644, 7
    %v2646 = vsub.s32 %v2643, %v2645
    %v2647 = vrot.slane %v2639, %v2646
    %v2649 = vunpack.c.l.s4 1983009808
    %v2650 = vunpack.c.0.s8 %v2649
    %v2651 = vlaneseq
    %v2652 = vshrl.u32 %v2651, 7
    %v2653 = vsub.s32 %v2650, %v2652
    %v2654 = vrot.slane %v2640, %v2653
    %v2655 = vcombine.low %v2599, %v2615
    %v2656 = vcombine.high %v2599, %v2615
    %v2658 = vunpack.c.l.s4 1934713408
    %v2659 = vunpack.c.0.s8 %v2658
    %v2660 = vlaneseq
    %v2661 = vshrl.u32 %v2660, 7
    %v2662 = vsub.s32 %v2659, %v2661
    %v2663 = vrot.slane %v2655, %v2662
    %v2665 = vunpack.c.l.s4 1934713408
    %v2666 = vunpack.c.0.s8 %v2665
    %v2667 = vlaneseq
    %v2668 = vshrl.u32 %v2667, 7
    %v2669 = vsub.s32 %v2666, %v2668
    %v2670 = vrot.slane %v2656, %v2669
    %v2671 = vcombine.low %v2606, %v2622
    %v2672 = vcombine.high %v2606, %v2622
    %v2674 = vunpack.c.l.s4 1934713408
    %v2675 = vunpack.c.0.s8 %v2674
    %v2676 = vlaneseq
    %v2677 = vshrl.u32 %v2676, 7
    %v2678 = vsub.s32 %v2675, %v2677
    %v2679 = vrot.slane %v2671, %v2678
    %v2681 = vunpack.c.l.s4 1934713408
    %v2682 = vunpack.c.0.s8 %v2681
    %v2683 = vlaneseq
    %v2684 = vshrl.u32 %v2683, 7
    %v2685 = vsub.s32 %v2682, %v2684
    %v2686 = vrot.slane %v2672, %v2685
    %v2687 = vcombine.low %v2631, %v2647
    %v2688 = vcombine.high %v2631, %v2647
    %v2690 = vunpack.c.l.s4 1934713408
    %v2691 = vunpack.c.0.s8 %v2690
    %v2692 = vlaneseq
    %v2693 = vshrl.u32 %v2692, 7
    %v2694 = vsub.s32 %v2691, %v2693
    %v2695 = vrot.slane %v2687, %v2694
    %v2697 = vunpack.c.l.s4 1934713408
    %v2698 = vunpack.c.0.s8 %v2697
    %v2699 = vlaneseq
    %v2700 = vshrl.u32 %v2699, 7
    %v2701 = vsub.s32 %v2698, %v2700
    %v2702 = vrot.slane %v2688, %v2701
    %v2703 = vcombine.low %v2638, %v2654
    %v2704 = vcombine.high %v2638, %v2654
    %v2706 = vunpack.c.l.s4 1934713408
    %v2707 = vunpack.c.0.s8 %v2706
    %v2708 = vlaneseq
    %v2709 = vshrl.u32 %v2708, 7
    %v2710 = vsub.s32 %v2707, %v2709
    %v2711 = vrot.slane %v2703, %v2710
    %v2713 = vunpack.c.l.s4 1934713408
    %v2714 = vunpack.c.0.s8 %v2713
    %v2715 = vlaneseq
    %v2716 = vshrl.u32 %v2715, 7
    %v2717 = vsub.s32 %v2714, %v2716
    %v2718 = vrot.slane %v2704, %v2717
    %v2719 = vcombine.low %v2663, %v2695
    %v2720 = vcombine.high %v2663, %v2695
    %v2721 = vcombine.low %v2670, %v2702
    %v2722 = vcombine.high %v2670, %v2702
    %v2723 = vcombine.low %v2679, %v2711
    %v2724 = vcombine.high %v2679, %v2711
    %v2725 = vcombine.low %v2686, %v2718
    %v2726 = vcombine.high %v2686, %v2718
    %v2727 = vcombine.low %v1789, %v1821
    %v2728 = vcombine.high %v1789, %v1821
    %v2730 = vunpack.c.l.s4 1983009808
    %v2731 = vunpack.c.0.s8 %v2730
    %v2732 = vlaneseq
    %v2733 = vshrl.u32 %v2732, 7
    %v2734 = vsub.s32 %v2731, %v2733
    %v2735 = vrot.slane %v2727, %v2734
    %v2737 = vunpack.c.l.s4 1983009808
    %v2738 = vunpack.c.0.s8 %v2737
    %v2739 = vlaneseq
    %v2740 = vshrl.u32 %v2739, 7
    %v2741 = vsub.s32 %v2738, %v2740
    %v2742 = vrot.slane %v2728, %v2741
    %v2743 = vcombine.low %v1805, %v1837
    %v2744 = vcombine.high %v1805, %v1837
    %v2746 = vunpack.c.l.s4 1983009808
    %v2747 = vunpack.c.0.s8 %v2746
    %v2748 = vlaneseq
    %v2749 = vshrl.u32 %v2748, 7
    %v2750 = vsub.s32 %v2747, %v2749
    %v2751 = vrot.slane %v2743, %v2750
    %v2753 = vunpack.c.l.s4 1983009808
    %v2754 = vunpack.c.0.s8 %v2753
    %v2755 = vlaneseq
    %v2756 = vshrl.u32 %v2755, 7
    %v2757 = vsub.s32 %v2754, %v2756
    %v2758 = vrot.slane %v2744, %v2757
    %v2759 = vcombine.low %v1853, %v1885
    %v2760 = vcombine.high %v1853, %v1885
    %v2762 = vunpack.c.l.s4 1983009808
    %v2763 = vunpack.c.0.s8 %v2762
    %v2764 = vlaneseq
    %v2765 = vshrl.u32 %v2764, 7
    %v2766 = vsub.s32 %v2763, %v2765
    %v2767 = vrot.slane %v2759, %v2766
    %v2769 = vunpack.c.l.s4 1983009808
    %v2770 = vunpack.c.0.s8 %v2769
    %v2771 = vlaneseq
    %v2772 = vshrl.u32 %v2771, 7
    %v2773 = vsub.s32 %v2770, %v2772
    %v2774 = vrot.slane %v2760, %v2773
    %v2775 = vcombine.low %v1869, %v1901
    %v2776 = vcombine.high %v1869, %v1901
    %v2778 = vunpack.c.l.s4 1983009808
    %v2779 = vunpack.c.0.s8 %v2778
    %v2780 = vlaneseq
    %v2781 = vshrl.u32 %v2780, 7
    %v2782 = vsub.s32 %v2779, %v2781
    %v2783 = vrot.slane %v2775, %v2782
    %v2785 = vunpack.c.l.s4 1983009808
    %v2786 = vunpack.c.0.s8 %v2785
    %v2787 = vlaneseq
    %v2788 = vshrl.u32 %v2787, 7
    %v2789 = vsub.s32 %v2786, %v2788
    %v2790 = vrot.slane %v2776, %v2789
    %v2791 = vcombine.low %v2735, %v2751
    %v2792 = vcombine.high %v2735, %v2751
    %v2794 = vunpack.c.l.s4 1934713408
    %v2795 = vunpack.c.0.s8 %v2794
    %v2796 = vlaneseq
    %v2797 = vshrl.u32 %v2796, 7
    %v2798 = vsub.s32 %v2795, %v2797
    %v2799 = vrot.slane %v2791, %v2798
    %v2801 = vunpack.c.l.s4 1934713408
    %v2802 = vunpack.c.0.s8 %v2801
    %v2803 = vlaneseq
    %v2804 = vshrl.u32 %v2803, 7
    %v2805 = vsub.s32 %v2802, %v2804
    %v2806 = vrot.slane %v2792, %v2805
    %v2807 = vcombine.low %v2742, %v2758
    %v2808 = vcombine.high %v2742, %v2758
    %v2810 = vunpack.c.l.s4 1934713408
    %v2811 = vunpack.c.0.s8 %v2810
    %v2812 = vlaneseq
    %v2813 = vshrl.u32 %v2812, 7
    %v2814 = vsub.s32 %v2811, %v2813
    %v2815 = vrot.slane %v2807, %v2814
    %v2817 = vunpack.c.l.s4 1934713408
    %v2818 = vunpack.c.0.s8 %v2817
    %v2819 = vlaneseq
    %v2820 = vshrl.u32 %v2819, 7
    %v2821 = vsub.s32 %v2818, %v2820
    %v2822 = vrot.slane %v2808, %v2821
    %v2823 = vcombine.low %v2767, %v2783
    %v2824 = vcombine.high %v2767, %v2783
    %v2826 = vunpack.c.l.s4 1934713408
    %v2827 = vunpack.c.0.s8 %v2826
    %v2828 = vlaneseq
    %v2829 = vshrl.u32 %v2828, 7
    %v2830 = vsub.s32 %v2827, %v2829
    %v2831 = vrot.slane %v2823, %v2830
    %v2833 = vunpack.c.l.s4 1934713408
    %v2834 = vunpack.c.0.s8 %v2833
    %v2835 = vlaneseq
    %v2836 = vshrl.u32 %v2835, 7
    %v2837 = vsub.s32 %v2834, %v2836
    %v2838 = vrot.slane %v2824, %v2837
    %v2839 = vcombine.low %v2774, %v2790
    %v2840 = vcombine.high %v2774, %v2790
    %v2842 = vunpack.c.l.s4 1934713408
    %v2843 = vunpack.c.0.s8 %v2842
    %v2844 = vlaneseq
    %v2845 = vshrl.u32 %v2844, 7
    %v2846 = vsub.s32 %v2843, %v2845
    %v2847 = vrot.slane %v2839, %v2846
    %v2849 = vunpack.c.l.s4 1934713408
    %v2850 = vunpack.c.0.s8 %v2849
    %v2851 = vlaneseq
    %v2852 = vshrl.u32 %v2851, 7
    %v2853 = vsub.s32 %v2850, %v2852
    %v2854 = vrot.slane %v2840, %v2853
    %v2855 = vcombine.low %v2799, %v2831
    %v2856 = vcombine.high %v2799, %v2831
    %v2857 = vcombine.low %v2806, %v2838
    %v2858 = vcombine.high %v2806, %v2838
    %v2859 = vcombine.low %v2815, %v2847
    %v2860 = vcombine.high %v2815, %v2847
    %v2861 = vcombine.low %v2822, %v2854
    %v2862 = vcombine.high %v2822, %v2854
    %v2863 = vcombine.low %v1790, %v1822
    %v2864 = vcombine.high %v1790, %v1822
    %v2866 = vunpack.c.l.s4 1983009808
    %v2867 = vunpack.c.0.s8 %v2866
    %v2868 = vlaneseq
    %v2869 = vshrl.u32 %v2868, 7
    %v2870 = vsub.s32 %v2867, %v2869
    %v2871 = vrot.slane %v2863, %v2870
    %v2873 = vunpack.c.l.s4 1983009808
    %v2874 = vunpack.c.0.s8 %v2873
    %v2875 = vlaneseq
    %v2876 = vshrl.u32 %v2875, 7
    %v2877 = vsub.s32 %v2874, %v2876
    %v2878 = vrot.slane %v2864, %v2877
    %v2879 = vcombine.low %v1806, %v1838
    %v2880 = vcombine.high %v1806, %v1838
    %v2882 = vunpack.c.l.s4 1983009808
    %v2883 = vunpack.c.0.s8 %v2882
    %v2884 = vlaneseq
    %v2885 = vshrl.u32 %v2884, 7
    %v2886 = vsub.s32 %v2883, %v2885
    %v2887 = vrot.slane %v2879, %v2886
    %v2889 = vunpack.c.l.s4 1983009808
    %v2890 = vunpack.c.0.s8 %v2889
    %v2891 = vlaneseq
    %v2892 = vshrl.u32 %v2891, 7
    %v2893 = vsub.s32 %v2890, %v2892
    %v2894 = vrot.slane %v2880, %v2893
    %v2895 = vcombine.low %v1854, %v1886
    %v2896 = vcombine.high %v1854, %v1886
    %v2898 = vunpack.c.l.s4 1983009808
    %v2899 = vunpack.c.0.s8 %v2898
    %v2900 = vlaneseq
    %v2901 = vshrl.u32 %v2900, 7
    %v2902 = vsub.s32 %v2899, %v2901
    %v2903 = vrot.slane %v2895, %v2902
    %v2905 = vunpack.c.l.s4 1983009808
    %v2906 = vunpack.c.0.s8 %v2905
    %v2907 = vlaneseq
    %v2908 = vshrl.u32 %v2907, 7
    %v2909 = vsub.s32 %v2906, %v2908
    %v2910 = vrot.slane %v2896, %v2909
    %v2911 = vcombine.low %v1870, %v1902
    %v2912 = vcombine.high %v1870, %v1902
    %v2914 = vunpack.c.l.s4 1983009808
    %v2915 = vunpack.c.0.s8 %v2914
    %v2916 = vlaneseq
    %v2917 = vshrl.u32 %v2916, 7
    %v2918 = vsub.s32 %v2915, %v2917
    %v2919 = vrot.slane %v2911, %v2918
    %v2921 = vunpack.c.l.s4 1983009808
    %v2922 = vunpack.c.0.s8 %v2921
    %v2923 = vlaneseq
    %v2924 = vshrl.u32 %v2923, 7
    %v2925 = vsub.s32 %v2922, %v2924
    %v2926 = vrot.slane %v2912, %v2925
    %v2927 = vcombine.low %v2871, %v2887
    %v2928 = vcombine.high %v2871, %v2887
    %v2930 = vunpack.c.l.s4 1934713408
    %v2931 = vunpack.c.0.s8 %v2930
    %v2932 = vlaneseq
    %v2933 = vshrl.u32 %v2932, 7
    %v2934 = vsub.s32 %v2931, %v2933
    %v2935 = vrot.slane %v2927, %v2934
    %v2937 = vunpack.c.l.s4 1934713408
    %v2938 = vunpack.c.0.s8 %v2937
    %v2939 = vlaneseq
    %v2940 = vshrl.u32 %v2939, 7
    %v2941 = vsub.s32 %v2938, %v2940
    %v2942 = vrot.slane %v2928, %v2941
    %v2943 = vcombine.low %v2878, %v2894
    %v2944 = vcombine.high %v2878, %v2894
    %v2946 = vunpack.c.l.s4 1934713408
    %v2947 = vunpack.c.0.s8 %v2946
    %v2948 = vlaneseq
    %v2949 = vshrl.u32 %v2948, 7
    %v2950 = vsub.s32 %v2947, %v2949
    %v2951 = vrot.slane %v2943, %v2950
    %v2953 = vunpack.c.l.s4 1934713408
    %v2954 = vunpack.c.0.s8 %v2953
    %v2955 = vlaneseq
    %v2956 = vshrl.u32 %v2955, 7
    %v2957 = vsub.s32 %v2954, %v2956
    %v2958 = vrot.slane %v2944, %v2957
    %v2959 = vcombine.low %v2903, %v2919
    %v2960 = vcombine.high %v2903, %v2919
    %v2962 = vunpack.c.l.s4 1934713408
    %v2963 = vunpack.c.0.s8 %v2962
    %v2964 = vlaneseq
    %v2965 = vshrl.u32 %v2964, 7
    %v2966 = vsub.s32 %v2963, %v2965
    %v2967 = vrot.slane %v2959, %v2966
    %v2969 = vunpack.c.l.s4 1934713408
    %v2970 = vunpack.c.0.s8 %v2969
    %v2971 = vlaneseq
    %v2972 = vshrl.u32 %v2971, 7
    %v2973 = vsub.s32 %v2970, %v2972
    %v2974 = vrot.slane %v2960, %v2973
    %v2975 = vcombine.low %v2910, %v2926
    %v2976 = vcombine.high %v2910, %v2926
    %v2978 = vunpack.c.l.s4 1934713408
    %v2979 = vunpack.c.0.s8 %v2978
    %v2980 = vlaneseq
    %v2981 = vshrl.u32 %v2980, 7
    %v2982 = vsub.s32 %v2979, %v2981
    %v2983 = vrot.slane %v2975, %v2982
    %v2985 = vunpack.c.l.s4 1934713408
    %v2986 = vunpack.c.0.s8 %v2985
    %v2987 = vlaneseq
    %v2988 = vshrl.u32 %v2987, 7
    %v2989 = vsub.s32 %v2986, %v2988
    %v2990 = vrot.slane %v2976, %v2989
    %v2991 = vcombine.low %v2935, %v2967
    %v2992 = vcombine.high %v2935, %v2967
    %v2993 = vcombine.low %v2942, %v2974
    %v2994 = vcombine.high %v2942, %v2974
    %v2995 = vcombine.low %v2951, %v2983
    %v2996 = vcombine.high %v2951, %v2983
    %v2997 = vcombine.low %v2958, %v2990
    %v2998 = vcombine.high %v2958, %v2990
    %v2999 = vcombine.low %v1791, %v1823
    %v3000 = vcombine.high %v1791, %v1823
    %v3002 = vunpack.c.l.s4 1983009808
    %v3003 = vunpack.c.0.s8 %v3002
    %v3004 = vlaneseq
    %v3005 = vshrl.u32 %v3004, 7
    %v3006 = vsub.s32 %v3003, %v3005
    %v3007 = vrot.slane %v2999, %v3006
    %v3009 = vunpack.c.l.s4 1983009808
    %v3010 = vunpack.c.0.s8 %v3009
    %v3011 = vlaneseq
    %v3012 = vshrl.u32 %v3011, 7
    %v3013 = vsub.s32 %v3010, %v3012
    %v3014 = vrot.slane %v3000, %v3013
    %v3015 = vcombine.low %v1807, %v1839
    %v3016 = vcombine.high %v1807, %v1839
    %v3018 = vunpack.c.l.s4 1983009808
    %v3019 = vunpack.c.0.s8 %v3018
    %v3020 = vlaneseq
    %v3021 = vshrl.u32 %v3020, 7
    %v3022 = vsub.s32 %v3019, %v3021
    %v3023 = vrot.slane %v3015, %v3022
    %v3025 = vunpack.c.l.s4 1983009808
    %v3026 = vunpack.c.0.s8 %v3025
    %v3027 = vlaneseq
    %v3028 = vshrl.u32 %v3027, 7
    %v3029 = vsub.s32 %v3026, %v3028
    %v3030 = vrot.slane %v3016, %v3029
    %v3031 = vcombine.low %v1855, %v1887
    %v3032 = vcombine.high %v1855, %v1887
    %v3034 = vunpack.c.l.s4 1983009808
    %v3035 = vunpack.c.0.s8 %v3034
    %v3036 = vlaneseq
    %v3037 = vshrl.u32 %v3036, 7
    %v3038 = vsub.s32 %v3035, %v3037
    %v3039 = vrot.slane %v3031, %v3038
    %v3041 = vunpack.c.l.s4 1983009808
    %v3042 = vunpack.c.0.s8 %v3041
    %v3043 = vlaneseq
    %v3044 = vshrl.u32 %v3043, 7
    %v3045 = vsub.s32 %v3042, %v3044
    %v3046 = vrot.slane %v3032, %v3045
    %v3047 = vcombine.low %v1871, %v1903
    %v3048 = vcombine.high %v1871, %v1903
    %v3050 = vunpack.c.l.s4 1983009808
    %v3051 = vunpack.c.0.s8 %v3050
    %v3052 = vlaneseq
    %v3053 = vshrl.u32 %v3052, 7
    %v3054 = vsub.s32 %v3051, %v3053
    %v3055 = vrot.slane %v3047, %v3054
    %v3057 = vunpack.c.l.s4 1983009808
    %v3058 = vunpack.c.0.s8 %v3057
    %v3059 = vlaneseq
    %v3060 = vshrl.u32 %v3059, 7
    %v3061 = vsub.s32 %v3058, %v3060
    %v3062 = vrot.slane %v3048, %v3061
    %v3063 = vcombine.low %v3007, %v3023
    %v3064 = vcombine.high %v3007, %v3023
    %v3066 = vunpack.c.l.s4 1934713408
    %v3067 = vunpack.c.0.s8 %v3066
    %v3068 = vlaneseq
    %v3069 = vshrl.u32 %v3068, 7
    %v3070 = vsub.s32 %v3067, %v3069
    %v3071 = vrot.slane %v3063, %v3070
    %v3073 = vunpack.c.l.s4 1934713408
    %v3074 = vunpack.c.0.s8 %v3073
    %v3075 = vlaneseq
    %v3076 = vshrl.u32 %v3075, 7
    %v3077 = vsub.s32 %v3074, %v3076
    %v3078 = vrot.slane %v3064, %v3077
    %v3079 = vcombine.low %v3014, %v3030
    %v3080 = vcombine.high %v3014, %v3030
    %v3082 = vunpack.c.l.s4 1934713408
    %v3083 = vunpack.c.0.s8 %v3082
    %v3084 = vlaneseq
    %v3085 = vshrl.u32 %v3084, 7
    %v3086 = vsub.s32 %v3083, %v3085
    %v3087 = vrot.slane %v3079, %v3086
    %v3089 = vunpack.c.l.s4 1934713408
    %v3090 = vunpack.c.0.s8 %v3089
    %v3091 = vlaneseq
    %v3092 = vshrl.u32 %v3091, 7
    %v3093 = vsub.s32 %v3090, %v3092
    %v3094 = vrot.slane %v3080, %v3093
    %v3095 = vcombine.low %v3039, %v3055
    %v3096 = vcombine.high %v3039, %v3055
    %v3098 = vunpack.c.l.s4 1934713408
    %v3099 = vunpack.c.0.s8 %v3098
    %v3100 = vlaneseq
    %v3101 = vshrl.u32 %v3100, 7
    %v3102 = vsub.s32 %v3099, %v3101
    %v3103 = vrot.slane %v3095, %v3102
    %v3105 = vunpack.c.l.s4 1934713408
    %v3106 = vunpack.c.0.s8 %v3105
    %v3107 = vlaneseq
    %v3108 = vshrl.u32 %v3107, 7
    %v3109 = vsub.s32 %v3106, %v3108
    %v3110 = vrot.slane %v3096, %v3109
    %v3111 = vcombine.low %v3046, %v3062
    %v3112 = vcombine.high %v3046, %v3062
    %v3114 = vunpack.c.l.s4 1934713408
    %v3115 = vunpack.c.0.s8 %v3114
    %v3116 = vlaneseq
    %v3117 = vshrl.u32 %v3116, 7
    %v3118 = vsub.s32 %v3115, %v3117
    %v3119 = vrot.slane %v3111, %v3118
    %v3121 = vunpack.c.l.s4 1934713408
    %v3122 = vunpack.c.0.s8 %v3121
    %v3123 = vlaneseq
    %v3124 = vshrl.u32 %v3123, 7
    %v3125 = vsub.s32 %v3122, %v3124
    %v3126 = vrot.slane %v3112, %v3125
    %v3127 = vcombine.low %v3071, %v3103
    %v3128 = vcombine.high %v3071, %v3103
    %v3129 = vcombine.low %v3078, %v3110
    %v3130 = vcombine.high %v3078, %v3110
    %v3131 = vcombine.low %v3087, %v3119
    %v3132 = vcombine.high %v3087, %v3119
    %v3133 = vcombine.low %v3094, %v3126
    %v3134 = vcombine.high %v3094, %v3126
    %v3135 = vcombine.low %v1792, %v1824
    %v3136 = vcombine.high %v1792, %v1824
    %v3138 = vunpack.c.l.s4 1983009808
    %v3139 = vunpack.c.0.s8 %v3138
    %v3140 = vlaneseq
    %v3141 = vshrl.u32 %v3140, 7
    %v3142 = vsub.s32 %v3139, %v3141
    %v3143 = vrot.slane %v3135, %v3142
    %v3145 = vunpack.c.l.s4 1983009808
    %v3146 = vunpack.c.0.s8 %v3145
    %v3147 = vlaneseq
    %v3148 = vshrl.u32 %v3147, 7
    %v3149 = vsub.s32 %v3146, %v3148
    %v3150 = vrot.slane %v3136, %v3149
    %v3151 = vcombine.low %v1808, %v1840
    %v3152 = vcombine.high %v1808, %v1840
    %v3154 = vunpack.c.l.s4 1983009808
    %v3155 = vunpack.c.0.s8 %v3154
    %v3156 = vlaneseq
    %v3157 = vshrl.u32 %v3156, 7
    %v3158 = vsub.s32 %v3155, %v3157
    %v3159 = vrot.slane %v3151, %v3158
    %v3161 = vunpack.c.l.s4 1983009808
    %v3162 = vunpack.c.0.s8 %v3161
    %v3163 = vlaneseq
    %v3164 = vshrl.u32 %v3163, 7
    %v3165 = vsub.s32 %v3162, %v3164
    %v3166 = vrot.slane %v3152, %v3165
    %v3167 = vcombine.low %v1856, %v1888
    %v3168 = vcombine.high %v1856, %v1888
    %v3170 = vunpack.c.l.s4 1983009808
    %v3171 = vunpack.c.0.s8 %v3170
    %v3172 = vlaneseq
    %v3173 = vshrl.u32 %v3172, 7
    %v3174 = vsub.s32 %v3171, %v3173
    %v3175 = vrot.slane %v3167, %v3174
    %v3177 = vunpack.c.l.s4 1983009808
    %v3178 = vunpack.c.0.s8 %v3177
    %v3179 = vlaneseq
    %v3180 = vshrl.u32 %v3179, 7
    %v3181 = vsub.s32 %v3178, %v3180
    %v3182 = vrot.slane %v3168, %v3181
    %v3183 = vcombine.low %v1872, %v1904
    %v3184 = vcombine.high %v1872, %v1904
    %v3186 = vunpack.c.l.s4 1983009808
    %v3187 = vunpack.c.0.s8 %v3186
    %v3188 = vlaneseq
    %v3189 = vshrl.u32 %v3188, 7
    %v3190 = vsub.s32 %v3187, %v3189
    %v3191 = vrot.slane %v3183, %v3190
    %v3193 = vunpack.c.l.s4 1983009808
    %v3194 = vunpack.c.0.s8 %v3193
    %v3195 = vlaneseq
    %v3196 = vshrl.u32 %v3195, 7
    %v3197 = vsub.s32 %v3194, %v3196
    %v3198 = vrot.slane %v3184, %v3197
    %v3199 = vcombine.low %v3143, %v3159
    %v3200 = vcombine.high %v3143, %v3159
    %v3202 = vunpack.c.l.s4 1934713408
    %v3203 = vunpack.c.0.s8 %v3202
    %v3204 = vlaneseq
    %v3205 = vshrl.u32 %v3204, 7
    %v3206 = vsub.s32 %v3203, %v3205
    %v3207 = vrot.slane %v3199, %v3206
    %v3209 = vunpack.c.l.s4 1934713408
    %v3210 = vunpack.c.0.s8 %v3209
    %v3211 = vlaneseq
    %v3212 = vshrl.u32 %v3211, 7
    %v3213 = vsub.s32 %v3210, %v3212
    %v3214 = vrot.slane %v3200, %v3213
    %v3215 = vcombine.low %v3150, %v3166
    %v3216 = vcombine.high %v3150, %v3166
    %v3218 = vunpack.c.l.s4 1934713408
    %v3219 = vunpack.c.0.s8 %v3218
    %v3220 = vlaneseq
    %v3221 = vshrl.u32 %v3220, 7
    %v3222 = vsub.s32 %v3219, %v3221
    %v3223 = vrot.slane %v3215, %v3222
    %v3225 = vunpack.c.l.s4 1934713408
    %v3226 = vunpack.c.0.s8 %v3225
    %v3227 = vlaneseq
    %v3228 = vshrl.u32 %v3227, 7
    %v3229 = vsub.s32 %v3226, %v3228
    %v3230 = vrot.slane %v3216, %v3229
    %v3231 = vcombine.low %v3175, %v3191
    %v3232 = vcombine.high %v3175, %v3191
    %v3234 = vunpack.c.l.s4 1934713408
    %v3235 = vunpack.c.0.s8 %v3234
    %v3236 = vlaneseq
    %v3237 = vshrl.u32 %v3236, 7
    %v3238 = vsub.s32 %v3235, %v3237
    %v3239 = vrot.slane %v3231, %v3238
    %v3241 = vunpack.c.l.s4 1934713408
    %v3242 = vunpack.c.0.s8 %v3241
    %v3243 = vlaneseq
    %v3244 = vshrl.u32 %v3243, 7
    %v3245 = vsub.s32 %v3242, %v3244
    %v3246 = vrot.slane %v3232, %v3245
    %v3247 = vcombine.low %v3182, %v3198
    %v3248 = vcombine.high %v3182, %v3198
    %v3250 = vunpack.c.l.s4 1934713408
    %v3251 = vunpack.c.0.s8 %v3250
    %v3252 = vlaneseq
    %v3253 = vshrl.u32 %v3252, 7
    %v3254 = vsub.s32 %v3251, %v3253
    %v3255 = vrot.slane %v3247, %v3254
    %v3257 = vunpack.c.l.s4 1934713408
    %v3258 = vunpack.c.0.s8 %v3257
    %v3259 = vlaneseq
    %v3260 = vshrl.u32 %v3259, 7
    %v3261 = vsub.s32 %v3258, %v3260
    %v3262 = vrot.slane %v3248, %v3261
    %v3263 = vcombine.low %v3207, %v3239
    %v3264 = vcombine.high %v3207, %v3239
    %v3265 = vcombine.low %v3214, %v3246
    %v3266 = vcombine.high %v3214, %v3246
    %v3267 = vcombine.low %v3223, %v3255
    %v3268 = vcombine.high %v3223, %v3255
    %v3269 = vcombine.low %v3230, %v3262
    %v3270 = vcombine.high %v3230, %v3262
    %v3271 = vcombine.low %v1793, %v1825
    %v3272 = vcombine.high %v1793, %v1825
    %v3274 = vunpack.c.l.s4 1983009808
    %v3275 = vunpack.c.0.s8 %v3274
    %v3276 = vlaneseq
    %v3277 = vshrl.u32 %v3276, 7
    %v3278 = vsub.s32 %v3275, %v3277
    %v3279 = vrot.slane %v3271, %v3278
    %v3281 = vunpack.c.l.s4 1983009808
    %v3282 = vunpack.c.0.s8 %v3281
    %v3283 = vlaneseq
    %v3284 = vshrl.u32 %v3283, 7
    %v3285 = vsub.s32 %v3282, %v3284
    %v3286 = vrot.slane %v3272, %v3285
    %v3287 = vcombine.low %v1809, %v1841
    %v3288 = vcombine.high %v1809, %v1841
    %v3290 = vunpack.c.l.s4 1983009808
    %v3291 = vunpack.c.0.s8 %v3290
    %v3292 = vlaneseq
    %v3293 = vshrl.u32 %v3292, 7
    %v3294 = vsub.s32 %v3291, %v3293
    %v3295 = vrot.slane %v3287, %v3294
    %v3297 = vunpack.c.l.s4 1983009808
    %v3298 = vunpack.c.0.s8 %v3297
    %v3299 = vlaneseq
    %v3300 = vshrl.u32 %v3299, 7
    %v3301 = vsub.s32 %v3298, %v3300
    %v3302 = vrot.slane %v3288, %v3301
    %v3303 = vcombine.low %v1857, %v1889
    %v3304 = vcombine.high %v1857, %v1889
    %v3306 = vunpack.c.l.s4 1983009808
    %v3307 = vunpack.c.0.s8 %v3306
    %v3308 = vlaneseq
    %v3309 = vshrl.u32 %v3308, 7
    %v3310 = vsub.s32 %v3307, %v3309
    %v3311 = vrot.slane %v3303, %v3310
    %v3313 = vunpack.c.l.s4 1983009808
    %v3314 = vunpack.c.0.s8 %v3313
    %v3315 = vlaneseq
    %v3316 = vshrl.u32 %v3315, 7
    %v3317 = vsub.s32 %v3314, %v3316
    %v3318 = vrot.slane %v3304, %v3317
    %v3319 = vcombine.low %v1873, %v1905
    %v3320 = vcombine.high %v1873, %v1905
    %v3322 = vunpack.c.l.s4 1983009808
    %v3323 = vunpack.c.0.s8 %v3322
    %v3324 = vlaneseq
    %v3325 = vshrl.u32 %v3324, 7
    %v3326 = vsub.s32 %v3323, %v3325
    %v3327 = vrot.slane %v3319, %v3326
    %v3329 = vunpack.c.l.s4 1983009808
    %v3330 = vunpack.c.0.s8 %v3329
    %v3331 = vlaneseq
    %v3332 = vshrl.u32 %v3331, 7
    %v3333 = vsub.s32 %v3330, %v3332
    %v3334 = vrot.slane %v3320, %v3333
    %v3335 = vcombine.low %v3279, %v3295
    %v3336 = vcombine.high %v3279, %v3295
    %v3338 = vunpack.c.l.s4 1934713408
    %v3339 = vunpack.c.0.s8 %v3338
    %v3340 = vlaneseq
    %v3341 = vshrl.u32 %v3340, 7
    %v3342 = vsub.s32 %v3339, %v3341
    %v3343 = vrot.slane %v3335, %v3342
    %v3345 = vunpack.c.l.s4 1934713408
    %v3346 = vunpack.c.0.s8 %v3345
    %v3347 = vlaneseq
    %v3348 = vshrl.u32 %v3347, 7
    %v3349 = vsub.s32 %v3346, %v3348
    %v3350 = vrot.slane %v3336, %v3349
    %v3351 = vcombine.low %v3286, %v3302
    %v3352 = vcombine.high %v3286, %v3302
    %v3354 = vunpack.c.l.s4 1934713408
    %v3355 = vunpack.c.0.s8 %v3354
    %v3356 = vlaneseq
    %v3357 = vshrl.u32 %v3356, 7
    %v3358 = vsub.s32 %v3355, %v3357
    %v3359 = vrot.slane %v3351, %v3358
    %v3361 = vunpack.c.l.s4 1934713408
    %v3362 = vunpack.c.0.s8 %v3361
    %v3363 = vlaneseq
    %v3364 = vshrl.u32 %v3363, 7
    %v3365 = vsub.s32 %v3362, %v3364
    %v3366 = vrot.slane %v3352, %v3365
    %v3367 = vcombine.low %v3311, %v3327
    %v3368 = vcombine.high %v3311, %v3327
    %v3370 = vunpack.c.l.s4 1934713408
    %v3371 = vunpack.c.0.s8 %v3370
    %v3372 = vlaneseq
    %v3373 = vshrl.u32 %v3372, 7
    %v3374 = vsub.s32 %v3371, %v3373
    %v3375 = vrot.slane %v3367, %v3374
    %v3377 = vunpack.c.l.s4 1934713408
    %v3378 = vunpack.c.0.s8 %v3377
    %v3379 = vlaneseq
    %v3380 = vshrl.u32 %v3379, 7
    %v3381 = vsub.s32 %v3378, %v3380
    %v3382 = vrot.slane %v3368, %v3381
    %v3383 = vcombine.low %v3318, %v3334
    %v3384 = vcombine.high %v3318, %v3334
    %v3386 = vunpack.c.l.s4 1934713408
    %v3387 = vunpack.c.0.s8 %v3386
    %v3388 = vlaneseq
    %v3389 = vshrl.u32 %v3388, 7
    %v3390 = vsub.s32 %v3387, %v3389
    %v3391 = vrot.slane %v3383, %v3390
    %v3393 = vunpack.c.l.s4 1934713408
    %v3394 = vunpack.c.0.s8 %v3393
    %v3395 = vlaneseq
    %v3396 = vshrl.u32 %v3395, 7
    %v3397 = vsub.s32 %v3394, %v3396
    %v3398 = vrot.slane %v3384, %v3397
    %v3399 = vcombine.low %v3343, %v3375
    %v3400 = vcombine.high %v3343, %v3375
    %v3401 = vcombine.low %v3350, %v3382
    %v3402 = vcombine.high %v3350, %v3382
    %v3403 = vcombine.low %v3359, %v3391
    %v3404 = vcombine.high %v3359, %v3391
    %v3405 = vcombine.low %v3366, %v3398
    %v3406 = vcombine.high %v3366, %v3398
    %v3407 = vcombine.low %v1794, %v1826
    %v3408 = vcombine.high %v1794, %v1826
    %v3410 = vunpack.c.l.s4 1983009808
    %v3411 = vunpack.c.0.s8 %v3410
    %v3412 = vlaneseq
    %v3413 = vshrl.u32 %v3412, 7
    %v3414 = vsub.s32 %v3411, %v3413
    %v3415 = vrot.slane %v3407, %v3414
    %v3417 = vunpack.c.l.s4 1983009808
    %v3418 = vunpack.c.0.s8 %v3417
    %v3419 = vlaneseq
    %v3420 = vshrl.u32 %v3419, 7
    %v3421 = vsub.s32 %v3418, %v3420
    %v3422 = vrot.slane %v3408, %v3421
    %v3423 = vcombine.low %v1810, %v1842
    %v3424 = vcombine.high %v1810, %v1842
    %v3426 = vunpack.c.l.s4 1983009808
    %v3427 = vunpack.c.0.s8 %v3426
    %v3428 = vlaneseq
    %v3429 = vshrl.u32 %v3428, 7
    %v3430 = vsub.s32 %v3427, %v3429
    %v3431 = vrot.slane %v3423, %v3430
    %v3433 = vunpack.c.l.s4 1983009808
    %v3434 = vunpack.c.0.s8 %v3433
    %v3435 = vlaneseq
    %v3436 = vshrl.u32 %v3435, 7
    %v3437 = vsub.s32 %v3434, %v3436
    %v3438 = vrot.slane %v3424, %v3437
    %v3439 = vcombine.low %v1858, %v1890
    %v3440 = vcombine.high %v1858, %v1890
    %v3442 = vunpack.c.l.s4 1983009808
    %v3443 = vunpack.c.0.s8 %v3442
    %v3444 = vlaneseq
    %v3445 = vshrl.u32 %v3444, 7
    %v3446 = vsub.s32 %v3443, %v3445
    %v3447 = vrot.slane %v3439, %v3446
    %v3449 = vunpack.c.l.s4 1983009808
    %v3450 = vunpack.c.0.s8 %v3449
    %v3451 = vlaneseq
    %v3452 = vshrl.u32 %v3451, 7
    %v3453 = vsub.s32 %v3450, %v3452
    %v3454 = vrot.slane %v3440, %v3453
    %v3455 = vcombine.low %v1874, %v1906
    %v3456 = vcombine.high %v1874, %v1906
    %v3458 = vunpack.c.l.s4 1983009808
    %v3459 = vunpack.c.0.s8 %v3458
    %v3460 = vlaneseq
    %v3461 = vshrl.u32 %v3460, 7
    %v3462 = vsub.s32 %v3459, %v3461
    %v3463 = vrot.slane %v3455, %v3462
    %v3465 = vunpack.c.l.s4 1983009808
    %v3466 = vunpack.c.0.s8 %v3465
    %v3467 = vlaneseq
    %v3468 = vshrl.u32 %v3467, 7
    %v3469 = vsub.s32 %v3466, %v3468
    %v3470 = vrot.slane %v3456, %v3469
    %v3471 = vcombine.low %v3415, %v3431
    %v3472 = vcombine.high %v3415, %v3431
    %v3474 = vunpack.c.l.s4 1934713408
    %v3475 = vunpack.c.0.s8 %v3474
    %v3476 = vlaneseq
    %v3477 = vshrl.u32 %v3476, 7
    %v3478 = vsub.s32 %v3475, %v3477
    %v3479 = vrot.slane %v3471, %v3478
    %v3481 = vunpack.c.l.s4 1934713408
    %v3482 = vunpack.c.0.s8 %v3481
    %v3483 = vlaneseq
    %v3484 = vshrl.u32 %v3483, 7
    %v3485 = vsub.s32 %v3482, %v3484
    %v3486 = vrot.slane %v3472, %v3485
    %v3487 = vcombine.low %v3422, %v3438
    %v3488 = vcombine.high %v3422, %v3438
    %v3490 = vunpack.c.l.s4 1934713408
    %v3491 = vunpack.c.0.s8 %v3490
    %v3492 = vlaneseq
    %v3493 = vshrl.u32 %v3492, 7
    %v3494 = vsub.s32 %v3491, %v3493
    %v3495 = vrot.slane %v3487, %v3494
    %v3497 = vunpack.c.l.s4 1934713408
    %v3498 = vunpack.c.0.s8 %v3497
    %v3499 = vlaneseq
    %v3500 = vshrl.u32 %v3499, 7
    %v3501 = vsub.s32 %v3498, %v3500
    %v3502 = vrot.slane %v3488, %v3501
    %v3503 = vcombine.low %v3447, %v3463
    %v3504 = vcombine.high %v3447, %v3463
    %v3506 = vunpack.c.l.s4 1934713408
    %v3507 = vunpack.c.0.s8 %v3506
    %v3508 = vlaneseq
    %v3509 = vshrl.u32 %v3508, 7
    %v3510 = vsub.s32 %v3507, %v3509
    %v3511 = vrot.slane %v3503, %v3510
    %v3513 = vunpack.c.l.s4 1934713408
    %v3514 = vunpack.c.0.s8 %v3513
    %v3515 = vlaneseq
    %v3516 = vshrl.u32 %v3515, 7
    %v3517 = vsub.s32 %v3514, %v3516
    %v3518 = vrot.slane %v3504, %v3517
    %v3519 = vcombine.low %v3454, %v3470
    %v3520 = vcombine.high %v3454, %v3470
    %v3522 = vunpack.c.l.s4 1934713408
    %v3523 = vunpack.c.0.s8 %v3522
    %v3524 = vlaneseq
    %v3525 = vshrl.u32 %v3524, 7
    %v3526 = vsub.s32 %v3523, %v3525
    %v3527 = vrot.slane %v3519, %v3526
    %v3529 = vunpack.c.l.s4 1934713408
    %v3530 = vunpack.c.0.s8 %v3529
    %v3531 = vlaneseq
    %v3532 = vshrl.u32 %v3531, 7
    %v3533 = vsub.s32 %v3530, %v3532
    %v3534 = vrot.slane %v3520, %v3533
    %v3535 = vcombine.low %v3479, %v3511
    %v3536 = vcombine.high %v3479, %v3511
    %v3537 = vcombine.low %v3486, %v3518
    %v3538 = vcombine.high %v3486, %v3518
    %v3539 = vcombine.low %v3495, %v3527
    %v3540 = vcombine.high %v3495, %v3527
    %v3541 = vcombine.low %v3502, %v3534
    %v3542 = vcombine.high %v3502, %v3534
    %v3543 = vcombine.low %v1795, %v1827
    %v3544 = vcombine.high %v1795, %v1827
    %v3546 = vunpack.c.l.s4 1983009808
    %v3547 = vunpack.c.0.s8 %v3546
    %v3548 = vlaneseq
    %v3549 = vshrl.u32 %v3548, 7
    %v3550 = vsub.s32 %v3547, %v3549
    %v3551 = vrot.slane %v3543, %v3550
    %v3553 = vunpack.c.l.s4 1983009808
    %v3554 = vunpack.c.0.s8 %v3553
    %v3555 = vlaneseq
    %v3556 = vshrl.u32 %v3555, 7
    %v3557 = vsub.s32 %v3554, %v3556
    %v3558 = vrot.slane %v3544, %v3557
    %v3559 = vcombine.low %v1811, %v1843
    %v3560 = vcombine.high %v1811, %v1843
    %v3562 = vunpack.c.l.s4 1983009808
    %v3563 = vunpack.c.0.s8 %v3562
    %v3564 = vlaneseq
    %v3565 = vshrl.u32 %v3564, 7
    %v3566 = vsub.s32 %v3563, %v3565
    %v3567 = vrot.slane %v3559, %v3566
    %v3569 = vunpack.c.l.s4 1983009808
    %v3570 = vunpack.c.0.s8 %v3569
    %v3571 = vlaneseq
    %v3572 = vshrl.u32 %v3571, 7
    %v3573 = vsub.s32 %v3570, %v3572
    %v3574 = vrot.slane %v3560, %v3573
    %v3575 = vcombine.low %v1859, %v1891
    %v3576 = vcombine.high %v1859, %v1891
    %v3578 = vunpack.c.l.s4 1983009808
    %v3579 = vunpack.c.0.s8 %v3578
    %v3580 = vlaneseq
    %v3581 = vshrl.u32 %v3580, 7
    %v3582 = vsub.s32 %v3579, %v3581
    %v3583 = vrot.slane %v3575, %v3582
    %v3585 = vunpack.c.l.s4 1983009808
    %v3586 = vunpack.c.0.s8 %v3585
    %v3587 = vlaneseq
    %v3588 = vshrl.u32 %v3587, 7
    %v3589 = vsub.s32 %v3586, %v3588
    %v3590 = vrot.slane %v3576, %v3589
    %v3591 = vcombine.low %v1875, %v1907
    %v3592 = vcombine.high %v1875, %v1907
    %v3594 = vunpack.c.l.s4 1983009808
    %v3595 = vunpack.c.0.s8 %v3594
    %v3596 = vlaneseq
    %v3597 = vshrl.u32 %v3596, 7
    %v3598 = vsub.s32 %v3595, %v3597
    %v3599 = vrot.slane %v3591, %v3598
    %v3601 = vunpack.c.l.s4 1983009808
    %v3602 = vunpack.c.0.s8 %v3601
    %v3603 = vlaneseq
    %v3604 = vshrl.u32 %v3603, 7
    %v3605 = vsub.s32 %v3602, %v3604
    %v3606 = vrot.slane %v3592, %v3605
    %v3607 = vcombine.low %v3551, %v3567
    %v3608 = vcombine.high %v3551, %v3567
    %v3610 = vunpack.c.l.s4 1934713408
    %v3611 = vunpack.c.0.s8 %v3610
    %v3612 = vlaneseq
    %v3613 = vshrl.u32 %v3612, 7
    %v3614 = vsub.s32 %v3611, %v3613
    %v3615 = vrot.slane %v3607, %v3614
    %v3617 = vunpack.c.l.s4 1934713408
    %v3618 = vunpack.c.0.s8 %v3617
    %v3619 = vlaneseq
    %v3620 = vshrl.u32 %v3619, 7
    %v3621 = vsub.s32 %v3618, %v3620
    %v3622 = vrot.slane %v3608, %v3621
    %v3623 = vcombine.low %v3558, %v3574
    %v3624 = vcombine.high %v3558, %v3574
    %v3626 = vunpack.c.l.s4 1934713408
    %v3627 = vunpack.c.0.s8 %v3626
    %v3628 = vlaneseq
    %v3629 = vshrl.u32 %v3628, 7
    %v3630 = vsub.s32 %v3627, %v3629
    %v3631 = vrot.slane %v3623, %v3630
    %v3633 = vunpack.c.l.s4 1934713408
    %v3634 = vunpack.c.0.s8 %v3633
    %v3635 = vlaneseq
    %v3636 = vshrl.u32 %v3635, 7
    %v3637 = vsub.s32 %v3634, %v3636
    %v3638 = vrot.slane %v3624, %v3637
    %v3639 = vcombine.low %v3583, %v3599
    %v3640 = vcombine.high %v3583, %v3599
    %v3642 = vunpack.c.l.s4 1934713408
    %v3643 = vunpack.c.0.s8 %v3642
    %v3644 = vlaneseq
    %v3645 = vshrl.u32 %v3644, 7
    %v3646 = vsub.s32 %v3643, %v3645
    %v3647 = vrot.slane %v3639, %v3646
    %v3649 = vunpack.c.l.s4 1934713408
    %v3650 = vunpack.c.0.s8 %v3649
    %v3651 = vlaneseq
    %v3652 = vshrl.u32 %v3651, 7
    %v3653 = vsub.s32 %v3650, %v3652
    %v3654 = vrot.slane %v3640, %v3653
    %v3655 = vcombine.low %v3590, %v3606
    %v3656 = vcombine.high %v3590, %v3606
    %v3658 = vunpack.c.l.s4 1934713408
    %v3659 = vunpack.c.0.s8 %v3658
    %v3660 = vlaneseq
    %v3661 = vshrl.u32 %v3660, 7
    %v3662 = vsub.s32 %v3659, %v3661
    %v3663 = vrot.slane %v3655, %v3662
    %v3665 = vunpack.c.l.s4 1934713408
    %v3666 = vunpack.c.0.s8 %v3665
    %v3667 = vlaneseq
    %v3668 = vshrl.u32 %v3667, 7
    %v3669 = vsub.s32 %v3666, %v3668
    %v3670 = vrot.slane %v3656, %v3669
    %v3671 = vcombine.low %v3615, %v3647
    %v3672 = vcombine.high %v3615, %v3647
    %v3673 = vcombine.low %v3622, %v3654
    %v3674 = vcombine.high %v3622, %v3654
    %v3675 = vcombine.low %v3631, %v3663
    %v3676 = vcombine.high %v3631, %v3663
    %v3677 = vcombine.low %v3638, %v3670
    %v3678 = vcombine.high %v3638, %v3670
    %v3679 = vcombine.low %v1796, %v1828
    %v3680 = vcombine.high %v1796, %v1828
    %v3682 = vunpack.c.l.s4 1983009808
    %v3683 = vunpack.c.0.s8 %v3682
    %v3684 = vlaneseq
    %v3685 = vshrl.u32 %v3684, 7
    %v3686 = vsub.s32 %v3683, %v3685
    %v3687 = vrot.slane %v3679, %v3686
    %v3689 = vunpack.c.l.s4 1983009808
    %v3690 = vunpack.c.0.s8 %v3689
    %v3691 = vlaneseq
    %v3692 = vshrl.u32 %v3691, 7
    %v3693 = vsub.s32 %v3690, %v3692
    %v3694 = vrot.slane %v3680, %v3693
    %v3695 = vcombine.low %v1812, %v1844
    %v3696 = vcombine.high %v1812, %v1844
    %v3698 = vunpack.c.l.s4 1983009808
    %v3699 = vunpack.c.0.s8 %v3698
    %v3700 = vlaneseq
    %v3701 = vshrl.u32 %v3700, 7
    %v3702 = vsub.s32 %v3699, %v3701
    %v3703 = vrot.slane %v3695, %v3702
    %v3705 = vunpack.c.l.s4 1983009808
    %v3706 = vunpack.c.0.s8 %v3705
    %v3707 = vlaneseq
    %v3708 = vshrl.u32 %v3707, 7
    %v3709 = vsub.s32 %v3706, %v3708
    %v3710 = vrot.slane %v3696, %v3709
    %v3711 = vcombine.low %v1860, %v1892
    %v3712 = vcombine.high %v1860, %v1892
    %v3714 = vunpack.c.l.s4 1983009808
    %v3715 = vunpack.c.0.s8 %v3714
    %v3716 = vlaneseq
    %v3717 = vshrl.u32 %v3716, 7
    %v3718 = vsub.s32 %v3715, %v3717
    %v3719 = vrot.slane %v3711, %v3718
    %v3721 = vunpack.c.l.s4 1983009808
    %v3722 = vunpack.c.0.s8 %v3721
    %v3723 = vlaneseq
    %v3724 = vshrl.u32 %v3723, 7
    %v3725 = vsub.s32 %v3722, %v3724
    %v3726 = vrot.slane %v3712, %v3725
    %v3727 = vcombine.low %v1876, %v1908
    %v3728 = vcombine.high %v1876, %v1908
    %v3730 = vunpack.c.l.s4 1983009808
    %v3731 = vunpack.c.0.s8 %v3730
    %v3732 = vlaneseq
    %v3733 = vshrl.u32 %v3732, 7
    %v3734 = vsub.s32 %v3731, %v3733
    %v3735 = vrot.slane %v3727, %v3734
    %v3737 = vunpack.c.l.s4 1983009808
    %v3738 = vunpack.c.0.s8 %v3737
    %v3739 = vlaneseq
    %v3740 = vshrl.u32 %v3739, 7
    %v3741 = vsub.s32 %v3738, %v3740
    %v3742 = vrot.slane %v3728, %v3741
    %v3743 = vcombine.low %v3687, %v3703
    %v3744 = vcombine.high %v3687, %v3703
    %v3746 = vunpack.c.l.s4 1934713408
    %v3747 = vunpack.c.0.s8 %v3746
    %v3748 = vlaneseq
    %v3749 = vshrl.u32 %v3748, 7
    %v3750 = vsub.s32 %v3747, %v3749
    %v3751 = vrot.slane %v3743, %v3750
    %v3753 = vunpack.c.l.s4 1934713408
    %v3754 = vunpack.c.0.s8 %v3753
    %v3755 = vlaneseq
    %v3756 = vshrl.u32 %v3755, 7
    %v3757 = vsub.s32 %v3754, %v3756
    %v3758 = vrot.slane %v3744, %v3757
    %v3759 = vcombine.low %v3694, %v3710
    %v3760 = vcombine.high %v3694, %v3710
    %v3762 = vunpack.c.l.s4 1934713408
    %v3763 = vunpack.c.0.s8 %v3762
    %v3764 = vlaneseq
    %v3765 = vshrl.u32 %v3764, 7
    %v3766 = vsub.s32 %v3763, %v3765
    %v3767 = vrot.slane %v3759, %v3766
    %v3769 = vunpack.c.l.s4 1934713408
    %v3770 = vunpack.c.0.s8 %v3769
    %v3771 = vlaneseq
    %v3772 = vshrl.u32 %v3771, 7
    %v3773 = vsub.s32 %v3770, %v3772
    %v3774 = vrot.slane %v3760, %v3773
    %v3775 = vcombine.low %v3719, %v3735
    %v3776 = vcombine.high %v3719, %v3735
    %v3778 = vunpack.c.l.s4 1934713408
    %v3779 = vunpack.c.0.s8 %v3778
    %v3780 = vlaneseq
    %v3781 = vshrl.u32 %v3780, 7
    %v3782 = vsub.s32 %v3779, %v3781
    %v3783 = vrot.slane %v3775, %v3782
    %v3785 = vunpack.c.l.s4 1934713408
    %v3786 = vunpack.c.0.s8 %v3785
    %v3787 = vlaneseq
    %v3788 = vshrl.u32 %v3787, 7
    %v3789 = vsub.s32 %v3786, %v3788
    %v3790 = vrot.slane %v3776, %v3789
    %v3791 = vcombine.low %v3726, %v3742
    %v3792 = vcombine.high %v3726, %v3742
    %v3794 = vunpack.c.l.s4 1934713408
    %v3795 = vunpack.c.0.s8 %v3794
    %v3796 = vlaneseq
    %v3797 = vshrl.u32 %v3796, 7
    %v3798 = vsub.s32 %v3795, %v3797
    %v3799 = vrot.slane %v3791, %v3798
    %v3801 = vunpack.c.l.s4 1934713408
    %v3802 = vunpack.c.0.s8 %v3801
    %v3803 = vlaneseq
    %v3804 = vshrl.u32 %v3803, 7
    %v3805 = vsub.s32 %v3802, %v3804
    %v3806 = vrot.slane %v3792, %v3805
    %v3807 = vcombine.low %v3751, %v3783
    %v3808 = vcombine.high %v3751, %v3783
    %v3809 = vcombine.low %v3758, %v3790
    %v3810 = vcombine.high %v3758, %v3790
    %v3811 = vcombine.low %v3767, %v3799
    %v3812 = vcombine.high %v3767, %v3799
    %v3813 = vcombine.low %v3774, %v3806
    %v3814 = vcombine.high %v3774, %v3806
    %v3815 = vcombine.low %v1797, %v1829
    %v3816 = vcombine.high %v1797, %v1829
    %v3818 = vunpack.c.l.s4 1983009808
    %v3819 = vunpack.c.0.s8 %v3818
    %v3820 = vlaneseq
    %v3821 = vshrl.u32 %v3820, 7
    %v3822 = vsub.s32 %v3819, %v3821
    %v3823 = vrot.slane %v3815, %v3822
    %v3825 = vunpack.c.l.s4 1983009808
    %v3826 = vunpack.c.0.s8 %v3825
    %v3827 = vlaneseq
    %v3828 = vshrl.u32 %v3827, 7
    %v3829 = vsub.s32 %v3826, %v3828
    %v3830 = vrot.slane %v3816, %v3829
    %v3831 = vcombine.low %v1813, %v1845
    %v3832 = vcombine.high %v1813, %v1845
    %v3834 = vunpack.c.l.s4 1983009808
    %v3835 = vunpack.c.0.s8 %v3834
    %v3836 = vlaneseq
    %v3837 = vshrl.u32 %v3836, 7
    %v3838 = vsub.s32 %v3835, %v3837
    %v3839 = vrot.slane %v3831, %v3838
    %v3841 = vunpack.c.l.s4 1983009808
    %v3842 = vunpack.c.0.s8 %v3841
    %v3843 = vlaneseq
    %v3844 = vshrl.u32 %v3843, 7
    %v3845 = vsub.s32 %v3842, %v3844
    %v3846 = vrot.slane %v3832, %v3845
    %v3847 = vcombine.low %v1861, %v1893
    %v3848 = vcombine.high %v1861, %v1893
    %v3850 = vunpack.c.l.s4 1983009808
    %v3851 = vunpack.c.0.s8 %v3850
    %v3852 = vlaneseq
    %v3853 = vshrl.u32 %v3852, 7
    %v3854 = vsub.s32 %v3851, %v3853
    %v3855 = vrot.slane %v3847, %v3854
    %v3857 = vunpack.c.l.s4 1983009808
    %v3858 = vunpack.c.0.s8 %v3857
    %v3859 = vlaneseq
    %v3860 = vshrl.u32 %v3859, 7
    %v3861 = vsub.s32 %v3858, %v3860
    %v3862 = vrot.slane %v3848, %v3861
    %v3863 = vcombine.low %v1877, %v1909
    %v3864 = vcombine.high %v1877, %v1909
    %v3866 = vunpack.c.l.s4 1983009808
    %v3867 = vunpack.c.0.s8 %v3866
    %v3868 = vlaneseq
    %v3869 = vshrl.u32 %v3868, 7
    %v3870 = vsub.s32 %v3867, %v3869
    %v3871 = vrot.slane %v3863, %v3870
    %v3873 = vunpack.c.l.s4 1983009808
    %v3874 = vunpack.c.0.s8 %v3873
    %v3875 = vlaneseq
    %v3876 = vshrl.u32 %v3875, 7
    %v3877 = vsub.s32 %v3874, %v3876
    %v3878 = vrot.slane %v3864, %v3877
    %v3879 = vcombine.low %v3823, %v3839
    %v3880 = vcombine.high %v3823, %v3839
    %v3882 = vunpack.c.l.s4 1934713408
    %v3883 = vunpack.c.0.s8 %v3882
    %v3884 = vlaneseq
    %v3885 = vshrl.u32 %v3884, 7
    %v3886 = vsub.s32 %v3883, %v3885
    %v3887 = vrot.slane %v3879, %v3886
    %v3889 = vunpack.c.l.s4 1934713408
    %v3890 = vunpack.c.0.s8 %v3889
    %v3891 = vlaneseq
    %v3892 = vshrl.u32 %v3891, 7
    %v3893 = vsub.s32 %v3890, %v3892
    %v3894 = vrot.slane %v3880, %v3893
    %v3895 = vcombine.low %v3830, %v3846
    %v3896 = vcombine.high %v3830, %v3846
    %v3898 = vunpack.c.l.s4 1934713408
    %v3899 = vunpack.c.0.s8 %v3898
    %v3900 = vlaneseq
    %v3901 = vshrl.u32 %v3900, 7
    %v3902 = vsub.s32 %v3899, %v3901
    %v3903 = vrot.slane %v3895, %v3902
    %v3905 = vunpack.c.l.s4 1934713408
    %v3906 = vunpack.c.0.s8 %v3905
    %v3907 = vlaneseq
    %v3908 = vshrl.u32 %v3907, 7
    %v3909 = vsub.s32 %v3906, %v3908
    %v3910 = vrot.slane %v3896, %v3909
    %v3911 = vcombine.low %v3855, %v3871
    %v3912 = vcombine.high %v3855, %v3871
    %v3914 = vunpack.c.l.s4 1934713408
    %v3915 = vunpack.c.0.s8 %v3914
    %v3916 = vlaneseq
    %v3917 = vshrl.u32 %v3916, 7
    %v3918 = vsub.s32 %v3915, %v3917
    %v3919 = vrot.slane %v3911, %v3918
    %v3921 = vunpack.c.l.s4 1934713408
    %v3922 = vunpack.c.0.s8 %v3921
    %v3923 = vlaneseq
    %v3924 = vshrl.u32 %v3923, 7
    %v3925 = vsub.s32 %v3922, %v3924
    %v3926 = vrot.slane %v3912, %v3925
    %v3927 = vcombine.low %v3862, %v3878
    %v3928 = vcombine.high %v3862, %v3878
    %v3930 = vunpack.c.l.s4 1934713408
    %v3931 = vunpack.c.0.s8 %v3930
    %v3932 = vlaneseq
    %v3933 = vshrl.u32 %v3932, 7
    %v3934 = vsub.s32 %v3931, %v3933
    %v3935 = vrot.slane %v3927, %v3934
    %v3937 = vunpack.c.l.s4 1934713408
    %v3938 = vunpack.c.0.s8 %v3937
    %v3939 = vlaneseq
    %v3940 = vshrl.u32 %v3939, 7
    %v3941 = vsub.s32 %v3938, %v3940
    %v3942 = vrot.slane %v3928, %v3941
    %v3943 = vcombine.low %v3887, %v3919
    %v3944 = vcombine.high %v3887, %v3919
    %v3945 = vcombine.low %v3894, %v3926
    %v3946 = vcombine.high %v3894, %v3926
    %v3947 = vcombine.low %v3903, %v3935
    %v3948 = vcombine.high %v3903, %v3935
    %v3949 = vcombine.low %v3910, %v3942
    %v3950 = vcombine.high %v3910, %v3942
    %v3951 = vcombine.low %v1798, %v1830
    %v3952 = vcombine.high %v1798, %v1830
    %v3954 = vunpack.c.l.s4 1983009808
    %v3955 = vunpack.c.0.s8 %v3954
    %v3956 = vlaneseq
    %v3957 = vshrl.u32 %v3956, 7
    %v3958 = vsub.s32 %v3955, %v3957
    %v3959 = vrot.slane %v3951, %v3958
    %v3961 = vunpack.c.l.s4 1983009808
    %v3962 = vunpack.c.0.s8 %v3961
    %v3963 = vlaneseq
    %v3964 = vshrl.u32 %v3963, 7
    %v3965 = vsub.s32 %v3962, %v3964
    %v3966 = vrot.slane %v3952, %v3965
    %v3967 = vcombine.low %v1814, %v1846
    %v3968 = vcombine.high %v1814, %v1846
    %v3970 = vunpack.c.l.s4 1983009808
    %v3971 = vunpack.c.0.s8 %v3970
    %v3972 = vlaneseq
    %v3973 = vshrl.u32 %v3972, 7
    %v3974 = vsub.s32 %v3971, %v3973
    %v3975 = vrot.slane %v3967, %v3974
    %v3977 = vunpack.c.l.s4 1983009808
    %v3978 = vunpack.c.0.s8 %v3977
    %v3979 = vlaneseq
    %v3980 = vshrl.u32 %v3979, 7
    %v3981 = vsub.s32 %v3978, %v3980
    %v3982 = vrot.slane %v3968, %v3981
    %v3983 = vcombine.low %v1862, %v1894
    %v3984 = vcombine.high %v1862, %v1894
    %v3986 = vunpack.c.l.s4 1983009808
    %v3987 = vunpack.c.0.s8 %v3986
    %v3988 = vlaneseq
    %v3989 = vshrl.u32 %v3988, 7
    %v3990 = vsub.s32 %v3987, %v3989
    %v3991 = vrot.slane %v3983, %v3990
    %v3993 = vunpack.c.l.s4 1983009808
    %v3994 = vunpack.c.0.s8 %v3993
    %v3995 = vlaneseq
    %v3996 = vshrl.u32 %v3995, 7
    %v3997 = vsub.s32 %v3994, %v3996
    %v3998 = vrot.slane %v3984, %v3997
    %v3999 = vcombine.low %v1878, %v1910
    %v4000 = vcombine.high %v1878, %v1910
    %v4002 = vunpack.c.l.s4 1983009808
    %v4003 = vunpack.c.0.s8 %v4002
    %v4004 = vlaneseq
    %v4005 = vshrl.u32 %v4004, 7
    %v4006 = vsub.s32 %v4003, %v4005
    %v4007 = vrot.slane %v3999, %v4006
    %v4009 = vunpack.c.l.s4 1983009808
    %v4010 = vunpack.c.0.s8 %v4009
    %v4011 = vlaneseq
    %v4012 = vshrl.u32 %v4011, 7
    %v4013 = vsub.s32 %v4010, %v4012
    %v4014 = vrot.slane %v4000, %v4013
    %v4015 = vcombine.low %v3959, %v3975
    %v4016 = vcombine.high %v3959, %v3975
    %v4018 = vunpack.c.l.s4 1934713408
    %v4019 = vunpack.c.0.s8 %v4018
    %v4020 = vlaneseq
    %v4021 = vshrl.u32 %v4020, 7
    %v4022 = vsub.s32 %v4019, %v4021
    %v4023 = vrot.slane %v4015, %v4022
    %v4025 = vunpack.c.l.s4 1934713408
    %v4026 = vunpack.c.0.s8 %v4025
    %v4027 = vlaneseq
    %v4028 = vshrl.u32 %v4027, 7
    %v4029 = vsub.s32 %v4026, %v4028
    %v4030 = vrot.slane %v4016, %v4029
    %v4031 = vcombine.low %v3966, %v3982
    %v4032 = vcombine.high %v3966, %v3982
    %v4034 = vunpack.c.l.s4 1934713408
    %v4035 = vunpack.c.0.s8 %v4034
    %v4036 = vlaneseq
    %v4037 = vshrl.u32 %v4036, 7
    %v4038 = vsub.s32 %v4035, %v4037
    %v4039 = vrot.slane %v4031, %v4038
    %v4041 = vunpack.c.l.s4 1934713408
    %v4042 = vunpack.c.0.s8 %v4041
    %v4043 = vlaneseq
    %v4044 = vshrl.u32 %v4043, 7
    %v4045 = vsub.s32 %v4042, %v4044
    %v4046 = vrot.slane %v4032, %v4045
    %v4047 = vcombine.low %v3991, %v4007
    %v4048 = vcombine.high %v3991, %v4007
    %v4050 = vunpack.c.l.s4 1934713408
    %v4051 = vunpack.c.0.s8 %v4050
    %v4052 = vlaneseq
    %v4053 = vshrl.u32 %v4052, 7
    %v4054 = vsub.s32 %v4051, %v4053
    %v4055 = vrot.slane %v4047, %v4054
    %v4057 = vunpack.c.l.s4 1934713408
    %v4058 = vunpack.c.0.s8 %v4057
    %v4059 = vlaneseq
    %v4060 = vshrl.u32 %v4059, 7
    %v4061 = vsub.s32 %v4058, %v4060
    %v4062 = vrot.slane %v4048, %v4061
    %v4063 = vcombine.low %v3998, %v4014
    %v4064 = vcombine.high %v3998, %v4014
    %v4066 = vunpack.c.l.s4 1934713408
    %v4067 = vunpack.c.0.s8 %v4066
    %v4068 = vlaneseq
    %v4069 = vshrl.u32 %v4068, 7
    %v4070 = vsub.s32 %v4067, %v4069
    %v4071 = vrot.slane %v4063, %v4070
    %v4073 = vunpack.c.l.s4 1934713408
    %v4074 = vunpack.c.0.s8 %v4073
    %v4075 = vlaneseq
    %v4076 = vshrl.u32 %v4075, 7
    %v4077 = vsub.s32 %v4074, %v4076
    %v4078 = vrot.slane %v4064, %v4077
    %v4079 = vcombine.low %v4023, %v4055
    %v4080 = vcombine.high %v4023, %v4055
    %v4081 = vcombine.low %v4030, %v4062
    %v4082 = vcombine.high %v4030, %v4062
    %v4083 = vcombine.low %v4039, %v4071
    %v4084 = vcombine.high %v4039, %v4071
    %v4085 = vcombine.low %v4046, %v4078
    %v4086 = vcombine.high %v4046, %v4078
    %4088 = vrot.lane.b32.xlu0 %v2040, 3
    %v4089 = vpop.permute.xlu0 %4088
    %4092 = vrot.lane.b32.xlu0 %v2041, 6
    %v4093 = vpop.permute.xlu0 %4092
    %4096 = vrot.lane.b32.xlu0 %v2042, 9
    %v4097 = vpop.permute.xlu0 %4096
    %4100 = vrot.lane.b32.xlu0 %v2043, 12
    %v4101 = vpop.permute.xlu0 %4100
    %4104 = vrot.lane.b32.xlu0 %v2044, 15
    %v4105 = vpop.permute.xlu0 %4104
    %4108 = vrot.lane.b32.xlu0 %v2045, 18
    %v4109 = vpop.permute.xlu0 %4108
    %4112 = vrot.lane.b32.xlu0 %v2046, 21
    %v4113 = vpop.permute.xlu0 %4112
    %4116 = vrot.lane.b32.xlu0 %v2175, 24
    %v4117 = vpop.permute.xlu0 %4116
    %4120 = vrot.lane.b32.xlu0 %v2176, 27
    %v4121 = vpop.permute.xlu0 %4120
    %4124 = vrot.lane.b32.xlu0 %v2177, 30
    %v4125 = vpop.permute.xlu0 %4124
    %4128 = vrot.lane.b32.xlu0 %v2178, 33
    %v4129 = vpop.permute.xlu0 %4128
    %4132 = vrot.lane.b32.xlu0 %v2179, 36
    %v4133 = vpop.permute.xlu0 %4132
    %4136 = vrot.lane.b32.xlu0 %v2180, 39
    %v4137 = vpop.permute.xlu0 %4136
    %4140 = vrot.lane.b32.xlu0 %v2181, 42
    %v4141 = vpop.permute.xlu0 %4140
    %4144 = vrot.lane.b32.xlu0 %v2182, 45
    %v4145 = vpop.permute.xlu0 %4144
    %4148 = vrot.lane.b32.xlu0 %v2311, 48
    %v4149 = vpop.permute.xlu0 %4148
    %4152 = vrot.lane.b32.xlu0 %v2312, 51
    %v4153 = vpop.permute.xlu0 %4152
    %4156 = vrot.lane.b32.xlu0 %v2313, 54
    %v4157 = vpop.permute.xlu0 %4156
    %4160 = vrot.lane.b32.xlu0 %v2314, 57
    %v4161 = vpop.permute.xlu0 %4160
    %4164 = vrot.lane.b32.xlu0 %v2315, 60
    %v4165 = vpop.permute.xlu0 %4164
    %4168 = vrot.lane.b32.xlu0 %v2316, 63
    %v4169 = vpop.permute.xlu0 %4168
    %4172 = vrot.lane.b32.xlu0 %v2317, 66
    %v4173 = vpop.permute.xlu0 %4172
    %4176 = vrot.lane.b32.xlu0 %v2318, 69
    %v4177 = vpop.permute.xlu0 %4176
    %4180 = vrot.lane.b32.xlu0 %v2447, 72
    %v4181 = vpop.permute.xlu0 %4180
    %4184 = vrot.lane.b32.xlu0 %v2448, 75
    %v4185 = vpop.permute.xlu0 %4184
    %4188 = vrot.lane.b32.xlu0 %v2449, 78
    %v4189 = vpop.permute.xlu0 %4188
    %4192 = vrot.lane.b32.xlu0 %v2450, 81
    %v4193 = vpop.permute.xlu0 %4192
    %4196 = vrot.lane.b32.xlu0 %v2451, 84
    %v4197 = vpop.permute.xlu0 %4196
    %4200 = vrot.lane.b32.xlu0 %v2452, 87
    %v4201 = vpop.permute.xlu0 %4200
    %4204 = vrot.lane.b32.xlu0 %v2453, 90
    %v4205 = vpop.permute.xlu0 %4204
    %4208 = vrot.lane.b32.xlu0 %v2454, 93
    %v4209 = vpop.permute.xlu0 %4208
    %4212 = vrot.lane.b32.xlu0 %v2583, 96
    %v4213 = vpop.permute.xlu0 %4212
    %4216 = vrot.lane.b32.xlu0 %v2584, 99
    %v4217 = vpop.permute.xlu0 %4216
    %4220 = vrot.lane.b32.xlu0 %v2585, 102
    %v4221 = vpop.permute.xlu0 %4220
    %4224 = vrot.lane.b32.xlu0 %v2586, 105
    %v4225 = vpop.permute.xlu0 %4224
    %4228 = vrot.lane.b32.xlu0 %v2587, 108
    %v4229 = vpop.permute.xlu0 %4228
    %4232 = vrot.lane.b32.xlu0 %v2588, 111
    %v4233 = vpop.permute.xlu0 %4232
    %4236 = vrot.lane.b32.xlu0 %v2589, 114
    %v4237 = vpop.permute.xlu0 %4236
    %4240 = vrot.lane.b32.xlu0 %v2590, 117
    %v4241 = vpop.permute.xlu0 %4240
    %4244 = vrot.lane.b32.xlu0 %v2719, 120
    %v4245 = vpop.permute.xlu0 %4244
    %4248 = vrot.lane.b32.xlu0 %v2720, 123
    %v4249 = vpop.permute.xlu0 %4248
    %4252 = vrot.lane.b32.xlu0 %v2721, 126
    %v4253 = vpop.permute.xlu0 %4252
    %4256 = vrot.lane.b32.xlu0 %v2722, 1
    %v4257 = vpop.permute.xlu0 %4256
    %4260 = vrot.lane.b32.xlu0 %v2723, 4
    %v4261 = vpop.permute.xlu0 %4260
    %4264 = vrot.lane.b32.xlu0 %v2724, 7
    %v4265 = vpop.permute.xlu0 %4264
    %4268 = vrot.lane.b32.xlu0 %v2725, 10
    %v4269 = vpop.permute.xlu0 %4268
    %4272 = vrot.lane.b32.xlu0 %v2726, 13
    %v4273 = vpop.permute.xlu0 %4272
    %4276 = vrot.lane.b32.xlu0 %v2855, 16
    %v4277 = vpop.permute.xlu0 %4276
    %4280 = vrot.lane.b32.xlu0 %v2856, 19
    %v4281 = vpop.permute.xlu0 %4280
    %4284 = vrot.lane.b32.xlu0 %v2857, 22
    %v4285 = vpop.permute.xlu0 %4284
    %4288 = vrot.lane.b32.xlu0 %v2858, 25
    %v4289 = vpop.permute.xlu0 %4288
    %4292 = vrot.lane.b32.xlu0 %v2859, 28
    %v4293 = vpop.permute.xlu0 %4292
    %4296 = vrot.lane.b32.xlu0 %v2860, 31
    %v4297 = vpop.permute.xlu0 %4296
    %4300 = vrot.lane.b32.xlu0 %v2861, 34
    %v4301 = vpop.permute.xlu0 %4300
    %4304 = vrot.lane.b32.xlu0 %v2862, 37
    %v4305 = vpop.permute.xlu0 %4304
    %4308 = vrot.lane.b32.xlu0 %v2991, 40
    %v4309 = vpop.permute.xlu0 %4308
    %4312 = vrot.lane.b32.xlu0 %v2992, 43
    %v4313 = vpop.permute.xlu0 %4312
    %4316 = vrot.lane.b32.xlu0 %v2993, 46
    %v4317 = vpop.permute.xlu0 %4316
    %4320 = vrot.lane.b32.xlu0 %v2994, 49
    %v4321 = vpop.permute.xlu0 %4320
    %4324 = vrot.lane.b32.xlu0 %v2995, 52
    %v4325 = vpop.permute.xlu0 %4324
    %4328 = vrot.lane.b32.xlu0 %v2996, 55
    %v4329 = vpop.permute.xlu0 %4328
    %4332 = vrot.lane.b32.xlu0 %v2997, 58
    %v4333 = vpop.permute.xlu0 %4332
    %4336 = vrot.lane.b32.xlu0 %v2998, 61
    %v4337 = vpop.permute.xlu0 %4336
    %4340 = vrot.lane.b32.xlu0 %v3127, 64
    %v4341 = vpop.permute.xlu0 %4340
    %4344 = vrot.lane.b32.xlu0 %v3128, 67
    %v4345 = vpop.permute.xlu0 %4344
    %4348 = vrot.lane.b32.xlu0 %v3129, 70
    %v4349 = vpop.permute.xlu0 %4348
    %4352 = vrot.lane.b32.xlu0 %v3130, 73
    %v4353 = vpop.permute.xlu0 %4352
    %4356 = vrot.lane.b32.xlu0 %v3131, 76
    %v4357 = vpop.permute.xlu0 %4356
    %4360 = vrot.lane.b32.xlu0 %v3132, 79
    %v4361 = vpop.permute.xlu0 %4360
    %4364 = vrot.lane.b32.xlu0 %v3133, 82
    %v4365 = vpop.permute.xlu0 %4364
    %4368 = vrot.lane.b32.xlu0 %v3134, 85
    %v4369 = vpop.permute.xlu0 %4368
    %4372 = vrot.lane.b32.xlu0 %v3263, 88
    %v4373 = vpop.permute.xlu0 %4372
    %4376 = vrot.lane.b32.xlu0 %v3264, 91
    %v4377 = vpop.permute.xlu0 %4376
    %4380 = vrot.lane.b32.xlu0 %v3265, 94
    %v4381 = vpop.permute.xlu0 %4380
    %4384 = vrot.lane.b32.xlu0 %v3266, 97
    %v4385 = vpop.permute.xlu0 %4384
    %4388 = vrot.lane.b32.xlu0 %v3267, 100
    %v4389 = vpop.permute.xlu0 %4388
    %4392 = vrot.lane.b32.xlu0 %v3268, 103
    %v4393 = vpop.permute.xlu0 %4392
    %4396 = vrot.lane.b32.xlu0 %v3269, 106
    %v4397 = vpop.permute.xlu0 %4396
    %4400 = vrot.lane.b32.xlu0 %v3270, 109
    %v4401 = vpop.permute.xlu0 %4400
    %4404 = vrot.lane.b32.xlu0 %v3399, 112
    %v4405 = vpop.permute.xlu0 %4404
    %4408 = vrot.lane.b32.xlu0 %v3400, 115
    %v4409 = vpop.permute.xlu0 %4408
    %4412 = vrot.lane.b32.xlu0 %v3401, 118
    %v4413 = vpop.permute.xlu0 %4412
    %4416 = vrot.lane.b32.xlu0 %v3402, 121
    %v4417 = vpop.permute.xlu0 %4416
    %4420 = vrot.lane.b32.xlu0 %v3403, 124
    %v4421 = vpop.permute.xlu0 %4420
    %4424 = vrot.lane.b32.xlu0 %v3404, 127
    %v4425 = vpop.permute.xlu0 %4424
    %4428 = vrot.lane.b32.xlu0 %v3405, 2
    %v4429 = vpop.permute.xlu0 %4428
    %4432 = vrot.lane.b32.xlu0 %v3406, 5
    %v4433 = vpop.permute.xlu0 %4432
    %4436 = vrot.lane.b32.xlu0 %v3535, 8
    %v4437 = vpop.permute.xlu0 %4436
    %4440 = vrot.lane.b32.xlu0 %v3536, 11
    %v4441 = vpop.permute.xlu0 %4440
    %4444 = vrot.lane.b32.xlu0 %v3537, 14
    %v4445 = vpop.permute.xlu0 %4444
    %4448 = vrot.lane.b32.xlu0 %v3538, 17
    %v4449 = vpop.permute.xlu0 %4448
    %4452 = vrot.lane.b32.xlu0 %v3539, 20
    %v4453 = vpop.permute.xlu0 %4452
    %4456 = vrot.lane.b32.xlu0 %v3540, 23
    %v4457 = vpop.permute.xlu0 %4456
    %4460 = vrot.lane.b32.xlu0 %v3541, 26
    %v4461 = vpop.permute.xlu0 %4460
    %4464 = vrot.lane.b32.xlu0 %v3542, 29
    %v4465 = vpop.permute.xlu0 %4464
    %4468 = vrot.lane.b32.xlu0 %v3671, 32
    %v4469 = vpop.permute.xlu0 %4468
    %4472 = vrot.lane.b32.xlu0 %v3672, 35
    %v4473 = vpop.permute.xlu0 %4472
    %4476 = vrot.lane.b32.xlu0 %v3673, 38
    %v4477 = vpop.permute.xlu0 %4476
    %4480 = vrot.lane.b32.xlu0 %v3674, 41
    %v4481 = vpop.permute.xlu0 %4480
    %4484 = vrot.lane.b32.xlu0 %v3675, 44
    %v4485 = vpop.permute.xlu0 %4484
    %4488 = vrot.lane.b32.xlu0 %v3676, 47
    %v4489 = vpop.permute.xlu0 %4488
    %4492 = vrot.lane.b32.xlu0 %v3677, 50
    %v4493 = vpop.permute.xlu0 %4492
    %4496 = vrot.lane.b32.xlu0 %v3678, 53
    %v4497 = vpop.permute.xlu0 %4496
    %4500 = vrot.lane.b32.xlu0 %v3807, 56
    %v4501 = vpop.permute.xlu0 %4500
    %4504 = vrot.lane.b32.xlu0 %v3808, 59
    %v4505 = vpop.permute.xlu0 %4504
    %4508 = vrot.lane.b32.xlu0 %v3809, 62
    %v4509 = vpop.permute.xlu0 %4508
    %4512 = vrot.lane.b32.xlu0 %v3810, 65
    %v4513 = vpop.permute.xlu0 %4512
    %4516 = vrot.lane.b32.xlu0 %v3811, 68
    %v4517 = vpop.permute.xlu0 %4516
    %4520 = vrot.lane.b32.xlu0 %v3812, 71
    %v4521 = vpop.permute.xlu0 %4520
    %4524 = vrot.lane.b32.xlu0 %v3813, 74
    %v4525 = vpop.permute.xlu0 %4524
    %4528 = vrot.lane.b32.xlu0 %v3814, 77
    %v4529 = vpop.permute.xlu0 %4528
    %4532 = vrot.lane.b32.xlu0 %v3943, 80
    %v4533 = vpop.permute.xlu0 %4532
    %4536 = vrot.lane.b32.xlu0 %v3944, 83
    %v4537 = vpop.permute.xlu0 %4536
    %4540 = vrot.lane.b32.xlu0 %v3945, 86
    %v4541 = vpop.permute.xlu0 %4540
    %4544 = vrot.lane.b32.xlu0 %v3946, 89
    %v4545 = vpop.permute.xlu0 %4544
    %4548 = vrot.lane.b32.xlu0 %v3947, 92
    %v4549 = vpop.permute.xlu0 %4548
    %4552 = vrot.lane.b32.xlu0 %v3948, 95
    %v4553 = vpop.permute.xlu0 %4552
    %4556 = vrot.lane.b32.xlu0 %v3949, 98
    %v4557 = vpop.permute.xlu0 %4556
    %4560 = vrot.lane.b32.xlu0 %v3950, 101
    %v4561 = vpop.permute.xlu0 %4560
    %4564 = vrot.lane.b32.xlu0 %v4079, 104
    %v4565 = vpop.permute.xlu0 %4564
    %4568 = vrot.lane.b32.xlu0 %v4080, 107
    %v4569 = vpop.permute.xlu0 %4568
    %4572 = vrot.lane.b32.xlu0 %v4081, 110
    %v4573 = vpop.permute.xlu0 %4572
    %4576 = vrot.lane.b32.xlu0 %v4082, 113
    %v4577 = vpop.permute.xlu0 %4576
    %4580 = vrot.lane.b32.xlu0 %v4083, 116
    %v4581 = vpop.permute.xlu0 %4580
    %4584 = vrot.lane.b32.xlu0 %v4084, 119
    %v4585 = vpop.permute.xlu0 %4584
    %4588 = vrot.lane.b32.xlu0 %v4085, 122
    %v4589 = vpop.permute.xlu0 %4588
    %4592 = vrot.lane.b32.xlu0 %v4086, 125
    %v4593 = vpop.permute.xlu0 %4592
    %vm4595 = vcmask 23552
    %v4596 = vsel %vm4595, %v2039, %v4089
    %vm4597 = vcmask 48128
    %v4598 = vsel %vm4597, %v4596, %v4093
    %vm4599 = vcmask 72704
    %v4600 = vsel %vm4599, %v4598, %v4097
    %vm4601 = vcmask 97280
    %v4602 = vsel %vm4601, %v4600, %v4101
    %vm4603 = vcmask 121856
    %v4604 = vsel %vm4603, %v4602, %v4105
    %vm4605 = vcmask 146432
    %v4606 = vsel %vm4605, %v4604, %v4109
    %vm4607 = vcmask 171008
    %v4608 = vsel %vm4607, %v4606, %v4113
    %vm4609 = vcmask 195584
    %v4610 = vsel %vm4609, %v4608, %v4117
    %vm4611 = vcmask 220160
    %v4612 = vsel %vm4611, %v4610, %v4121
    %vm4613 = vcmask 244736
    %v4614 = vsel %vm4613, %v4612, %v4125
    %vm4615 = vcmask 269312
    %v4616 = vsel %vm4615, %v4614, %v4129
    %vm4617 = vcmask 293888
    %v4618 = vsel %vm4617, %v4616, %v4133
    %vm4619 = vcmask 318464
    %v4620 = vsel %vm4619, %v4618, %v4137
    %vm4621 = vcmask 343040
    %v4622 = vsel %vm4621, %v4620, %v4141
    %vm4623 = vcmask 367616
    %v4624 = vsel %vm4623, %v4622, %v4145
    %vm4625 = vcmask 392192
    %v4626 = vsel %vm4625, %v4624, %v4149
    %vm4627 = vcmask 416768
    %v4628 = vsel %vm4627, %v4626, %v4153
    %vm4629 = vcmask 441344
    %v4630 = vsel %vm4629, %v4628, %v4157
    %vm4631 = vcmask 465920
    %v4632 = vsel %vm4631, %v4630, %v4161
    %vm4633 = vcmask 490496
    %v4634 = vsel %vm4633, %v4632, %v4165
    %vm4635 = vcmask 515072
    %v4636 = vsel %vm4635, %v4634, %v4169
    %vm4637 = vcmask 539648
    %v4638 = vsel %vm4637, %v4636, %v4173
    %vm4639 = vcmask 564224
    %v4640 = vsel %vm4639, %v4638, %v4177
    %vm4641 = vcmask 588800
    %v4642 = vsel %vm4641, %v4640, %v4181
    %vm4643 = vcmask 613376
    %v4644 = vsel %vm4643, %v4642, %v4185
    %vm4645 = vcmask 637952
    %v4646 = vsel %vm4645, %v4644, %v4189
    %vm4647 = vcmask 662528
    %v4648 = vsel %vm4647, %v4646, %v4193
    %vm4649 = vcmask 687104
    %v4650 = vsel %vm4649, %v4648, %v4197
    %vm4651 = vcmask 711680
    %v4652 = vsel %vm4651, %v4650, %v4201
    %vm4653 = vcmask 736256
    %v4654 = vsel %vm4653, %v4652, %v4205
    %vm4655 = vcmask 760832
    %v4656 = vsel %vm4655, %v4654, %v4209
    %vm4657 = vcmask 785408
    %v4658 = vsel %vm4657, %v4656, %v4213
    %vm4659 = vcmask 809984
    %v4660 = vsel %vm4659, %v4658, %v4217
    %vm4661 = vcmask 834560
    %v4662 = vsel %vm4661, %v4660, %v4221
    %vm4663 = vcmask 859136
    %v4664 = vsel %vm4663, %v4662, %v4225
    %vm4665 = vcmask 883712
    %v4666 = vsel %vm4665, %v4664, %v4229
    %vm4667 = vcmask 908288
    %v4668 = vsel %vm4667, %v4666, %v4233
    %vm4669 = vcmask 932864
    %v4670 = vsel %vm4669, %v4668, %v4237
    %vm4671 = vcmask 957440
    %v4672 = vsel %vm4671, %v4670, %v4241
    %vm4673 = vcmask 982016
    %v4674 = vsel %vm4673, %v4672, %v4245
    %vm4675 = vcmask 1006592
    %v4676 = vsel %vm4675, %v4674, %v4249
    %vm4677 = vcmask 1031168
    %v4678 = vsel %vm4677, %v4676, %v4253
    %v4679 = vsel %vm1653, %v4253, %v4257
    %vm4680 = vcmask 31744
    %v4681 = vsel %vm4680, %v4679, %v4261
    %vm4682 = vcmask 56320
    %v4683 = vsel %vm4682, %v4681, %v4265
    %vm4684 = vcmask 80896
    %v4685 = vsel %vm4684, %v4683, %v4269
    %vm4686 = vcmask 105472
    %v4687 = vsel %vm4686, %v4685, %v4273
    %vm4688 = vcmask 130048
    %v4689 = vsel %vm4688, %v4687, %v4277
    %vm4690 = vcmask 154624
    %v4691 = vsel %vm4690, %v4689, %v4281
    %vm4692 = vcmask 179200
    %v4693 = vsel %vm4692, %v4691, %v4285
    %vm4694 = vcmask 203776
    %v4695 = vsel %vm4694, %v4693, %v4289
    %vm4696 = vcmask 228352
    %v4697 = vsel %vm4696, %v4695, %v4293
    %vm4698 = vcmask 252928
    %v4699 = vsel %vm4698, %v4697, %v4297
    %vm4700 = vcmask 277504
    %v4701 = vsel %vm4700, %v4699, %v4301
    %vm4702 = vcmask 302080
    %v4703 = vsel %vm4702, %v4701, %v4305
    %vm4704 = vcmask 326656
    %v4705 = vsel %vm4704, %v4703, %v4309
    %vm4706 = vcmask 351232
    %v4707 = vsel %vm4706, %v4705, %v4313
    %vm4708 = vcmask 375808
    %v4709 = vsel %vm4708, %v4707, %v4317
    %vm4710 = vcmask 400384
    %v4711 = vsel %vm4710, %v4709, %v4321
    %vm4712 = vcmask 424960
    %v4713 = vsel %vm4712, %v4711, %v4325
    %vm4714 = vcmask 449536
    %v4715 = vsel %vm4714, %v4713, %v4329
    %vm4716 = vcmask 474112
    %v4717 = vsel %vm4716, %v4715, %v4333
    %vm4718 = vcmask 498688
    %v4719 = vsel %vm4718, %v4717, %v4337
    %vm4720 = vcmask 523264
    %v4721 = vsel %vm4720, %v4719, %v4341
    %vm4722 = vcmask 547840
    %v4723 = vsel %vm4722, %v4721, %v4345
    %vm4724 = vcmask 572416
    %v4725 = vsel %vm4724, %v4723, %v4349
    %vm4726 = vcmask 596992
    %v4727 = vsel %vm4726, %v4725, %v4353
    %vm4728 = vcmask 621568
    %v4729 = vsel %vm4728, %v4727, %v4357
    %vm4730 = vcmask 646144
    %v4731 = vsel %vm4730, %v4729, %v4361
    %vm4732 = vcmask 670720
    %v4733 = vsel %vm4732, %v4731, %v4365
    %vm4734 = vcmask 695296
    %v4735 = vsel %vm4734, %v4733, %v4369
    %vm4736 = vcmask 719872
    %v4737 = vsel %vm4736, %v4735, %v4373
    %vm4738 = vcmask 744448
    %v4739 = vsel %vm4738, %v4737, %v4377
    %vm4740 = vcmask 769024
    %v4741 = vsel %vm4740, %v4739, %v4381
    %vm4742 = vcmask 793600
    %v4743 = vsel %vm4742, %v4741, %v4385
    %vm4744 = vcmask 818176
    %v4745 = vsel %vm4744, %v4743, %v4389
    %vm4746 = vcmask 842752
    %v4747 = vsel %vm4746, %v4745, %v4393
    %vm4748 = vcmask 867328
    %v4749 = vsel %vm4748, %v4747, %v4397
    %vm4750 = vcmask 891904
    %v4751 = vsel %vm4750, %v4749, %v4401
    %vm4752 = vcmask 916480
    %v4753 = vsel %vm4752, %v4751, %v4405
    %vm4754 = vcmask 941056
    %v4755 = vsel %vm4754, %v4753, %v4409
    %vm4756 = vcmask 965632
    %v4757 = vsel %vm4756, %v4755, %v4413
    %vm4758 = vcmask 990208
    %v4759 = vsel %vm4758, %v4757, %v4417
    %vm4760 = vcmask 1014784
    %v4761 = vsel %vm4760, %v4759, %v4421
    %vm4762 = vcmask 1039360
    %v4763 = vsel %vm4762, %v4761, %v4425
    %v4764 = vsel %vm1782, %v4425, %v4429
    %vm4765 = vcmask 39936
    %v4766 = vsel %vm4765, %v4764, %v4433
    %vm4767 = vcmask 64512
    %v4768 = vsel %vm4767, %v4766, %v4437
    %vm4769 = vcmask 89088
    %v4770 = vsel %vm4769, %v4768, %v4441
    %vm4771 = vcmask 113664
    %v4772 = vsel %vm4771, %v4770, %v4445
    %vm4773 = vcmask 138240
    %v4774 = vsel %vm4773, %v4772, %v4449
    %vm4775 = vcmask 162816
    %v4776 = vsel %vm4775, %v4774, %v4453
    %vm4777 = vcmask 187392
    %v4778 = vsel %vm4777, %v4776, %v4457
    %vm4779 = vcmask 211968
    %v4780 = vsel %vm4779, %v4778, %v4461
    %vm4781 = vcmask 236544
    %v4782 = vsel %vm4781, %v4780, %v4465
    %vm4783 = vcmask 261120
    %v4784 = vsel %vm4783, %v4782, %v4469
    %vm4785 = vcmask 285696
    %v4786 = vsel %vm4785, %v4784, %v4473
    %vm4787 = vcmask 310272
    %v4788 = vsel %vm4787, %v4786, %v4477
    %vm4789 = vcmask 334848
    %v4790 = vsel %vm4789, %v4788, %v4481
    %vm4791 = vcmask 359424
    %v4792 = vsel %vm4791, %v4790, %v4485
    %vm4793 = vcmask 384000
    %v4794 = vsel %vm4793, %v4792, %v4489
    %vm4795 = vcmask 408576
    %v4796 = vsel %vm4795, %v4794, %v4493
    %vm4797 = vcmask 433152
    %v4798 = vsel %vm4797, %v4796, %v4497
    %vm4799 = vcmask 457728
    %v4800 = vsel %vm4799, %v4798, %v4501
    %vm4801 = vcmask 482304
    %v4802 = vsel %vm4801, %v4800, %v4505
    %vm4803 = vcmask 506880
    %v4804 = vsel %vm4803, %v4802, %v4509
    %vm4805 = vcmask 531456
    %v4806 = vsel %vm4805, %v4804, %v4513
    %vm4807 = vcmask 556032
    %v4808 = vsel %vm4807, %v4806, %v4517
    %vm4809 = vcmask 580608
    %v4810 = vsel %vm4809, %v4808, %v4521
    %vm4811 = vcmask 605184
    %v4812 = vsel %vm4811, %v4810, %v4525
    %vm4813 = vcmask 629760
    %v4814 = vsel %vm4813, %v4812, %v4529
    %vm4815 = vcmask 654336
    %v4816 = vsel %vm4815, %v4814, %v4533
    %vm4817 = vcmask 678912
    %v4818 = vsel %vm4817, %v4816, %v4537
    %vm4819 = vcmask 703488
    %v4820 = vsel %vm4819, %v4818, %v4541
    %vm4821 = vcmask 728064
    %v4822 = vsel %vm4821, %v4820, %v4545
    %vm4823 = vcmask 752640
    %v4824 = vsel %vm4823, %v4822, %v4549
    %vm4825 = vcmask 777216
    %v4826 = vsel %vm4825, %v4824, %v4553
    %vm4827 = vcmask 801792
    %v4828 = vsel %vm4827, %v4826, %v4557
    %vm4829 = vcmask 826368
    %v4830 = vsel %vm4829, %v4828, %v4561
    %vm4831 = vcmask 850944
    %v4832 = vsel %vm4831, %v4830, %v4565
    %vm4833 = vcmask 875520
    %v4834 = vsel %vm4833, %v4832, %v4569
    %vm4835 = vcmask 900096
    %v4836 = vsel %vm4835, %v4834, %v4573
    %vm4837 = vcmask 924672
    %v4838 = vsel %vm4837, %v4836, %v4577
    %vm4839 = vcmask 949248
    %v4840 = vsel %vm4839, %v4838, %v4581
    %vm4841 = vcmask 973824
    %v4842 = vsel %vm4841, %v4840, %v4585
    %vm4843 = vcmask 998400
    %v4844 = vsel %vm4843, %v4842, %v4589
    %vm4845 = vcmask 1022976
    %v4846 = vsel %vm4845, %v4844, %v4593
    %4847 = vst [vmem:[#allocation5] sm:$0xff] %v4678
    %4848 = vst [vmem:[#allocation5 + $0x8] sm:$0xff] %v4763
    %4849 = vst [vmem:[#allocation5 + $0x10] sm:$0xff] %v4846
    // Predicated region
    $region10: #{tpu_custom_call.1} parent=1 // pred_check
      _
    $region11: #{tpu_custom_call.1} parent=1 // pred_check_branch
      %4851 = sbr.rel (0) target = $region13
    $region12: #{tpu_custom_call.1} parent=1 // pred_region
      %s4853 = ssub.s32 384, 384
      %4854 = vsyncadd [#allocation4], %s4853
      %s4856 = sshll.u32 [#allocation5], 4
      %s4857 = int_to_ptr.vmem [resolvable:$true] %s4856
      %4859 = dma.vmem_to_hbm [thread:$0]  %s4857, 384, %s1, [#allocation4]
    $region13: #{tpu_custom_call.1} parent=1 // pred_fallthru
      _
    // Predicated region
    $region14: #{tpu_custom_call.1} parent=1 // pred_check
      _
    $region15: #{tpu_custom_call.1} parent=1 // pred_check_branch
      %4861 = sbr.rel (0) target = $region17
    $region16: #{tpu_custom_call.1} parent=1 // pred_region
      %4862 = dma.done [#allocation4], 384
    $region17: #{tpu_custom_call.1} parent=1 // pred_fallthru
      _
    %4863 = vsyncpa [#allocation3], 1
    %4864 = vsyncpa [#allocation4], 1

// kernel: tpu_custom_call.1
$region0: #{tpu_custom_call.1}
  #allocation0 [shape = 'u32[]', space=smem, size = 0x4, offset = 0x4, fixed_abs, tag = 'smem constant byte address 0x4 - core index']
  #allocation1 [shape = 'u32[144,128]{1,0:T(1,128)}', space=vmem, size = 0x12000, scoped, tag = 'internal scratch']
  %s0 = inlined_call_operand.hbm [shape: f32[2,3,8,128], index: 0, kind: input, shape index: {}]
  %s1 = inlined_call_operand.hbm [shape: f32[2,3,8,128], index: 1, kind: output, shape index: {}]
  %s2 = sld [smem:[#allocation0]]
  $region41: #{tpu_custom_call.1} parent=0
    _
  %s4 = ssub.s32 1, %s2
  %s5 = scalar_select 0, %s4, %s2
  $region1: #{tpu_custom_call.1} parent=0
    #allocation2 [shape = 'u8[24576]{0}', space=vmem, size = 0x6000, scoped, tag = 'input window, operand 0']
    #allocation3 [shape = 's32[2]{0}', space=sflag, size = 0x8, scoped, tag = 'scoped memory for tpu_custom_call.1']
    #allocation4 [shape = 's32[2]{0}', space=sflag, size = 0x8, scoped, tag = 'scoped memory for tpu_custom_call.1']
    #allocation5 [shape = 'u8[24576]{0}', space=vmem, size = 0x6000, scoped, tag = 'output window, operand 0']
    %6 = vsyncpa [#allocation3], 0
    %s7 = scalar_lea.sflag [#allocation3], 1
    %8 = vsyncpa %s7, 0
    %9 = vsyncpa [#allocation4], 0
    %s10 = scalar_lea.sflag [#allocation4], 1
    %11 = vsyncpa %s10, 0
    loop: start=0, step=1, limit=4
    $region2: #{tpu_custom_call.1} parent=1 // loop_pre_header
      _
    $region3: #{tpu_custom_call.1} parent=1 // loop_header
      %s13 = sphi 0, %s17
      %p14 = scmp.ge.s32.totalorder %s13, 4
      %s20 = sphi 0, %s32
      %s21 = sphi 0, %s28
      %s22 = sphi 0, %s20
      %s23 = sphi 0, %s21
      %s24 = sphi 0, %s22
      %s25 = sphi 0, %s23
      %s37 = sphi 0, %s39
      %s40 = sphi 0, %s37
      %s41 = sphi 0, %s40
      %s57 = sphi 0, %s41
      %s65 = sphi 0, %s67
      %s68 = sphi 0, %s65
      %s69 = sphi 0, %s68
      %s85 = sphi 0, %s69
    $region4: #{tpu_custom_call.1} parent=1 // loop_header_branch
      %16 = sbr.rel (%p14) target = $region8
    $region5: #{tpu_custom_call.1} parent=1 // loop_body
      %s18 = ssub.s32 %s13, 1
      %s19 = ssub.s32 %s13, 2
      %s26 = sadd.s32 1, %s21
      %p27 = scmp.ge.s32.totalorder %s26, 1
      %s28 = scalar_select %p27, 0, %s26
      %s29 = sadd.s32 1, %s20
      %s30 = scalar_select %p27, %s29, %s20
      %p31 = scmp.ge.s32.totalorder %s30, 2
      %s32 = scalar_select %p31, 0, %s30
      %s33 = ssub.s32 %s20, %s32
      %s34 = ssub.s32 %s21, %s28
      %s35 = sor.u32 %s33, %s34
      %p36 = scmp.eq.s32.totalorder %s35, 0
      %s38 = sadd.s32 %s37, 1
      %s39 = scalar_select %p36, %s37, %s38
      %p42 = pneg %p36
      %p43 = scmp.eq.s32.totalorder %s13, 1
      %p44 = por %p42, %p43
      %p45 = scmp.ne.s32.totalorder %s37, %s40
      %p46 = scmp.eq.s32.totalorder %s13, 0
      %p47 = por %p45, %p46
      %p48 = scmp.ne.s32.totalorder %s37, %s40
      %p49 = scmp.eq.s32.totalorder %s18, 1
      %p50 = por %p48, %p49
      %p51 = scmp.ne.s32.totalorder %s40, %s41
      %p52 = scmp.eq.s32.totalorder %s18, 0
      %p53 = por %p51, %p52
      %p54 = scmp.ne.s32.totalorder %s40, %s41
      %p55 = scmp.eq.s32.totalorder %s19, 1
      %p56 = por %p54, %p55
      %p58 = scmp.ne.s32.totalorder %s41, %s57
      %p59 = scmp.eq.s32.totalorder %s19, 0
      %p60 = por %p58, %p59
      %s61 = ssub.s32 %s20, %s32
      %s62 = ssub.s32 %s21, %s28
      %s63 = sor.u32 %s61, %s62
      %p64 = scmp.eq.s32.totalorder %s63, 0
      %s66 = sadd.s32 %s65, 1
      %s67 = scalar_select %p64, %s65, %s66
      %p70 = pneg %p64
      %p71 = scmp.eq.s32.totalorder %s13, 1
      %p72 = por %p70, %p71
      %p73 = scmp.ne.s32.totalorder %s65, %s68
      %p74 = scmp.eq.s32.totalorder %s13, 0
      %p75 = por %p73, %p74
      %p76 = scmp.ne.s32.totalorder %s65, %s68
      %p77 = scmp.eq.s32.totalorder %s18, 1
      %p78 = por %p76, %p77
      %p79 = scmp.ne.s32.totalorder %s68, %s69
      %p80 = scmp.eq.s32.totalorder %s18, 0
      %p81 = por %p79, %p80
      %p82 = scmp.ne.s32.totalorder %s68, %s69
      %p83 = scmp.eq.s32.totalorder %s19, 1
      %p84 = por %p82, %p83
      %p86 = scmp.ne.s32.totalorder %s69, %s85
      %p87 = scmp.eq.s32.totalorder %s19, 0
      %p88 = por %p86, %p87
      %p89 = scmp.le.s32.totalorder 1, %s13
      %p90 = scmp.lt.s32.totalorder %s13, 3
      %p91 = pnand %p89, %p90
      %p92 = pneg %p91
      // Predicated region
      $region9: #{tpu_custom_call.1} parent=5 // pred_check
        _
      $region10: #{tpu_custom_call.1} parent=5 // pred_check_branch
        %94 = sbr.rel (%p91) target = $region12
      $region11: #{tpu_custom_call.1} parent=5 // pred_region
        %s95 = ssub.s32 %s13, 1
      $region12: #{tpu_custom_call.1} parent=5 // pred_fallthru
        _
      %p96 = scmp.lt.s32.totalorder %s13, 2
      // Predicated region
      $region13: #{tpu_custom_call.1} parent=5 // pred_check
        %p97 = pneg %p96
      $region14: #{tpu_custom_call.1} parent=5 // pred_check_branch
        %99 = sbr.rel (%p97) target = $region16
      $region15: #{tpu_custom_call.1} parent=5 // pred_region
        // Predicated region
        $region17: #{tpu_custom_call.1} parent=15 // pred_check
          %p100 = pneg %p47
        $region18: #{tpu_custom_call.1} parent=15 // pred_check_branch
          %102 = sbr.rel (%p100) target = $region20
        $region19: #{tpu_custom_call.1} parent=15 // pred_region
          %s103 = sand.u32 %s37, 1
          %s104 = scalar_lea.sflag [#allocation3], %s103
          %s105 = sand.u32 %s37, 1
          %s106 = smul.addr %s105, 24
          %s107 = scalar_lea.vmem [#allocation2], %s106
          %s109 = ssub.s32 384, 384
          %110 = vsyncadd %s104, %s109
          %s111 = smul.addr %s20, 3
          %s112 = sadd.s32 %s21, %s111
          %s113 = smul.addr %s112, 128
          %s114 = scalar_lea.hbm %s0, %s113
          %s115 = sshll.u32 %s107, 4
          %s116 = int_to_ptr.vmem [resolvable:$true] %s115
          %121 = dma.hbm_to_vmem [thread:$0]  %s114, 384, %s116, %s104, 128, 128, 8
        $region20: #{tpu_custom_call.1} parent=15 // pred_fallthru
          _
      $region16: #{tpu_custom_call.1} parent=5 // pred_fallthru
        _
      %p122 = scmp.le.s32.totalorder 1, %s13
      %p123 = scmp.lt.s32.totalorder %s13, 3
      %p124 = pnand %p122, %p123
      %p125 = pneg %p124
      // Predicated region
      $region21: #{tpu_custom_call.1} parent=5 // pred_check
        _
      $region22: #{tpu_custom_call.1} parent=5 // pred_check_branch
        %127 = sbr.rel (%p124) target = $region24
      $region23: #{tpu_custom_call.1} parent=5 // pred_region
        %s128 = ssub.s32 %s13, 1
        %s129 = sand.u32 %s40, 1
        %s130 = scalar_lea.sflag [#allocation3], %s129
        %s131 = sand.u32 %s40, 1
        %s132 = smul.addr %s131, 24
        %s133 = scalar_lea.vmem [#allocation2], %s132
        // Predicated region
        $region25: #{tpu_custom_call.1} parent=23 // pred_check
          %p134 = pneg %p53
        $region26: #{tpu_custom_call.1} parent=23 // pred_check_branch
          %136 = sbr.rel (%p134) target = $region28
        $region27: #{tpu_custom_call.1} parent=23 // pred_region
          %137 = dma.done %s130, 384
        $region28: #{tpu_custom_call.1} parent=23 // pred_fallthru
          _
        %s138 = sand.u32 %s40, 1
        %s139 = scalar_lea.sflag [#allocation3], %s138
        %s140 = sand.u32 %s40, 1
        %s141 = smul.addr %s140, 24
        %s142 = scalar_lea.vmem [#allocation2], %s141
        %p143 = pneg %p53
        %p144 = pneg %p50
        %p145 = pneg %p81
        %p146 = pneg %p78
        %s147 = sand.u32 %s68, 1
        %s148 = scalar_lea.sflag [#allocation4], %s147
        %s149 = sand.u32 %s68, 1
        %s150 = smul.addr %s149, 24
        %s151 = scalar_lea.vmem [#allocation5], %s150
        %v152 = vld [vmem:[%s133] sm:$0xff]
        %s153 = scalar_lea.vmem %s133, 8 [#allocation2]
        %v154 = vld [vmem:[%s153] sm:$0xff]
        %s155 = scalar_lea.vmem %s133, 16 [#allocation2]
        %v156 = vld [vmem:[%s155] sm:$0xff]
        %v157 = vmul.f32 %v152, 0.299
        %v158 = vmul.f32 %v154, 0.587
        %v159 = vadd.f32 %v157, %v158
        %v160 = vmul.f32 %v156, 0.114
        %v161 = vadd.f32 %v159, %v160
        %v162 = vmul.f32 %v152, -0.168736
        %v163 = vmul.f32 %v154, 0.331264
        %v164 = vsub.f32 %v162, %v163
        %v165 = vmul.f32 %v156, 0.5
        %v166 = vadd.f32 %v164, %v165
        %v167 = vadd.f32 %v166, 128.0
        %v168 = vmul.f32 %v152, 0.5
        %v169 = vmul.f32 %v154, 0.418688
        %v170 = vsub.f32 %v168, %v169
        %v171 = vmul.f32 %v156, 0.081312
        %v172 = vsub.f32 %v170, %v171
        %v173 = vadd.f32 %v172, 128.0
        %174 = vst [vmem:[%s151] sm:$0xff] %v161
        %s175 = scalar_lea.vmem %s151, 8 [#allocation5]
        %176 = vst [vmem:[%s175] sm:$0xff] %v167
        %s177 = scalar_lea.vmem %s151, 16 [#allocation5]
        %178 = vst [vmem:[%s177] sm:$0xff] %v173
        %s179 = sand.u32 %s68, 1
        %s180 = scalar_lea.sflag [#allocation4], %s179
        %s181 = sand.u32 %s68, 1
        %s182 = smul.addr %s181, 24
        %s183 = scalar_lea.vmem [#allocation5], %s182
        // Predicated region
        $region29: #{tpu_custom_call.1} parent=23 // pred_check
          %p184 = pneg %p78
        $region30: #{tpu_custom_call.1} parent=23 // pred_check_branch
          %186 = sbr.rel (%p184) target = $region32
        $region31: #{tpu_custom_call.1} parent=23 // pred_region
          %s188 = ssub.s32 384, 384
          %189 = vsyncadd %s180, %s188
          %s190 = smul.addr %s22, 3
          %s191 = sadd.s32 %s23, %s190
          %s192 = smul.addr %s191, 128
          %s193 = scalar_lea.hbm %s1, %s192
          %s194 = sshll.u32 %s183, 4
          %s195 = int_to_ptr.vmem [resolvable:$true] %s194
          %200 = dma.vmem_to_hbm [thread:$0]  %s195, 384, %s193, %s180, 128, 128, 8
        $region32: #{tpu_custom_call.1} parent=23 // pred_fallthru
          _
      $region24: #{tpu_custom_call.1} parent=5 // pred_fallthru
        _
      %p201 = scmp.le.s32.totalorder 2, %s13
      // Predicated region
      $region33: #{tpu_custom_call.1} parent=5 // pred_check
        %p202 = pneg %p201
      $region34: #{tpu_custom_call.1} parent=5 // pred_check_branch
        %204 = sbr.rel (%p202) target = $region36
      $region35: #{tpu_custom_call.1} parent=5 // pred_region
        %s205 = ssub.s32 %s13, 2
        // Predicated region
        $region37: #{tpu_custom_call.1} parent=35 // pred_check
          %p206 = pneg %p84
        $region38: #{tpu_custom_call.1} parent=35 // pred_check_branch
          %208 = sbr.rel (%p206) target = $region40
        $region39: #{tpu_custom_call.1} parent=35 // pred_region
          %s209 = sand.u32 %s69, 1
          %s210 = scalar_lea.sflag [#allocation4], %s209
          %s211 = sand.u32 %s69, 1
          %s212 = smul.addr %s211, 24
          %s213 = scalar_lea.vmem [#allocation5], %s212
          %214 = dma.done %s210, 384
        $region40: #{tpu_custom_call.1} parent=35 // pred_fallthru
          _
      $region36: #{tpu_custom_call.1} parent=5 // pred_fallthru
        _
    $region6: #{tpu_custom_call.1} parent=1 // loop_footer
      %s17 = sadd.s32 1, %s13
    $region7: #{tpu_custom_call.1} parent=1 // loop_footer_branch
      %12 = sbr.rel target = $region3
    $region8: #{tpu_custom_call.1} parent=1 // loop_exit
      _
    %215 = vsyncpa [#allocation3], 1
    %s216 = scalar_lea.sflag [#allocation3], 1
    %217 = vsyncpa %s216, 1
    %218 = vsyncpa [#allocation4], 1
    %s219 = scalar_lea.sflag [#allocation4], 1
    %220 = vsyncpa %s219, 1

</llo_original>
